<compile_context>
chip_gen: v7x
topology: tpu7x:2x2x1
jax: 0.10.0
libtpu: 0.0.40
codegen_flags: <defaults>
</compile_context>

<pallas_src>
from typing import NamedTuple

import jax
import jax.numpy as jnp
import numpy as np
from jax.experimental import pallas as pl
from jax.experimental.pallas import tpu as pltpu

LANE = 128


def _round_up(n, m):
    return ((n + m - 1) // m) * m


def _sublane(dtype):
    # 8 rows / sublane group for 32-bit, 16 for bf16, 32 for 8-bit types.
    return max(8, 32 // jnp.dtype(dtype).itemsize)


def _vmem_capacity_bytes():
    try:
        return int(pltpu.get_tpu_info().vmem_capacity_bytes)
    except Exception:
        pass
    try:
        kind = jax.devices()[0].device_kind.lower()
    except Exception:
        kind = ""
    if "v5" in kind or "v6" in kind:
        return 128 * 1024 * 1024
    # Conservative default (v7x has 64 MiB per TensorCore).
    return 64 * 1024 * 1024


# ----------------------------------------------------------------------------
# Kernel
# ----------------------------------------------------------------------------
def _make_mlp_kernel(precision):
    def mlp_kernel(x_ref, w1_ref, b1_ref, w2_ref, b2_ref, w3_ref, b3_ref, o_ref):
        """Fused 2-hidden-layer MLP forward for one batch tile (f32 accumulation)."""
        x = x_ref[...]
        # Layer 1: Linear + ReLU (f32 accumulation on the MXU).
        h = jnp.dot(x, w1_ref[...], preferred_element_type=jnp.float32,
                    precision=precision)
        h = jnp.maximum(h + b1_ref[...], 0.0)          # bias is f32
        # Layer 2: Linear + ReLU (feed MXU in storage dtype, accumulate f32).
        h = h.astype(w2_ref.dtype)
        h = jnp.dot(h, w2_ref[...], preferred_element_type=jnp.float32,
                    precision=precision)
        h = jnp.maximum(h + b2_ref[...], 0.0)
        # Output head: Linear, no activation.
        h = h.astype(w3_ref.dtype)
        out = jnp.dot(h, w3_ref[...], preferred_element_type=jnp.float32,
                      precision=precision)
        out = out + b3_ref[...]
        o_ref[...] = out.astype(o_ref.dtype)

    return mlp_kernel


# ----------------------------------------------------------------------------
# Parameter preparation (pad + cast ONCE, outside the hot path)
# ----------------------------------------------------------------------------
class PreparedParams(NamedTuple):
    w1: jax.Array
    b1: jax.Array
    w2: jax.Array
    b2: jax.Array
    w3: jax.Array
    b3: jax.Array
    d_in: int
    d_in_p: int
    h_p: int
    d_out: int
    d_out_p: int
    compute_dtype: np.dtype


def prepare_params(params, *, compute_dtype=jnp.float32):
    """Zero-pad feature dims to multiples of 128 and cast weights to
    compute_dtype (biases stay f32). Call once and reuse across forwards."""
    w1, b1, w2, b2, w3, b3 = params
    d_in, h = w1.shape
    d_out = w3.shape[1]
    d_in_p = _round_up(d_in, LANE)
    h_p = _round_up(h, LANE)
    d_out_p = _round_up(d_out, LANE)
    cdt = jnp.dtype(compute_dtype)

    def pad2(a, rows, cols, dt):
        a = a.reshape((-1, a.shape[-1])) if a.ndim == 2 else a.reshape(1, -1)
        if a.shape != (rows, cols):
            a = jnp.pad(a, ((0, rows - a.shape[0]), (0, cols - a.shape[1])))
        return a.astype(dt)

    return PreparedParams(
        w1=pad2(w1, d_in_p, h_p, cdt),
        b1=pad2(b1, 1, h_p, jnp.float32),
        w2=pad2(w2, h_p, h_p, cdt),
        b2=pad2(b2, 1, h_p, jnp.float32),
        w3=pad2(w3, h_p, d_out_p, cdt),
        b3=pad2(b3, 1, d_out_p, jnp.float32),
        d_in=d_in, d_in_p=d_in_p, h_p=h_p, d_out=d_out, d_out_p=d_out_p,
        compute_dtype=cdt,
    )


# ----------------------------------------------------------------------------
# Forward wrapper
# ----------------------------------------------------------------------------
def mlp_classifier_forward(x, params, *, tile_m=None, compute_dtype=None,
                           vmem_limit_bytes=None):
    """Run the fused MLP kernel.

    `params` may be a raw (w1,b1,w2,b2,w3,b3) tuple or a PreparedParams
    (pre-padded / pre-cast — preferred, avoids per-call pad traffic).
    compute_dtype (e.g. jnp.bfloat16 on v6e/v7x — recommended) controls the
    storage dtype of x / weights fed to the MXU; accumulation is always f32.
    """
    if not isinstance(params, PreparedParams):
        params = prepare_params(
            params,
            compute_dtype=compute_dtype if compute_dtype is not None else x.dtype)
    p = params
    cdt = p.compute_dtype

    B, d_in = x.shape
    assert d_in == p.d_in, "input feature dim mismatch"
    out_dtype = x.dtype
    out_itemsize = jnp.dtype(out_dtype).itemsize

    # --- generation-aware VMEM budget ---------------------------------------
    vmem_cap = _vmem_capacity_bytes()
    budget = int(vmem_cap * 0.75)           # ~48 MiB on v7x, ~96 MiB on v5e/v6e
    if vmem_limit_bytes is None:
        vmem_limit_bytes = budget

    w_bytes = ((p.d_in_p * p.h_p + p.h_p * p.h_p + p.h_p * p.d_out_p) * cdt.itemsize
               + (2 * p.h_p + p.d_out_p) * 4)          # f32 biases

    def footprint(tm):
        # 2x double-buffered x / out tiles + single-buffered resident weights.
        return (2 * tm * p.d_in_p * cdt.itemsize
                + 2 * tm * p.d_out_p * out_itemsize
                + w_bytes)

    # --- batch tiling ---------------------------------------------------------
    sub = _sublane(cdt)
    if tile_m is None:
        if B <= sub:
            tile_m = sub
        elif B <= 512:
            # >=2 grid steps so both v7x TensorCores get work.
            tile_m = _round_up(pl.cdiv(B, 2), sub)
        else:
            cap = _round_up(pl.cdiv(B, 2), LANE)   # keep >=2 steps
            tile_m = 128
            for cand in (1024, 512, 256, 128):
                if cand <= cap and footprint(cand) <= budget:
                    tile_m = cand
                    break
    B_p = _round_up(B, tile_m)

    # --- x pad / cast (skipped when already aligned) --------------------------
    xp = x
    if xp.dtype != cdt:
        xp = xp.astype(cdt)
    if B_p != B or p.d_in_p != d_in:
        xp = jnp.pad(xp, ((0, B_p - B), (0, p.d_in_p - d_in)))

    # f32 storage -> bit-faithful MXU passes; bf16/fp8 storage -> native path.
    precision = (jax.lax.Precision.HIGHEST if cdt == jnp.dtype(jnp.float32)
                 else jax.lax.Precision.DEFAULT)
    kernel = _make_mlp_kernel(precision)

    grid = (B_p // tile_m,)
    _rep = lambda i: (0, 0)

    flops = 2 * B_p * (p.d_in_p * p.h_p + p.h_p * p.h_p + p.h_p * p.d_out_p)
    bytes_accessed = (B_p * p.d_in_p * cdt.itemsize
                      + w_bytes
                      + B_p * p.d_out_p * out_itemsize)
    cost = pl.CostEstimate(flops=flops, transcendentals=0,
                           bytes_accessed=bytes_accessed)

    def _call(weight_mode):
        def wspec(shape):
            if weight_mode is None:
                return pl.BlockSpec(shape, _rep)
            return pl.BlockSpec(shape, _rep, pipeline_mode=weight_mode)

        return pl.pallas_call(
            kernel,
            out_shape=jax.ShapeDtypeStruct((B_p, p.d_out_p), out_dtype),
            grid=grid,
            in_specs=[
                pl.BlockSpec((tile_m, p.d_in_p), lambda i: (i, 0)),   # x tile
                wspec((p.d_in_p, p.h_p)),                             # W1
                wspec((1, p.h_p)),                                    # b1 (f32)
                wspec((p.h_p, p.h_p)),                                # W2
                wspec((1, p.h_p)),                                    # b2 (f32)
                wspec((p.h_p, p.d_out_p)),                            # W3
                wspec((1, p.d_out_p)),                                # b3 (f32)
            ],
            out_specs=pl.BlockSpec((tile_m, p.d_out_p), lambda i: (i, 0)),
            compiler_params=pltpu.CompilerParams(
                dimension_semantics=("parallel",),
                vmem_limit_bytes=vmem_limit_bytes,
            ),
            cost_estimate=cost,
        )(xp, p.w1, p.b1, p.w2, p.b2, p.w3, p.b3)

    try:
        # Weights/biases have constant index_maps (never re-DMA'd): single-buffer
        # them so their VMEM footprint is 1x, not 2x.
        out_padded = _call(pl.Buffered(1))
    except Exception:
        # Fallback for JAX versions that reject Buffered(1) on inputs.
        out_padded = _call(None)

    # Slice away batch + lane padding.
    return out_padded[:B, :p.d_out]


# ----------------------------------------------------------------------------
# Synthetic init + pure-JAX reference
# ----------------------------------------------------------------------------
def init_params(key, input_dim, hidden_dim, output_dim, dtype=jnp.float32):
    """Deterministic synthetic parameter init (nn.Linear shapes, stored
    transposed: [in, out])."""
    k1, k2, k3, k4, k5, k6 = jax.random.split(key, 6)
    s1 = 1.0 / jnp.sqrt(input_dim)
    s2 = 1.0 / jnp.sqrt(hidden_dim)
    w1 = jax.random.uniform(k1, (input_dim, hidden_dim), dtype, -s1, s1)
    b1 = jax.random.uniform(k2, (1, hidden_dim), dtype, -s1, s1)
    w2 = jax.random.uniform(k3, (hidden_dim, hidden_dim), dtype, -s2, s2)
    b2 = jax.random.uniform(k4, (1, hidden_dim), dtype, -s2, s2)
    w3 = jax.random.uniform(k5, (hidden_dim, output_dim), dtype, -s2, s2)
    b3 = jax.random.uniform(k6, (1, output_dim), dtype, -s2, s2)
    return (w1, b1, w2, b2, w3, b3)


def mlp_reference(x, params):
    """Plain-JAX reference for correctness checking."""
    w1, b1, w2, b2, w3, b3 = params
    h = jnp.maximum(x @ w1 + b1, 0.0)
    h = jnp.maximum(h @ w2 + b2, 0.0)
    return h @ w3 + b3


if __name__ == "__main__":
    # Small synthetic config: num_layers=2 (two Linear+ReLU) + output head.
    batch = 16
    input_dim = 64
    hidden_dim = 32
    output_dim = 10

    key = jax.random.PRNGKey(0)
    kx, kp = jax.random.split(key)
    x = jax.random.normal(kx, (batch, input_dim), jnp.float32)
    params = init_params(kp, input_dim, hidden_dim, output_dim)
    ref = mlp_reference(x, params)

    # 1) f32 path, pre-padded params, HIGHEST-precision MXU (tight tolerance).
    prep_f32 = prepare_params(params, compute_dtype=jnp.float32)
    out = jax.block_until_ready(mlp_classifier_forward(x, prep_f32))
    assert out.shape == (batch, output_dim)
    assert jnp.allclose(out, ref, atol=1e-5, rtol=1e-5), "f32 mismatch vs reference"

    # 2) bf16 storage / f32 accumulation (recommended v6e/v7x path; biases f32).
    prep_bf16 = prepare_params(params, compute_dtype=jnp.bfloat16)
    out_bf16 = jax.block_until_ready(mlp_classifier_forward(x, prep_bf16))
    assert out_bf16.shape == (batch, output_dim)
    assert jnp.allclose(out_bf16, ref, atol=5e-2, rtol=5e-2), "bf16 mismatch vs reference"

    # 3) Raw-params convenience path (pads/casts in-call).
    out_raw = jax.block_until_ready(mlp_classifier_forward(x, params))
    assert jnp.allclose(out_raw, ref, atol=1e-5, rtol=1e-5), "raw-params mismatch"

    # 4) Ragged, larger batch exercising the >=2-step tiled grid.
    batch2 = 300
    x2 = jax.random.normal(jax.random.PRNGKey(1), (batch2, input_dim), jnp.float32)
    out2 = jax.block_until_ready(mlp_classifier_forward(x2, prep_f32))
    ref2 = mlp_reference(x2, params)
    assert out2.shape == (batch2, output_dim)
    assert jnp.allclose(out2, ref2, atol=1e-5, rtol=1e-5), "tiled mismatch vs reference"

    print("KERNEL_OK")
</pallas_src>

<mosaic_0001>
module attributes {stable_mosaic.version = 11 : i64} {
  func.func @mlp_kernel(%arg0: i32, %arg1: memref<8x128xf32, #tpu.memory_space<vmem>>, %arg2: memref<128x128xf32, #tpu.memory_space<vmem>>, %arg3: memref<1x128xf32, #tpu.memory_space<vmem>>, %arg4: memref<128x128xf32, #tpu.memory_space<vmem>>, %arg5: memref<1x128xf32, #tpu.memory_space<vmem>>, %arg6: memref<128x128xf32, #tpu.memory_space<vmem>>, %arg7: memref<1x128xf32, #tpu.memory_space<vmem>>, %arg8: memref<8x128xf32, #tpu.memory_space<vmem>>) attributes {dimension_semantics = [#tpu.dimension_semantics<parallel>], iteration_bounds = array<i64: 2>, scalar_prefetch = 0 : i64, scratch_operands = 0 : i64, tpu.core_type = #tpu.core_type<tc>, window_params = [{transform_indices = @transform_0, window_bounds = array<i64: 8, 128>}, {pipeline_mode = #tpu.pipeline_mode<synchronous>, transform_indices = @transform_1, window_bounds = array<i64: 128, 128>}, {pipeline_mode = #tpu.pipeline_mode<synchronous>, transform_indices = @transform_2, window_bounds = array<i64: 1, 128>}, {pipeline_mode = #tpu.pipeline_mode<synchronous>, transform_indices = @transform_3, window_bounds = array<i64: 128, 128>}, {pipeline_mode = #tpu.pipeline_mode<synchronous>, transform_indices = @transform_4, window_bounds = array<i64: 1, 128>}, {pipeline_mode = #tpu.pipeline_mode<synchronous>, transform_indices = @transform_5, window_bounds = array<i64: 128, 128>}, {pipeline_mode = #tpu.pipeline_mode<synchronous>, transform_indices = @transform_6, window_bounds = array<i64: 1, 128>}, {transform_indices = @transform_7, window_bounds = array<i64: 8, 128>}]} {
    %c0 = arith.constant 0 : index
    %c0_0 = arith.constant 0 : index
    %0 = vector.load %arg1[%c0, %c0_0] : memref<8x128xf32, #tpu.memory_space<vmem>>, vector<8x128xf32>
    %c0_1 = arith.constant 0 : index
    %c0_2 = arith.constant 0 : index
    %1 = vector.load %arg2[%c0_1, %c0_2] : memref<128x128xf32, #tpu.memory_space<vmem>>, vector<128x128xf32>
    %cst = arith.constant dense<0.000000e+00> : vector<8x128xf32>
    %2 = tpu.matmul %0, %1, %cst {dimension_numbers = #tpu.dot_dimension_numbers<[1], [0], [0], [1], [0, 0, 1, 1], [], []>, precision = #tpu.contract_precision<fp32>} : vector<8x128xf32>, vector<128x128xf32>, vector<8x128xf32> -> vector<8x128xf32>
    %c0_3 = arith.constant 0 : index
    %c0_4 = arith.constant 0 : index
    %3 = vector.load %arg3[%c0_3, %c0_4] : memref<1x128xf32, #tpu.memory_space<vmem>>, vector<1x128xf32>
    %4 = vector.broadcast %3 : vector<1x128xf32> to vector<8x128xf32>
    %5 = arith.addf %2, %4 : vector<8x128xf32>
    %cst_5 = arith.constant 0.000000e+00 : f32
    %6 = vector.broadcast %cst_5 : f32 to vector<8x128xf32>
    %7 = arith.maximumf %5, %6 : vector<8x128xf32>
    %c0_6 = arith.constant 0 : index
    %c0_7 = arith.constant 0 : index
    %8 = vector.load %arg4[%c0_6, %c0_7] : memref<128x128xf32, #tpu.memory_space<vmem>>, vector<128x128xf32>
    %cst_8 = arith.constant dense<0.000000e+00> : vector<8x128xf32>
    %9 = tpu.matmul %7, %8, %cst_8 {dimension_numbers = #tpu.dot_dimension_numbers<[1], [0], [0], [1], [0, 0, 1, 1], [], []>, precision = #tpu.contract_precision<fp32>} : vector<8x128xf32>, vector<128x128xf32>, vector<8x128xf32> -> vector<8x128xf32>
    %c0_9 = arith.constant 0 : index
    %c0_10 = arith.constant 0 : index
    %10 = vector.load %arg5[%c0_9, %c0_10] : memref<1x128xf32, #tpu.memory_space<vmem>>, vector<1x128xf32>
    %11 = vector.broadcast %10 : vector<1x128xf32> to vector<8x128xf32>
    %12 = arith.addf %9, %11 : vector<8x128xf32>
    %cst_11 = arith.constant 0.000000e+00 : f32
    %13 = vector.broadcast %cst_11 : f32 to vector<8x128xf32>
    %14 = arith.maximumf %12, %13 : vector<8x128xf32>
    %c0_12 = arith.constant 0 : index
    %c0_13 = arith.constant 0 : index
    %15 = vector.load %arg6[%c0_12, %c0_13] : memref<128x128xf32, #tpu.memory_space<vmem>>, vector<128x128xf32>
    %cst_14 = arith.constant dense<0.000000e+00> : vector<8x128xf32>
    %16 = tpu.matmul %14, %15, %cst_14 {dimension_numbers = #tpu.dot_dimension_numbers<[1], [0], [0], [1], [0, 0, 1, 1], [], []>, precision = #tpu.contract_precision<fp32>} : vector<8x128xf32>, vector<128x128xf32>, vector<8x128xf32> -> vector<8x128xf32>
    %c0_15 = arith.constant 0 : index
    %c0_16 = arith.constant 0 : index
    %17 = vector.load %arg7[%c0_15, %c0_16] : memref<1x128xf32, #tpu.memory_space<vmem>>, vector<1x128xf32>
    %18 = vector.broadcast %17 : vector<1x128xf32> to vector<8x128xf32>
    %19 = arith.addf %16, %18 : vector<8x128xf32>
    %c0_17 = arith.constant 0 : index
    %c0_18 = arith.constant 0 : index
    %20 = vector.load %arg8[%c0_17, %c0_18] : memref<8x128xf32, #tpu.memory_space<vmem>>, vector<8x128xf32>
    tpu.vector_store %arg8[%c0_17, %c0_18], %19 {strides = array<i32>} : memref<8x128xf32, #tpu.memory_space<vmem>>, vector<8x128xf32>,
    return
  }
  func.func @transform_0(%arg0: i32) -> (i32, i32) {
    %c0_i32 = arith.constant 0 : i32
    %c0_i32_0 = arith.constant 0 : i32
    return %arg0, %c0_i32 : i32, i32
  }
  func.func @transform_1(%arg0: i32) -> (i32, i32) {
    %c0_i32 = arith.constant 0 : i32
    %c0_i32_0 = arith.constant 0 : i32
    %c0_i32_1 = arith.constant 0 : i32
    return %c0_i32, %c0_i32_0 : i32, i32
  }
  func.func @transform_2(%arg0: i32) -> (i32, i32) {
    %c0_i32 = arith.constant 0 : i32
    %c0_i32_0 = arith.constant 0 : i32
    %c0_i32_1 = arith.constant 0 : i32
    return %c0_i32, %c0_i32_0 : i32, i32
  }
  func.func @transform_3(%arg0: i32) -> (i32, i32) {
    %c0_i32 = arith.constant 0 : i32
    %c0_i32_0 = arith.constant 0 : i32
    %c0_i32_1 = arith.constant 0 : i32
    return %c0_i32, %c0_i32_0 : i32, i32
  }
  func.func @transform_4(%arg0: i32) -> (i32, i32) {
    %c0_i32 = arith.constant 0 : i32
    %c0_i32_0 = arith.constant 0 : i32
    %c0_i32_1 = arith.constant 0 : i32
    return %c0_i32, %c0_i32_0 : i32, i32
  }
  func.func @transform_5(%arg0: i32) -> (i32, i32) {
    %c0_i32 = arith.constant 0 : i32
    %c0_i32_0 = arith.constant 0 : i32
    %c0_i32_1 = arith.constant 0 : i32
    return %c0_i32, %c0_i32_0 : i32, i32
  }
  func.func @transform_6(%arg0: i32) -> (i32, i32) {
    %c0_i32 = arith.constant 0 : i32
    %c0_i32_0 = arith.constant 0 : i32
    %c0_i32_1 = arith.constant 0 : i32
    return %c0_i32, %c0_i32_0 : i32, i32
  }
  func.func @transform_7(%arg0: i32) -> (i32, i32) {
    %c0_i32 = arith.constant 0 : i32
    %c0_i32_0 = arith.constant 0 : i32
    return %arg0, %c0_i32 : i32, i32
  }
}

module attributes {stable_mosaic.version = 11 : i64} {
  func.func @mlp_kernel(%arg0: i32, %arg1: memref<8x128xf32, #tpu.memory_space<vmem>>, %arg2: memref<128x128xf32, #tpu.memory_space<vmem>>, %arg3: memref<1x128xf32, #tpu.memory_space<vmem>>, %arg4: memref<128x128xf32, #tpu.memory_space<vmem>>, %arg5: memref<1x128xf32, #tpu.memory_space<vmem>>, %arg6: memref<128x128xf32, #tpu.memory_space<vmem>>, %arg7: memref<1x128xf32, #tpu.memory_space<vmem>>, %arg8: memref<8x128xf32, #tpu.memory_space<vmem>>) attributes {dimension_semantics = [#tpu.dimension_semantics<parallel>], iteration_bounds = array<i64: 2>, scalar_prefetch = 0 : i64, scratch_operands = 0 : i64, tpu.core_type = #tpu.core_type<tc>, window_params = [{transform_indices = @transform_0, window_bounds = array<i64: 8, 128>}, {pipeline_mode = #tpu.pipeline_mode<synchronous>, transform_indices = @transform_1, window_bounds = array<i64: 128, 128>}, {pipeline_mode = #tpu.pipeline_mode<synchronous>, transform_indices = @transform_2, window_bounds = array<i64: 1, 128>}, {pipeline_mode = #tpu.pipeline_mode<synchronous>, transform_indices = @transform_3, window_bounds = array<i64: 128, 128>}, {pipeline_mode = #tpu.pipeline_mode<synchronous>, transform_indices = @transform_4, window_bounds = array<i64: 1, 128>}, {pipeline_mode = #tpu.pipeline_mode<synchronous>, transform_indices = @transform_5, window_bounds = array<i64: 128, 128>}, {pipeline_mode = #tpu.pipeline_mode<synchronous>, transform_indices = @transform_6, window_bounds = array<i64: 1, 128>}, {transform_indices = @transform_7, window_bounds = array<i64: 8, 128>}]} {
    %c0 = arith.constant 0 : index
    %c0_0 = arith.constant 0 : index
    %0 = vector.load %arg1[%c0, %c0_0] : memref<8x128xf32, #tpu.memory_space<vmem>>, vector<8x128xf32>
    %c0_1 = arith.constant 0 : index
    %c0_2 = arith.constant 0 : index
    %1 = vector.load %arg2[%c0_1, %c0_2] : memref<128x128xf32, #tpu.memory_space<vmem>>, vector<128x128xf32>
    %cst = arith.constant dense<0.000000e+00> : vector<8x128xf32>
    %2 = tpu.matmul %0, %1, %cst {dimension_numbers = #tpu.dot_dimension_numbers<[1], [0], [0], [1], [0, 0, 1, 1], [], []>, precision = #tpu.contract_precision<fp32>} : vector<8x128xf32>, vector<128x128xf32>, vector<8x128xf32> -> vector<8x128xf32>
    %c0_3 = arith.constant 0 : index
    %c0_4 = arith.constant 0 : index
    %3 = vector.load %arg3[%c0_3, %c0_4] : memref<1x128xf32, #tpu.memory_space<vmem>>, vector<1x128xf32>
    %4 = vector.broadcast %3 : vector<1x128xf32> to vector<8x128xf32>
    %5 = arith.addf %2, %4 : vector<8x128xf32>
    %cst_5 = arith.constant 0.000000e+00 : f32
    %6 = vector.broadcast %cst_5 : f32 to vector<8x128xf32>
    %7 = arith.maximumf %5, %6 : vector<8x128xf32>
    %c0_6 = arith.constant 0 : index
    %c0_7 = arith.constant 0 : index
    %8 = vector.load %arg4[%c0_6, %c0_7] : memref<128x128xf32, #tpu.memory_space<vmem>>, vector<128x128xf32>
    %cst_8 = arith.constant dense<0.000000e+00> : vector<8x128xf32>
    %9 = tpu.matmul %7, %8, %cst_8 {dimension_numbers = #tpu.dot_dimension_numbers<[1], [0], [0], [1], [0, 0, 1, 1], [], []>, precision = #tpu.contract_precision<fp32>} : vector<8x128xf32>, vector<128x128xf32>, vector<8x128xf32> -> vector<8x128xf32>
    %c0_9 = arith.constant 0 : index
    %c0_10 = arith.constant 0 : index
    %10 = vector.load %arg5[%c0_9, %c0_10] : memref<1x128xf32, #tpu.memory_space<vmem>>, vector<1x128xf32>
    %11 = vector.broadcast %10 : vector<1x128xf32> to vector<8x128xf32>
    %12 = arith.addf %9, %11 : vector<8x128xf32>
    %cst_11 = arith.constant 0.000000e+00 : f32
    %13 = vector.broadcast %cst_11 : f32 to vector<8x128xf32>
    %14 = arith.maximumf %12, %13 : vector<8x128xf32>
    %c0_12 = arith.constant 0 : index
    %c0_13 = arith.constant 0 : index
    %15 = vector.load %arg6[%c0_12, %c0_13] : memref<128x128xf32, #tpu.memory_space<vmem>>, vector<128x128xf32>
    %cst_14 = arith.constant dense<0.000000e+00> : vector<8x128xf32>
    %16 = tpu.matmul %14, %15, %cst_14 {dimension_numbers = #tpu.dot_dimension_numbers<[1], [0], [0], [1], [0, 0, 1, 1], [], []>, precision = #tpu.contract_precision<fp32>} : vector<8x128xf32>, vector<128x128xf32>, vector<8x128xf32> -> vector<8x128xf32>
    %c0_15 = arith.constant 0 : index
    %c0_16 = arith.constant 0 : index
    %17 = vector.load %arg7[%c0_15, %c0_16] : memref<1x128xf32, #tpu.memory_space<vmem>>, vector<1x128xf32>
    %18 = vector.broadcast %17 : vector<1x128xf32> to vector<8x128xf32>
    %19 = arith.addf %16, %18 : vector<8x128xf32>
    %c0_17 = arith.constant 0 : index
    %c0_18 = arith.constant 0 : index
    %20 = vector.load %arg8[%c0_17, %c0_18] : memref<8x128xf32, #tpu.memory_space<vmem>>, vector<8x128xf32>
    tpu.vector_store %arg8[%c0_17, %c0_18], %19 {strides = array<i32>} : memref<8x128xf32, #tpu.memory_space<vmem>>, vector<8x128xf32>,
    return
  }
  func.func @transform_0(%arg0: i32) -> (i32, i32) {
    %c0_i32 = arith.constant 0 : i32
    %c0_i32_0 = arith.constant 0 : i32
    return %arg0, %c0_i32 : i32, i32
  }
  func.func @transform_1(%arg0: i32) -> (i32, i32) {
    %c0_i32 = arith.constant 0 : i32
    %c0_i32_0 = arith.constant 0 : i32
    %c0_i32_1 = arith.constant 0 : i32
    return %c0_i32, %c0_i32_0 : i32, i32
  }
  func.func @transform_2(%arg0: i32) -> (i32, i32) {
    %c0_i32 = arith.constant 0 : i32
    %c0_i32_0 = arith.constant 0 : i32
    %c0_i32_1 = arith.constant 0 : i32
    return %c0_i32, %c0_i32_0 : i32, i32
  }
  func.func @transform_3(%arg0: i32) -> (i32, i32) {
    %c0_i32 = arith.constant 0 : i32
    %c0_i32_0 = arith.constant 0 : i32
    %c0_i32_1 = arith.constant 0 : i32
    return %c0_i32, %c0_i32_0 : i32, i32
  }
  func.func @transform_4(%arg0: i32) -> (i32, i32) {
    %c0_i32 = arith.constant 0 : i32
    %c0_i32_0 = arith.constant 0 : i32
    %c0_i32_1 = arith.constant 0 : i32
    return %c0_i32, %c0_i32_0 : i32, i32
  }
  func.func @transform_5(%arg0: i32) -> (i32, i32) {
    %c0_i32 = arith.constant 0 : i32
    %c0_i32_0 = arith.constant 0 : i32
    %c0_i32_1 = arith.constant 0 : i32
    return %c0_i32, %c0_i32_0 : i32, i32
  }
  func.func @transform_6(%arg0: i32) -> (i32, i32) {
    %c0_i32 = arith.constant 0 : i32
    %c0_i32_0 = arith.constant 0 : i32
    %c0_i32_1 = arith.constant 0 : i32
    return %c0_i32, %c0_i32_0 : i32, i32
  }
  func.func @transform_7(%arg0: i32) -> (i32, i32) {
    %c0_i32 = arith.constant 0 : i32
    %c0_i32_0 = arith.constant 0 : i32
    return %arg0, %c0_i32 : i32, i32
  }
}

</mosaic_0001>

<llo_original>
// kernel: tpu_custom_call.1
$region0: #{tpu_custom_call.1}
  #allocation0 [shape = 'u32[]', space=smem, size = 0x4, offset = 0x4, fixed_abs, tag = 'smem constant byte address 0x4 - core index']
  #allocation1 [shape = 'u32[144,128]{1,0:T(1,128)}', space=vmem, size = 0x12000, scoped, tag = 'internal scratch']
  %s0 = inlined_call_operand.hbm [shape: f32[16,128], index: 0, kind: input, shape index: {}]
  %s1 = inlined_call_operand.hbm [shape: f32[128,128], index: 1, kind: input, shape index: {}]
  %s2 = inlined_call_operand.vmem [shape: f32[1,128], index: 2, kind: input, shape index: {}]
  %s3 = inlined_call_operand.hbm [shape: f32[128,128], index: 3, kind: input, shape index: {}]
  %s4 = inlined_call_operand.vmem [shape: f32[1,128], index: 4, kind: input, shape index: {}]
  %s5 = inlined_call_operand.hbm [shape: f32[128,128], index: 5, kind: input, shape index: {}]
  %s6 = inlined_call_operand.vmem [shape: f32[1,128], index: 6, kind: input, shape index: {}]
  %s7 = inlined_call_operand.hbm [shape: f32[16,128], index: 7, kind: output, shape index: {}]
  %s8 = sld [smem:[#allocation0]]
  $region77: #{tpu_custom_call.1} parent=0
    _
  %s10 = ssub.s32 1, %s8
  %s11 = scalar_select 0, %s10, %s8
  $region1: #{tpu_custom_call.1} parent=0
    #allocation2 [shape = 'u8[8192]{0}', space=vmem, size = 0x2000, scoped, tag = 'input window, operand 0']
    #allocation3 [shape = 's32[2]{0}', space=sflag, size = 0x8, scoped, tag = 'scoped memory for tpu_custom_call.1']
    #allocation4 [shape = 's32[2]{0}', space=sflag, size = 0x8, scoped, tag = 'scoped memory for tpu_custom_call.1']
    #allocation5 [shape = 'u8[65536]{0}', space=vmem, size = 0x10000, scoped, tag = 'input window, operand 1, single buffered']
    #allocation6 [shape = 's32[1]{0}', space=sflag, size = 0x4, scoped, tag = 'scoped memory for tpu_custom_call.1']
    #allocation7 [shape = 'u8[65536]{0}', space=vmem, size = 0x10000, scoped, tag = 'input window, operand 3, single buffered']
    #allocation8 [shape = 'u8[65536]{0}', space=vmem, size = 0x10000, scoped, tag = 'input window, operand 5, single buffered']
    #allocation9 [shape = 's32[1]{0}', space=sflag, size = 0x4, scoped, tag = 'scoped memory for tpu_custom_call.1']
    #allocation10 [shape = 'u8[8192]{0}', space=vmem, size = 0x2000, scoped, tag = 'output window, operand 0']
    %12 = vsyncpa [#allocation3], 0
    %s13 = scalar_lea.sflag [#allocation3], 1
    %14 = vsyncpa %s13, 0
    %15 = vsyncpa [#allocation6], 0
    %16 = vsyncpa [#allocation9], 0
    %17 = vsyncpa [#allocation4], 0
    %s18 = scalar_lea.sflag [#allocation4], 1
    %19 = vsyncpa %s18, 0
    loop: start=0, step=1, limit=4
    $region2: #{tpu_custom_call.1} parent=1 // loop_pre_header
      _
    $region3: #{tpu_custom_call.1} parent=1 // loop_header
      %s21 = sphi 0, %s25
      %p22 = scmp.ge.s32.totalorder %s21, 4
      %s31 = sphi 0, %s33
      %s34 = sphi 0, %s31
      %s35 = sphi 0, %s34
      %s51 = sphi 0, %s35
      %s55 = sphi 0, %s55
      %s57 = sphi 0, %s55
      %s58 = sphi 0, %s57
      %s72 = sphi 0, %s58
      %s76 = sphi 0, %s76
      %s78 = sphi 0, %s76
      %s79 = sphi 0, %s78
      %s93 = sphi 0, %s79
      %s97 = sphi 0, %s97
      %s99 = sphi 0, %s97
      %s100 = sphi 0, %s99
      %s114 = sphi 0, %s100
      %s118 = sphi 0, %s118
      %s120 = sphi 0, %s118
      %s121 = sphi 0, %s120
      %s135 = sphi 0, %s121
      %s139 = sphi 0, %s139
      %s141 = sphi 0, %s139
      %s142 = sphi 0, %s141
      %s156 = sphi 0, %s142
      %s160 = sphi 0, %s160
      %s162 = sphi 0, %s160
      %s163 = sphi 0, %s162
      %s177 = sphi 0, %s163
      %s183 = sphi 0, %s185
      %s186 = sphi 0, %s183
      %s187 = sphi 0, %s186
      %s203 = sphi 0, %s187
    $region4: #{tpu_custom_call.1} parent=1 // loop_header_branch
      %24 = sbr.rel (%p22) target = $region8
    $region5: #{tpu_custom_call.1} parent=1 // loop_body
      %s26 = ssub.s32 %s21, 1
      %s27 = ssub.s32 %s21, 2
      %s28 = sadd.s32 %s21, 1
      %s29 = ssub.s32 %s21, %s28
      %p30 = scmp.eq.s32.totalorder %s29, 0
      %s32 = sadd.s32 %s31, 1
      %s33 = scalar_select %p30, %s31, %s32
      %p36 = pneg %p30
      %p37 = scmp.eq.s32.totalorder %s21, 1
      %p38 = por %p36, %p37
      %p39 = scmp.ne.s32.totalorder %s31, %s34
      %p40 = scmp.eq.s32.totalorder %s21, 0
      %p41 = por %p39, %p40
      %p42 = scmp.ne.s32.totalorder %s31, %s34
      %p43 = scmp.eq.s32.totalorder %s26, 1
      %p44 = por %p42, %p43
      %p45 = scmp.ne.s32.totalorder %s34, %s35
      %p46 = scmp.eq.s32.totalorder %s26, 0
      %p47 = por %p45, %p46
      %p48 = scmp.ne.s32.totalorder %s34, %s35
      %p49 = scmp.eq.s32.totalorder %s27, 1
      %p50 = por %p48, %p49
      %p52 = scmp.ne.s32.totalorder %s35, %s51
      %p53 = scmp.eq.s32.totalorder %s27, 0
      %p54 = por %p52, %p53
      %s56 = sadd.s32 %s55, 1
      %p59 = scmp.eq.s32.totalorder %s21, 1
      %p60 = scmp.ne.s32.totalorder %s55, %s57
      %p61 = scmp.eq.s32.totalorder %s21, 0
      %p62 = por %p60, %p61
      %p63 = scmp.ne.s32.totalorder %s55, %s57
      %p64 = scmp.eq.s32.totalorder %s26, 1
      %p65 = por %p63, %p64
      %p66 = scmp.ne.s32.totalorder %s57, %s58
      %p67 = scmp.eq.s32.totalorder %s26, 0
      %p68 = por %p66, %p67
      %p69 = scmp.ne.s32.totalorder %s57, %s58
      %p70 = scmp.eq.s32.totalorder %s27, 1
      %p71 = por %p69, %p70
      %p73 = scmp.ne.s32.totalorder %s58, %s72
      %p74 = scmp.eq.s32.totalorder %s27, 0
      %p75 = por %p73, %p74
      %s77 = sadd.s32 %s76, 1
      %p80 = scmp.eq.s32.totalorder %s21, 1
      %p81 = scmp.ne.s32.totalorder %s76, %s78
      %p82 = scmp.eq.s32.totalorder %s21, 0
      %p83 = por %p81, %p82
      %p84 = scmp.ne.s32.totalorder %s76, %s78
      %p85 = scmp.eq.s32.totalorder %s26, 1
      %p86 = por %p84, %p85
      %p87 = scmp.ne.s32.totalorder %s78, %s79
      %p88 = scmp.eq.s32.totalorder %s26, 0
      %p89 = por %p87, %p88
      %p90 = scmp.ne.s32.totalorder %s78, %s79
      %p91 = scmp.eq.s32.totalorder %s27, 1
      %p92 = por %p90, %p91
      %p94 = scmp.ne.s32.totalorder %s79, %s93
      %p95 = scmp.eq.s32.totalorder %s27, 0
      %p96 = por %p94, %p95
      %s98 = sadd.s32 %s97, 1
      %p101 = scmp.eq.s32.totalorder %s21, 1
      %p102 = scmp.ne.s32.totalorder %s97, %s99
      %p103 = scmp.eq.s32.totalorder %s21, 0
      %p104 = por %p102, %p103
      %p105 = scmp.ne.s32.totalorder %s97, %s99
      %p106 = scmp.eq.s32.totalorder %s26, 1
      %p107 = por %p105, %p106
      %p108 = scmp.ne.s32.totalorder %s99, %s100
      %p109 = scmp.eq.s32.totalorder %s26, 0
      %p110 = por %p108, %p109
      %p111 = scmp.ne.s32.totalorder %s99, %s100
      %p112 = scmp.eq.s32.totalorder %s27, 1
      %p113 = por %p111, %p112
      %p115 = scmp.ne.s32.totalorder %s100, %s114
      %p116 = scmp.eq.s32.totalorder %s27, 0
      %p117 = por %p115, %p116
      %s119 = sadd.s32 %s118, 1
      %p122 = scmp.eq.s32.totalorder %s21, 1
      %p123 = scmp.ne.s32.totalorder %s118, %s120
      %p124 = scmp.eq.s32.totalorder %s21, 0
      %p125 = por %p123, %p124
      %p126 = scmp.ne.s32.totalorder %s118, %s120
      %p127 = scmp.eq.s32.totalorder %s26, 1
      %p128 = por %p126, %p127
      %p129 = scmp.ne.s32.totalorder %s120, %s121
      %p130 = scmp.eq.s32.totalorder %s26, 0
      %p131 = por %p129, %p130
      %p132 = scmp.ne.s32.totalorder %s120, %s121
      %p133 = scmp.eq.s32.totalorder %s27, 1
      %p134 = por %p132, %p133
      %p136 = scmp.ne.s32.totalorder %s121, %s135
      %p137 = scmp.eq.s32.totalorder %s27, 0
      %p138 = por %p136, %p137
      %s140 = sadd.s32 %s139, 1
      %p143 = scmp.eq.s32.totalorder %s21, 1
      %p144 = scmp.ne.s32.totalorder %s139, %s141
      %p145 = scmp.eq.s32.totalorder %s21, 0
      %p146 = por %p144, %p145
      %p147 = scmp.ne.s32.totalorder %s139, %s141
      %p148 = scmp.eq.s32.totalorder %s26, 1
      %p149 = por %p147, %p148
      %p150 = scmp.ne.s32.totalorder %s141, %s142
      %p151 = scmp.eq.s32.totalorder %s26, 0
      %p152 = por %p150, %p151
      %p153 = scmp.ne.s32.totalorder %s141, %s142
      %p154 = scmp.eq.s32.totalorder %s27, 1
      %p155 = por %p153, %p154
      %p157 = scmp.ne.s32.totalorder %s142, %s156
      %p158 = scmp.eq.s32.totalorder %s27, 0
      %p159 = por %p157, %p158
      %s161 = sadd.s32 %s160, 1
      %p164 = scmp.eq.s32.totalorder %s21, 1
      %p165 = scmp.ne.s32.totalorder %s160, %s162
      %p166 = scmp.eq.s32.totalorder %s21, 0
      %p167 = por %p165, %p166
      %p168 = scmp.ne.s32.totalorder %s160, %s162
      %p169 = scmp.eq.s32.totalorder %s26, 1
      %p170 = por %p168, %p169
      %p171 = scmp.ne.s32.totalorder %s162, %s163
      %p172 = scmp.eq.s32.totalorder %s26, 0
      %p173 = por %p171, %p172
      %p174 = scmp.ne.s32.totalorder %s162, %s163
      %p175 = scmp.eq.s32.totalorder %s27, 1
      %p176 = por %p174, %p175
      %p178 = scmp.ne.s32.totalorder %s163, %s177
      %p179 = scmp.eq.s32.totalorder %s27, 0
      %p180 = por %p178, %p179
      %s181 = ssub.s32 %s21, %s28
      %p182 = scmp.eq.s32.totalorder %s181, 0
      %s184 = sadd.s32 %s183, 1
      %s185 = scalar_select %p182, %s183, %s184
      %p188 = pneg %p182
      %p189 = scmp.eq.s32.totalorder %s21, 1
      %p190 = por %p188, %p189
      %p191 = scmp.ne.s32.totalorder %s183, %s186
      %p192 = scmp.eq.s32.totalorder %s21, 0
      %p193 = por %p191, %p192
      %p194 = scmp.ne.s32.totalorder %s183, %s186
      %p195 = scmp.eq.s32.totalorder %s26, 1
      %p196 = por %p194, %p195
      %p197 = scmp.ne.s32.totalorder %s186, %s187
      %p198 = scmp.eq.s32.totalorder %s26, 0
      %p199 = por %p197, %p198
      %p200 = scmp.ne.s32.totalorder %s186, %s187
      %p201 = scmp.eq.s32.totalorder %s27, 1
      %p202 = por %p200, %p201
      %p204 = scmp.ne.s32.totalorder %s187, %s203
      %p205 = scmp.eq.s32.totalorder %s27, 0
      %p206 = por %p204, %p205
      %p207 = scmp.le.s32.totalorder 1, %s21
      %p208 = scmp.lt.s32.totalorder %s21, 3
      %p209 = pnand %p207, %p208
      %p210 = pneg %p209
      // Predicated region
      $region9: #{tpu_custom_call.1} parent=5 // pred_check
        _
      $region10: #{tpu_custom_call.1} parent=5 // pred_check_branch
        %212 = sbr.rel (%p209) target = $region12
      $region11: #{tpu_custom_call.1} parent=5 // pred_region
        %s213 = ssub.s32 %s21, 1
        // Predicated region
        $region13: #{tpu_custom_call.1} parent=11 // pred_check
          %p214 = pneg %p68
        $region14: #{tpu_custom_call.1} parent=11 // pred_check_branch
          %216 = sbr.rel (%p214) target = $region16
        $region15: #{tpu_custom_call.1} parent=11 // pred_region
          %s218 = ssub.s32 2048, 2048
          %219 = vsyncadd [#allocation6], %s218
          %s220 = sshll.u32 [#allocation5], 4
          %s221 = int_to_ptr.vmem [resolvable:$true] %s220
          %226 = dma.hbm_to_vmem [thread:$0]  %s1, 2048, %s221, [#allocation6], 128, 128, 8
        $region16: #{tpu_custom_call.1} parent=11 // pred_fallthru
          _
        // Predicated region
        $region17: #{tpu_custom_call.1} parent=11 // pred_check
          %p227 = pneg %p89
        $region18: #{tpu_custom_call.1} parent=11 // pred_check_branch
          %229 = sbr.rel (%p227) target = $region20
        $region19: #{tpu_custom_call.1} parent=11 // pred_region
          _
        $region20: #{tpu_custom_call.1} parent=11 // pred_fallthru
          _
        // Predicated region
        $region21: #{tpu_custom_call.1} parent=11 // pred_check
          %p230 = pneg %p110
        $region22: #{tpu_custom_call.1} parent=11 // pred_check_branch
          %232 = sbr.rel (%p230) target = $region24
        $region23: #{tpu_custom_call.1} parent=11 // pred_region
          %s234 = ssub.s32 2048, 2048
          %235 = vsyncadd [#allocation6], %s234
          %s236 = sshll.u32 [#allocation7], 4
          %s237 = int_to_ptr.vmem [resolvable:$true] %s236
          %242 = dma.hbm_to_vmem [thread:$0]  %s3, 2048, %s237, [#allocation6], 128, 128, 8
        $region24: #{tpu_custom_call.1} parent=11 // pred_fallthru
          _
        // Predicated region
        $region25: #{tpu_custom_call.1} parent=11 // pred_check
          %p243 = pneg %p131
        $region26: #{tpu_custom_call.1} parent=11 // pred_check_branch
          %245 = sbr.rel (%p243) target = $region28
        $region27: #{tpu_custom_call.1} parent=11 // pred_region
          _
        $region28: #{tpu_custom_call.1} parent=11 // pred_fallthru
          _
        // Predicated region
        $region29: #{tpu_custom_call.1} parent=11 // pred_check
          %p246 = pneg %p152
        $region30: #{tpu_custom_call.1} parent=11 // pred_check_branch
          %248 = sbr.rel (%p246) target = $region32
        $region31: #{tpu_custom_call.1} parent=11 // pred_region
          %s250 = ssub.s32 2048, 2048
          %251 = vsyncadd [#allocation9], %s250
          %s252 = sshll.u32 [#allocation8], 4
          %s253 = int_to_ptr.vmem [resolvable:$true] %s252
          %258 = dma.hbm_to_vmem [thread:$0]  %s5, 2048, %s253, [#allocation9], 128, 128, 8
        $region32: #{tpu_custom_call.1} parent=11 // pred_fallthru
          _
        // Predicated region
        $region33: #{tpu_custom_call.1} parent=11 // pred_check
          %p259 = pneg %p173
        $region34: #{tpu_custom_call.1} parent=11 // pred_check_branch
          %261 = sbr.rel (%p259) target = $region36
        $region35: #{tpu_custom_call.1} parent=11 // pred_region
          _
        $region36: #{tpu_custom_call.1} parent=11 // pred_fallthru
          _
      $region12: #{tpu_custom_call.1} parent=5 // pred_fallthru
        _
      %p262 = scmp.lt.s32.totalorder %s21, 2
      // Predicated region
      $region37: #{tpu_custom_call.1} parent=5 // pred_check
        %p263 = pneg %p262
      $region38: #{tpu_custom_call.1} parent=5 // pred_check_branch
        %265 = sbr.rel (%p263) target = $region40
      $region39: #{tpu_custom_call.1} parent=5 // pred_region
        // Predicated region
        $region41: #{tpu_custom_call.1} parent=39 // pred_check
          %p266 = pneg %p41
        $region42: #{tpu_custom_call.1} parent=39 // pred_check_branch
          %268 = sbr.rel (%p266) target = $region44
        $region43: #{tpu_custom_call.1} parent=39 // pred_region
          %s269 = sand.u32 %s31, 1
          %s270 = scalar_lea.sflag [#allocation3], %s269
          %s271 = sand.u32 %s31, 1
          %s272 = smul.addr %s271, 8
          %s273 = scalar_lea.vmem [#allocation2], %s272
          %s275 = ssub.s32 128, 128
          %276 = vsyncadd %s270, %s275
          %s277 = smul.addr %s21, 128
          %s278 = scalar_lea.hbm %s0, %s277
          %s280 = sshll.u32 %s273, 4
          %s281 = int_to_ptr.vmem [resolvable:$true] %s280
          %283 = dma.hbm_to_vmem [thread:$0]  %s278, 128, %s281, %s270
        $region44: #{tpu_custom_call.1} parent=39 // pred_fallthru
          _
      $region40: #{tpu_custom_call.1} parent=5 // pred_fallthru
        _
      %p284 = scmp.le.s32.totalorder 1, %s21
      %p285 = scmp.lt.s32.totalorder %s21, 3
      %p286 = pnand %p284, %p285
      %p287 = pneg %p286
      // Predicated region
      $region45: #{tpu_custom_call.1} parent=5 // pred_check
        _
      $region46: #{tpu_custom_call.1} parent=5 // pred_check_branch
        %289 = sbr.rel (%p286) target = $region48
      $region47: #{tpu_custom_call.1} parent=5 // pred_region
        %s290 = ssub.s32 %s21, 1
        %s291 = sand.u32 %s34, 1
        %s292 = scalar_lea.sflag [#allocation3], %s291
        %s293 = sand.u32 %s34, 1
        %s294 = smul.addr %s293, 8
        %s295 = scalar_lea.vmem [#allocation2], %s294
        // Predicated region
        $region49: #{tpu_custom_call.1} parent=47 // pred_check
          %p296 = pneg %p47
        $region50: #{tpu_custom_call.1} parent=47 // pred_check_branch
          %298 = sbr.rel (%p296) target = $region52
        $region51: #{tpu_custom_call.1} parent=47 // pred_region
          %299 = dma.done %s292, 128
        $region52: #{tpu_custom_call.1} parent=47 // pred_fallthru
          _
        // Predicated region
        $region53: #{tpu_custom_call.1} parent=47 // pred_check
          %p300 = pneg %p68
        $region54: #{tpu_custom_call.1} parent=47 // pred_check_branch
          %302 = sbr.rel (%p300) target = $region56
        $region55: #{tpu_custom_call.1} parent=47 // pred_region
          %303 = dma.done [#allocation6], 2048
        $region56: #{tpu_custom_call.1} parent=47 // pred_fallthru
          _
        // Predicated region
        $region57: #{tpu_custom_call.1} parent=47 // pred_check
          %p304 = pneg %p110
        $region58: #{tpu_custom_call.1} parent=47 // pred_check_branch
          %306 = sbr.rel (%p304) target = $region60
        $region59: #{tpu_custom_call.1} parent=47 // pred_region
          %307 = dma.done [#allocation6], 2048
        $region60: #{tpu_custom_call.1} parent=47 // pred_fallthru
          _
        // Predicated region
        $region61: #{tpu_custom_call.1} parent=47 // pred_check
          %p308 = pneg %p152
        $region62: #{tpu_custom_call.1} parent=47 // pred_check_branch
          %310 = sbr.rel (%p308) target = $region64
        $region63: #{tpu_custom_call.1} parent=47 // pred_region
          %311 = dma.done [#allocation9], 2048
        $region64: #{tpu_custom_call.1} parent=47 // pred_fallthru
          _
        %s312 = sand.u32 %s34, 1
        %s313 = scalar_lea.sflag [#allocation3], %s312
        %s314 = sand.u32 %s34, 1
        %s315 = smul.addr %s314, 8
        %s316 = scalar_lea.vmem [#allocation2], %s315
        %p317 = pneg %p47
        %p318 = pneg %p44
        %p319 = pneg %p68
        %p320 = pneg %p65
        %p321 = pneg %p89
        %p322 = pneg %p86
        %p323 = pneg %p110
        %p324 = pneg %p107
        %p325 = pneg %p131
        %p326 = pneg %p128
        %p327 = pneg %p152
        %p328 = pneg %p149
        %p329 = pneg %p173
        %p330 = pneg %p170
        %p331 = pneg %p199
        %p332 = pneg %p196
        %s333 = sand.u32 %s186, 1
        %s334 = scalar_lea.sflag [#allocation4], %s333
        %s335 = sand.u32 %s186, 1
        %s336 = smul.addr %s335, 8
        %s337 = scalar_lea.vmem [#allocation10], %s336
        %v338 = vld [vmem:[%s295] sm:$0xff]
        %v339 = vld [vmem:[#allocation5] sm:$0xff]
        %v340 = vld [vmem:[#allocation5 + $0x8] sm:$0xff]
        %v341 = vld [vmem:[#allocation5 + $0x10] sm:$0xff]
        %v342 = vld [vmem:[#allocation5 + $0x18] sm:$0xff]
        %v343 = vld [vmem:[#allocation5 + $0x20] sm:$0xff]
        %v344 = vld [vmem:[#allocation5 + $0x28] sm:$0xff]
        %v345 = vld [vmem:[#allocation5 + $0x30] sm:$0xff]
        %v346 = vld [vmem:[#allocation5 + $0x38] sm:$0xff]
        %v347 = vld [vmem:[#allocation5 + $0x40] sm:$0xff]
        %v348 = vld [vmem:[#allocation5 + $0x48] sm:$0xff]
        %v349 = vld [vmem:[#allocation5 + $0x50] sm:$0xff]
        %v350 = vld [vmem:[#allocation5 + $0x58] sm:$0xff]
        %v351 = vld [vmem:[#allocation5 + $0x60] sm:$0xff]
        %v352 = vld [vmem:[#allocation5 + $0x68] sm:$0xff]
        %v353 = vld [vmem:[#allocation5 + $0x70] sm:$0xff]
        %v354 = vld [vmem:[#allocation5 + $0x78] sm:$0xff]
        %v355 = vld [vmem:[%s2] sm:$0x1]
        %v357 = vlaneseq
        %v358 = vshrl.u32 %v357, 7
        %v359 = vsub.s32 0, %v358
        %v360 = vrot.slane %v355, %v359
        %362 = vmatprep.subr.mxu0 0.0
        %v363 = vand.u32 %v339, 4294901760
        %364 = vmatpush1.msra.mxu0 %v363
        %365 = vmatprep.subr.mxu0 0.0
        %v366 = vand.u32 %v340, 4294901760
        %367 = vmatpush1.msra.mxu0 %v366
        %368 = vmatprep.subr.mxu0 0.0
        %v369 = vand.u32 %v341, 4294901760
        %370 = vmatpush1.msra.mxu0 %v369
        %371 = vmatprep.subr.mxu0 0.0
        %v372 = vand.u32 %v342, 4294901760
        %373 = vmatpush1.msra.mxu0 %v372
        %374 = vmatprep.subr.mxu0 0.0
        %v375 = vand.u32 %v343, 4294901760
        %376 = vmatpush1.msra.mxu0 %v375
        %377 = vmatprep.subr.mxu0 0.0
        %v378 = vand.u32 %v344, 4294901760
        %379 = vmatpush1.msra.mxu0 %v378
        %380 = vmatprep.subr.mxu0 0.0
        %v381 = vand.u32 %v345, 4294901760
        %382 = vmatpush1.msra.mxu0 %v381
        %383 = vmatprep.subr.mxu0 0.0
        %v384 = vand.u32 %v346, 4294901760
        %385 = vmatpush1.msra.mxu0 %v384
        %386 = vmatprep.subr.mxu0 0.0
        %v387 = vand.u32 %v347, 4294901760
        %388 = vmatpush1.msra.mxu0 %v387
        %389 = vmatprep.subr.mxu0 0.0
        %v390 = vand.u32 %v348, 4294901760
        %391 = vmatpush1.msra.mxu0 %v390
        %392 = vmatprep.subr.mxu0 0.0
        %v393 = vand.u32 %v349, 4294901760
        %394 = vmatpush1.msra.mxu0 %v393
        %395 = vmatprep.subr.mxu0 0.0
        %v396 = vand.u32 %v350, 4294901760
        %397 = vmatpush1.msra.mxu0 %v396
        %398 = vmatprep.subr.mxu0 0.0
        %v399 = vand.u32 %v351, 4294901760
        %400 = vmatpush1.msra.mxu0 %v399
        %401 = vmatprep.subr.mxu0 0.0
        %v402 = vand.u32 %v352, 4294901760
        %403 = vmatpush1.msra.mxu0 %v402
        %404 = vmatprep.subr.mxu0 0.0
        %v405 = vand.u32 %v353, 4294901760
        %406 = vmatpush1.msra.mxu0 %v405
        %407 = vmatprep.subr.mxu0 0.0
        %v408 = vand.u32 %v354, 4294901760
        %409 = vmatpush1.msra.mxu0 %v408
        %410 = vmatprep.subr.mxu0 0.0
        %411 = vmatpush1.msra.mxu0 0.0
        %412 = vmatprep.subr.mxu0 0.0
        %413 = vmatpush1.msra.mxu0 0.0
        %414 = vmatprep.subr.mxu0 0.0
        %415 = vmatpush1.msra.mxu0 0.0
        %416 = vmatprep.subr.mxu0 0.0
        %417 = vmatpush1.msra.mxu0 0.0
        %418 = vmatprep.subr.mxu0 0.0
        %419 = vmatpush1.msra.mxu0 0.0
        %420 = vmatprep.subr.mxu0 0.0
        %421 = vmatpush1.msra.mxu0 0.0
        %422 = vmatprep.subr.mxu0 0.0
        %423 = vmatpush1.msra.mxu0 0.0
        %424 = vmatprep.subr.mxu0 0.0
        %425 = vmatpush1.msra.mxu0 0.0
        %426 = vmatprep.subr.mxu0 0.0
        %427 = vmatpush1.msra.mxu0 0.0
        %428 = vmatprep.subr.mxu0 0.0
        %429 = vmatpush1.msra.mxu0 0.0
        %430 = vmatprep.subr.mxu0 0.0
        %431 = vmatpush1.msra.mxu0 0.0
        %432 = vmatprep.subr.mxu0 0.0
        %433 = vmatpush1.msra.mxu0 0.0
        %434 = vmatprep.subr.mxu0 0.0
        %435 = vmatpush1.msra.mxu0 0.0
        %436 = vmatprep.subr.mxu0 0.0
        %437 = vmatpush1.msra.mxu0 0.0
        %438 = vmatprep.subr.mxu0 0.0
        %439 = vmatpush1.msra.mxu0 0.0
        %440 = vmatprep.subr.mxu0 0.0
        %441 = vmatpush1.msra.mxu0 0.0
        %442 = vmatprep.mubr.f32.mxu0 0.0
        %v443 = vand.u32 %v338, 4294901760
        %v444 = vsub.f32 %v338, %v443
        %v445 = vand.u32 %v444, 4294901760
        %v446 = vsub.f32 %v444, %v445
        %v447 = vand.u32 %v446, 4294901760
        %448 = vmatmul.mubr.f32.gmra.mrb[0].mxu0 %v447
        %v449 = vpop.f32.mrb[0].mxu0
        %v450 = vadd.f32 %v360, %v449
        %v451 = vpop.f32.mrb[0].mxu0
        %452 = vdwg.mxu0
        %453 = vmatprep.subr.mxu0 0.0
        %v454 = vand.u32 %v339, 4294901760
        %v455 = vsub.f32 %v339, %v454
        %v456 = vand.u32 %v455, 4294901760
        %v457 = vsub.f32 %v455, %v456
        %v458 = vand.u32 %v457, 4294901760
        %459 = vmatpush1.msra.mxu0 %v458
        %460 = vmatprep.subr.mxu0 0.0
        %v461 = vand.u32 %v340, 4294901760
        %v462 = vsub.f32 %v340, %v461
        %v463 = vand.u32 %v462, 4294901760
        %v464 = vsub.f32 %v462, %v463
        %v465 = vand.u32 %v464, 4294901760
        %466 = vmatpush1.msra.mxu0 %v465
        %467 = vmatprep.subr.mxu0 0.0
        %v468 = vand.u32 %v341, 4294901760
        %v469 = vsub.f32 %v341, %v468
        %v470 = vand.u32 %v469, 4294901760
        %v471 = vsub.f32 %v469, %v470
        %v472 = vand.u32 %v471, 4294901760
        %473 = vmatpush1.msra.mxu0 %v472
        %474 = vmatprep.subr.mxu0 0.0
        %v475 = vand.u32 %v342, 4294901760
        %v476 = vsub.f32 %v342, %v475
        %v477 = vand.u32 %v476, 4294901760
        %v478 = vsub.f32 %v476, %v477
        %v479 = vand.u32 %v478, 4294901760
        %480 = vmatpush1.msra.mxu0 %v479
        %481 = vmatprep.subr.mxu0 0.0
        %v482 = vand.u32 %v343, 4294901760
        %v483 = vsub.f32 %v343, %v482
        %v484 = vand.u32 %v483, 4294901760
        %v485 = vsub.f32 %v483, %v484
        %v486 = vand.u32 %v485, 4294901760
        %487 = vmatpush1.msra.mxu0 %v486
        %488 = vmatprep.subr.mxu0 0.0
        %v489 = vand.u32 %v344, 4294901760
        %v490 = vsub.f32 %v344, %v489
        %v491 = vand.u32 %v490, 4294901760
        %v492 = vsub.f32 %v490, %v491
        %v493 = vand.u32 %v492, 4294901760
        %494 = vmatpush1.msra.mxu0 %v493
        %495 = vmatprep.subr.mxu0 0.0
        %v496 = vand.u32 %v345, 4294901760
        %v497 = vsub.f32 %v345, %v496
        %v498 = vand.u32 %v497, 4294901760
        %v499 = vsub.f32 %v497, %v498
        %v500 = vand.u32 %v499, 4294901760
        %501 = vmatpush1.msra.mxu0 %v500
        %502 = vmatprep.subr.mxu0 0.0
        %v503 = vand.u32 %v346, 4294901760
        %v504 = vsub.f32 %v346, %v503
        %v505 = vand.u32 %v504, 4294901760
        %v506 = vsub.f32 %v504, %v505
        %v507 = vand.u32 %v506, 4294901760
        %508 = vmatpush1.msra.mxu0 %v507
        %509 = vmatprep.subr.mxu0 0.0
        %v510 = vand.u32 %v347, 4294901760
        %v511 = vsub.f32 %v347, %v510
        %v512 = vand.u32 %v511, 4294901760
        %v513 = vsub.f32 %v511, %v512
        %v514 = vand.u32 %v513, 4294901760
        %515 = vmatpush1.msra.mxu0 %v514
        %516 = vmatprep.subr.mxu0 0.0
        %v517 = vand.u32 %v348, 4294901760
        %v518 = vsub.f32 %v348, %v517
        %v519 = vand.u32 %v518, 4294901760
        %v520 = vsub.f32 %v518, %v519
        %v521 = vand.u32 %v520, 4294901760
        %522 = vmatpush1.msra.mxu0 %v521
        %523 = vmatprep.subr.mxu0 0.0
        %v524 = vand.u32 %v349, 4294901760
        %v525 = vsub.f32 %v349, %v524
        %v526 = vand.u32 %v525, 4294901760
        %v527 = vsub.f32 %v525, %v526
        %v528 = vand.u32 %v527, 4294901760
        %529 = vmatpush1.msra.mxu0 %v528
        %530 = vmatprep.subr.mxu0 0.0
        %v531 = vand.u32 %v350, 4294901760
        %v532 = vsub.f32 %v350, %v531
        %v533 = vand.u32 %v532, 4294901760
        %v534 = vsub.f32 %v532, %v533
        %v535 = vand.u32 %v534, 4294901760
        %536 = vmatpush1.msra.mxu0 %v535
        %537 = vmatprep.subr.mxu0 0.0
        %v538 = vand.u32 %v351, 4294901760
        %v539 = vsub.f32 %v351, %v538
        %v540 = vand.u32 %v539, 4294901760
        %v541 = vsub.f32 %v539, %v540
        %v542 = vand.u32 %v541, 4294901760
        %543 = vmatpush1.msra.mxu0 %v542
        %544 = vmatprep.subr.mxu0 0.0
        %v545 = vand.u32 %v352, 4294901760
        %v546 = vsub.f32 %v352, %v545
        %v547 = vand.u32 %v546, 4294901760
        %v548 = vsub.f32 %v546, %v547
        %v549 = vand.u32 %v548, 4294901760
        %550 = vmatpush1.msra.mxu0 %v549
        %551 = vmatprep.subr.mxu0 0.0
        %v552 = vand.u32 %v353, 4294901760
        %v553 = vsub.f32 %v353, %v552
        %v554 = vand.u32 %v553, 4294901760
        %v555 = vsub.f32 %v553, %v554
        %v556 = vand.u32 %v555, 4294901760
        %557 = vmatpush1.msra.mxu0 %v556
        %558 = vmatprep.subr.mxu0 0.0
        %v559 = vand.u32 %v354, 4294901760
        %v560 = vsub.f32 %v354, %v559
        %v561 = vand.u32 %v560, 4294901760
        %v562 = vsub.f32 %v560, %v561
        %v563 = vand.u32 %v562, 4294901760
        %564 = vmatpush1.msra.mxu0 %v563
        %565 = vmatprep.subr.mxu0 0.0
        %566 = vmatpush1.msra.mxu0 0.0
        %567 = vmatprep.subr.mxu0 0.0
        %568 = vmatpush1.msra.mxu0 0.0
        %569 = vmatprep.subr.mxu0 0.0
        %570 = vmatpush1.msra.mxu0 0.0
        %571 = vmatprep.subr.mxu0 0.0
        %572 = vmatpush1.msra.mxu0 0.0
        %573 = vmatprep.subr.mxu0 0.0
        %574 = vmatpush1.msra.mxu0 0.0
        %575 = vmatprep.subr.mxu0 0.0
        %576 = vmatpush1.msra.mxu0 0.0
        %577 = vmatprep.subr.mxu0 0.0
        %578 = vmatpush1.msra.mxu0 0.0
        %579 = vmatprep.subr.mxu0 0.0
        %580 = vmatpush1.msra.mxu0 0.0
        %581 = vmatprep.subr.mxu0 0.0
        %582 = vmatpush1.msra.mxu0 0.0
        %583 = vmatprep.subr.mxu0 0.0
        %584 = vmatpush1.msra.mxu0 0.0
        %585 = vmatprep.subr.mxu0 0.0
        %586 = vmatpush1.msra.mxu0 0.0
        %587 = vmatprep.subr.mxu0 0.0
        %588 = vmatpush1.msra.mxu0 0.0
        %589 = vmatprep.subr.mxu0 0.0
        %590 = vmatpush1.msra.mxu0 0.0
        %591 = vmatprep.subr.mxu0 0.0
        %592 = vmatpush1.msra.mxu0 0.0
        %593 = vmatprep.subr.mxu0 0.0
        %594 = vmatpush1.msra.mxu0 0.0
        %595 = vmatprep.subr.mxu0 0.0
        %596 = vmatpush1.msra.mxu0 0.0
        %597 = vmatprep.mubr.f32.mxu0 0.0
        %v598 = vand.u32 %v338, 4294901760
        %599 = vmatmul.mubr.f32.gmra.mrb[0].mxu0 %v598
        %v600 = vpop.f32.mrb[0].mxu0
        %v601 = vadd.f32 %v450, %v600
        %v602 = vpop.f32.mrb[0].mxu0
        %603 = vdwg.mxu0
        %604 = vmatprep.subr.mxu0 0.0
        %v605 = vand.u32 %v339, 4294901760
        %v606 = vsub.f32 %v339, %v605
        %607 = vmatpush1.msra.mxu0 %v606
        %608 = vmatprep.subr.mxu0 0.0
        %v609 = vand.u32 %v340, 4294901760
        %v610 = vsub.f32 %v340, %v609
        %611 = vmatpush1.msra.mxu0 %v610
        %612 = vmatprep.subr.mxu0 0.0
        %v613 = vand.u32 %v341, 4294901760
        %v614 = vsub.f32 %v341, %v613
        %615 = vmatpush1.msra.mxu0 %v614
        %616 = vmatprep.subr.mxu0 0.0
        %v617 = vand.u32 %v342, 4294901760
        %v618 = vsub.f32 %v342, %v617
        %619 = vmatpush1.msra.mxu0 %v618
        %620 = vmatprep.subr.mxu0 0.0
        %v621 = vand.u32 %v343, 4294901760
        %v622 = vsub.f32 %v343, %v621
        %623 = vmatpush1.msra.mxu0 %v622
        %624 = vmatprep.subr.mxu0 0.0
        %v625 = vand.u32 %v344, 4294901760
        %v626 = vsub.f32 %v344, %v625
        %627 = vmatpush1.msra.mxu0 %v626
        %628 = vmatprep.subr.mxu0 0.0
        %v629 = vand.u32 %v345, 4294901760
        %v630 = vsub.f32 %v345, %v629
        %631 = vmatpush1.msra.mxu0 %v630
        %632 = vmatprep.subr.mxu0 0.0
        %v633 = vand.u32 %v346, 4294901760
        %v634 = vsub.f32 %v346, %v633
        %635 = vmatpush1.msra.mxu0 %v634
        %636 = vmatprep.subr.mxu0 0.0
        %v637 = vand.u32 %v347, 4294901760
        %v638 = vsub.f32 %v347, %v637
        %639 = vmatpush1.msra.mxu0 %v638
        %640 = vmatprep.subr.mxu0 0.0
        %v641 = vand.u32 %v348, 4294901760
        %v642 = vsub.f32 %v348, %v641
        %643 = vmatpush1.msra.mxu0 %v642
        %644 = vmatprep.subr.mxu0 0.0
        %v645 = vand.u32 %v349, 4294901760
        %v646 = vsub.f32 %v349, %v645
        %647 = vmatpush1.msra.mxu0 %v646
        %648 = vmatprep.subr.mxu0 0.0
        %v649 = vand.u32 %v350, 4294901760
        %v650 = vsub.f32 %v350, %v649
        %651 = vmatpush1.msra.mxu0 %v650
        %652 = vmatprep.subr.mxu0 0.0
        %v653 = vand.u32 %v351, 4294901760
        %v654 = vsub.f32 %v351, %v653
        %655 = vmatpush1.msra.mxu0 %v654
        %656 = vmatprep.subr.mxu0 0.0
        %v657 = vand.u32 %v352, 4294901760
        %v658 = vsub.f32 %v352, %v657
        %659 = vmatpush1.msra.mxu0 %v658
        %660 = vmatprep.subr.mxu0 0.0
        %v661 = vand.u32 %v353, 4294901760
        %v662 = vsub.f32 %v353, %v661
        %663 = vmatpush1.msra.mxu0 %v662
        %664 = vmatprep.subr.mxu0 0.0
        %v665 = vand.u32 %v354, 4294901760
        %v666 = vsub.f32 %v354, %v665
        %667 = vmatpush1.msra.mxu0 %v666
        %668 = vmatprep.subr.mxu0 0.0
        %669 = vmatpush1.msra.mxu0 0.0
        %670 = vmatprep.subr.mxu0 0.0
        %671 = vmatpush1.msra.mxu0 0.0
        %672 = vmatprep.subr.mxu0 0.0
        %673 = vmatpush1.msra.mxu0 0.0
        %674 = vmatprep.subr.mxu0 0.0
        %675 = vmatpush1.msra.mxu0 0.0
        %676 = vmatprep.subr.mxu0 0.0
        %677 = vmatpush1.msra.mxu0 0.0
        %678 = vmatprep.subr.mxu0 0.0
        %679 = vmatpush1.msra.mxu0 0.0
        %680 = vmatprep.subr.mxu0 0.0
        %681 = vmatpush1.msra.mxu0 0.0
        %682 = vmatprep.subr.mxu0 0.0
        %683 = vmatpush1.msra.mxu0 0.0
        %684 = vmatprep.subr.mxu0 0.0
        %685 = vmatpush1.msra.mxu0 0.0
        %686 = vmatprep.subr.mxu0 0.0
        %687 = vmatpush1.msra.mxu0 0.0
        %688 = vmatprep.subr.mxu0 0.0
        %689 = vmatpush1.msra.mxu0 0.0
        %690 = vmatprep.subr.mxu0 0.0
        %691 = vmatpush1.msra.mxu0 0.0
        %692 = vmatprep.subr.mxu0 0.0
        %693 = vmatpush1.msra.mxu0 0.0
        %694 = vmatprep.subr.mxu0 0.0
        %695 = vmatpush1.msra.mxu0 0.0
        %696 = vmatprep.subr.mxu0 0.0
        %697 = vmatpush1.msra.mxu0 0.0
        %698 = vmatprep.subr.mxu0 0.0
        %699 = vmatpush1.msra.mxu0 0.0
        %700 = vmatprep.mubr.f32.mxu0 0.0
        %v701 = vand.u32 %v338, 4294901760
        %v702 = vsub.f32 %v338, %v701
        %703 = vmatmul.mubr.f32.gmra.mrb[0].mxu0 %v702
        %v704 = vpop.f32.mrb[0].mxu0
        %v705 = vadd.f32 %v601, %v704
        %v706 = vpop.f32.mrb[0].mxu0
        %707 = vdwg.mxu0
        %708 = vmatprep.subr.mxu0 0.0
        %v709 = vand.u32 %v339, 4294901760
        %710 = vmatpush1.msra.mxu0 %v709
        %711 = vmatprep.subr.mxu0 0.0
        %v712 = vand.u32 %v340, 4294901760
        %713 = vmatpush1.msra.mxu0 %v712
        %714 = vmatprep.subr.mxu0 0.0
        %v715 = vand.u32 %v341, 4294901760
        %716 = vmatpush1.msra.mxu0 %v715
        %717 = vmatprep.subr.mxu0 0.0
        %v718 = vand.u32 %v342, 4294901760
        %719 = vmatpush1.msra.mxu0 %v718
        %720 = vmatprep.subr.mxu0 0.0
        %v721 = vand.u32 %v343, 4294901760
        %722 = vmatpush1.msra.mxu0 %v721
        %723 = vmatprep.subr.mxu0 0.0
        %v724 = vand.u32 %v344, 4294901760
        %725 = vmatpush1.msra.mxu0 %v724
        %726 = vmatprep.subr.mxu0 0.0
        %v727 = vand.u32 %v345, 4294901760
        %728 = vmatpush1.msra.mxu0 %v727
        %729 = vmatprep.subr.mxu0 0.0
        %v730 = vand.u32 %v346, 4294901760
        %731 = vmatpush1.msra.mxu0 %v730
        %732 = vmatprep.subr.mxu0 0.0
        %v733 = vand.u32 %v347, 4294901760
        %734 = vmatpush1.msra.mxu0 %v733
        %735 = vmatprep.subr.mxu0 0.0
        %v736 = vand.u32 %v348, 4294901760
        %737 = vmatpush1.msra.mxu0 %v736
        %738 = vmatprep.subr.mxu0 0.0
        %v739 = vand.u32 %v349, 4294901760
        %740 = vmatpush1.msra.mxu0 %v739
        %741 = vmatprep.subr.mxu0 0.0
        %v742 = vand.u32 %v350, 4294901760
        %743 = vmatpush1.msra.mxu0 %v742
        %744 = vmatprep.subr.mxu0 0.0
        %v745 = vand.u32 %v351, 4294901760
        %746 = vmatpush1.msra.mxu0 %v745
        %747 = vmatprep.subr.mxu0 0.0
        %v748 = vand.u32 %v352, 4294901760
        %749 = vmatpush1.msra.mxu0 %v748
        %750 = vmatprep.subr.mxu0 0.0
        %v751 = vand.u32 %v353, 4294901760
        %752 = vmatpush1.msra.mxu0 %v751
        %753 = vmatprep.subr.mxu0 0.0
        %v754 = vand.u32 %v354, 4294901760
        %755 = vmatpush1.msra.mxu0 %v754
        %756 = vmatprep.subr.mxu0 0.0
        %757 = vmatpush1.msra.mxu0 0.0
        %758 = vmatprep.subr.mxu0 0.0
        %759 = vmatpush1.msra.mxu0 0.0
        %760 = vmatprep.subr.mxu0 0.0
        %761 = vmatpush1.msra.mxu0 0.0
        %762 = vmatprep.subr.mxu0 0.0
        %763 = vmatpush1.msra.mxu0 0.0
        %764 = vmatprep.subr.mxu0 0.0
        %765 = vmatpush1.msra.mxu0 0.0
        %766 = vmatprep.subr.mxu0 0.0
        %767 = vmatpush1.msra.mxu0 0.0
        %768 = vmatprep.subr.mxu0 0.0
        %769 = vmatpush1.msra.mxu0 0.0
        %770 = vmatprep.subr.mxu0 0.0
        %771 = vmatpush1.msra.mxu0 0.0
        %772 = vmatprep.subr.mxu0 0.0
        %773 = vmatpush1.msra.mxu0 0.0
        %774 = vmatprep.subr.mxu0 0.0
        %775 = vmatpush1.msra.mxu0 0.0
        %776 = vmatprep.subr.mxu0 0.0
        %777 = vmatpush1.msra.mxu0 0.0
        %778 = vmatprep.subr.mxu0 0.0
        %779 = vmatpush1.msra.mxu0 0.0
        %780 = vmatprep.subr.mxu0 0.0
        %781 = vmatpush1.msra.mxu0 0.0
        %782 = vmatprep.subr.mxu0 0.0
        %783 = vmatpush1.msra.mxu0 0.0
        %784 = vmatprep.subr.mxu0 0.0
        %785 = vmatpush1.msra.mxu0 0.0
        %786 = vmatprep.subr.mxu0 0.0
        %787 = vmatpush1.msra.mxu0 0.0
        %788 = vmatprep.mubr.f32.mxu0 0.0
        %v789 = vand.u32 %v338, 4294901760
        %v790 = vsub.f32 %v338, %v789
        %v791 = vand.u32 %v790, 4294901760
        %792 = vmatmul.mubr.f32.gmra.mrb[0].mxu0 %v791
        %v793 = vpop.f32.mrb[0].mxu0
        %v794 = vadd.f32 %v705, %v793
        %v795 = vpop.f32.mrb[0].mxu0
        %796 = vdwg.mxu0
        %797 = vmatprep.subr.mxu0 0.0
        %v798 = vand.u32 %v339, 4294901760
        %v799 = vsub.f32 %v339, %v798
        %v800 = vand.u32 %v799, 4294901760
        %801 = vmatpush1.msra.mxu0 %v800
        %802 = vmatprep.subr.mxu0 0.0
        %v803 = vand.u32 %v340, 4294901760
        %v804 = vsub.f32 %v340, %v803
        %v805 = vand.u32 %v804, 4294901760
        %806 = vmatpush1.msra.mxu0 %v805
        %807 = vmatprep.subr.mxu0 0.0
        %v808 = vand.u32 %v341, 4294901760
        %v809 = vsub.f32 %v341, %v808
        %v810 = vand.u32 %v809, 4294901760
        %811 = vmatpush1.msra.mxu0 %v810
        %812 = vmatprep.subr.mxu0 0.0
        %v813 = vand.u32 %v342, 4294901760
        %v814 = vsub.f32 %v342, %v813
        %v815 = vand.u32 %v814, 4294901760
        %816 = vmatpush1.msra.mxu0 %v815
        %817 = vmatprep.subr.mxu0 0.0
        %v818 = vand.u32 %v343, 4294901760
        %v819 = vsub.f32 %v343, %v818
        %v820 = vand.u32 %v819, 4294901760
        %821 = vmatpush1.msra.mxu0 %v820
        %822 = vmatprep.subr.mxu0 0.0
        %v823 = vand.u32 %v344, 4294901760
        %v824 = vsub.f32 %v344, %v823
        %v825 = vand.u32 %v824, 4294901760
        %826 = vmatpush1.msra.mxu0 %v825
        %827 = vmatprep.subr.mxu0 0.0
        %v828 = vand.u32 %v345, 4294901760
        %v829 = vsub.f32 %v345, %v828
        %v830 = vand.u32 %v829, 4294901760
        %831 = vmatpush1.msra.mxu0 %v830
        %832 = vmatprep.subr.mxu0 0.0
        %v833 = vand.u32 %v346, 4294901760
        %v834 = vsub.f32 %v346, %v833
        %v835 = vand.u32 %v834, 4294901760
        %836 = vmatpush1.msra.mxu0 %v835
        %837 = vmatprep.subr.mxu0 0.0
        %v838 = vand.u32 %v347, 4294901760
        %v839 = vsub.f32 %v347, %v838
        %v840 = vand.u32 %v839, 4294901760
        %841 = vmatpush1.msra.mxu0 %v840
        %842 = vmatprep.subr.mxu0 0.0
        %v843 = vand.u32 %v348, 4294901760
        %v844 = vsub.f32 %v348, %v843
        %v845 = vand.u32 %v844, 4294901760
        %846 = vmatpush1.msra.mxu0 %v845
        %847 = vmatprep.subr.mxu0 0.0
        %v848 = vand.u32 %v349, 4294901760
        %v849 = vsub.f32 %v349, %v848
        %v850 = vand.u32 %v849, 4294901760
        %851 = vmatpush1.msra.mxu0 %v850
        %852 = vmatprep.subr.mxu0 0.0
        %v853 = vand.u32 %v350, 4294901760
        %v854 = vsub.f32 %v350, %v853
        %v855 = vand.u32 %v854, 4294901760
        %856 = vmatpush1.msra.mxu0 %v855
        %857 = vmatprep.subr.mxu0 0.0
        %v858 = vand.u32 %v351, 4294901760
        %v859 = vsub.f32 %v351, %v858
        %v860 = vand.u32 %v859, 4294901760
        %861 = vmatpush1.msra.mxu0 %v860
        %862 = vmatprep.subr.mxu0 0.0
        %v863 = vand.u32 %v352, 4294901760
        %v864 = vsub.f32 %v352, %v863
        %v865 = vand.u32 %v864, 4294901760
        %866 = vmatpush1.msra.mxu0 %v865
        %867 = vmatprep.subr.mxu0 0.0
        %v868 = vand.u32 %v353, 4294901760
        %v869 = vsub.f32 %v353, %v868
        %v870 = vand.u32 %v869, 4294901760
        %871 = vmatpush1.msra.mxu0 %v870
        %872 = vmatprep.subr.mxu0 0.0
        %v873 = vand.u32 %v354, 4294901760
        %v874 = vsub.f32 %v354, %v873
        %v875 = vand.u32 %v874, 4294901760
        %876 = vmatpush1.msra.mxu0 %v875
        %877 = vmatprep.subr.mxu0 0.0
        %878 = vmatpush1.msra.mxu0 0.0
        %879 = vmatprep.subr.mxu0 0.0
        %880 = vmatpush1.msra.mxu0 0.0
        %881 = vmatprep.subr.mxu0 0.0
        %882 = vmatpush1.msra.mxu0 0.0
        %883 = vmatprep.subr.mxu0 0.0
        %884 = vmatpush1.msra.mxu0 0.0
        %885 = vmatprep.subr.mxu0 0.0
        %886 = vmatpush1.msra.mxu0 0.0
        %887 = vmatprep.subr.mxu0 0.0
        %888 = vmatpush1.msra.mxu0 0.0
        %889 = vmatprep.subr.mxu0 0.0
        %890 = vmatpush1.msra.mxu0 0.0
        %891 = vmatprep.subr.mxu0 0.0
        %892 = vmatpush1.msra.mxu0 0.0
        %893 = vmatprep.subr.mxu0 0.0
        %894 = vmatpush1.msra.mxu0 0.0
        %895 = vmatprep.subr.mxu0 0.0
        %896 = vmatpush1.msra.mxu0 0.0
        %897 = vmatprep.subr.mxu0 0.0
        %898 = vmatpush1.msra.mxu0 0.0
        %899 = vmatprep.subr.mxu0 0.0
        %900 = vmatpush1.msra.mxu0 0.0
        %901 = vmatprep.subr.mxu0 0.0
        %902 = vmatpush1.msra.mxu0 0.0
        %903 = vmatprep.subr.mxu0 0.0
        %904 = vmatpush1.msra.mxu0 0.0
        %905 = vmatprep.subr.mxu0 0.0
        %906 = vmatpush1.msra.mxu0 0.0
        %907 = vmatprep.subr.mxu0 0.0
        %908 = vmatpush1.msra.mxu0 0.0
        %909 = vmatprep.mubr.f32.mxu0 0.0
        %v910 = vand.u32 %v338, 4294901760
        %911 = vmatmul.mubr.f32.gmra.mrb[0].mxu0 %v910
        %v912 = vpop.f32.mrb[0].mxu0
        %v913 = vadd.f32 %v794, %v912
        %v914 = vpop.f32.mrb[0].mxu0
        %915 = vdwg.mxu0
        %916 = vmatprep.subr.mxu0 0.0
        %v917 = vand.u32 %v339, 4294901760
        %918 = vmatpush1.msra.mxu0 %v917
        %919 = vmatprep.subr.mxu0 0.0
        %v920 = vand.u32 %v340, 4294901760
        %921 = vmatpush1.msra.mxu0 %v920
        %922 = vmatprep.subr.mxu0 0.0
        %v923 = vand.u32 %v341, 4294901760
        %924 = vmatpush1.msra.mxu0 %v923
        %925 = vmatprep.subr.mxu0 0.0
        %v926 = vand.u32 %v342, 4294901760
        %927 = vmatpush1.msra.mxu0 %v926
        %928 = vmatprep.subr.mxu0 0.0
        %v929 = vand.u32 %v343, 4294901760
        %930 = vmatpush1.msra.mxu0 %v929
        %931 = vmatprep.subr.mxu0 0.0
        %v932 = vand.u32 %v344, 4294901760
        %933 = vmatpush1.msra.mxu0 %v932
        %934 = vmatprep.subr.mxu0 0.0
        %v935 = vand.u32 %v345, 4294901760
        %936 = vmatpush1.msra.mxu0 %v935
        %937 = vmatprep.subr.mxu0 0.0
        %v938 = vand.u32 %v346, 4294901760
        %939 = vmatpush1.msra.mxu0 %v938
        %940 = vmatprep.subr.mxu0 0.0
        %v941 = vand.u32 %v347, 4294901760
        %942 = vmatpush1.msra.mxu0 %v941
        %943 = vmatprep.subr.mxu0 0.0
        %v944 = vand.u32 %v348, 4294901760
        %945 = vmatpush1.msra.mxu0 %v944
        %946 = vmatprep.subr.mxu0 0.0
        %v947 = vand.u32 %v349, 4294901760
        %948 = vmatpush1.msra.mxu0 %v947
        %949 = vmatprep.subr.mxu0 0.0
        %v950 = vand.u32 %v350, 4294901760
        %951 = vmatpush1.msra.mxu0 %v950
        %952 = vmatprep.subr.mxu0 0.0
        %v953 = vand.u32 %v351, 4294901760
        %954 = vmatpush1.msra.mxu0 %v953
        %955 = vmatprep.subr.mxu0 0.0
        %v956 = vand.u32 %v352, 4294901760
        %957 = vmatpush1.msra.mxu0 %v956
        %958 = vmatprep.subr.mxu0 0.0
        %v959 = vand.u32 %v353, 4294901760
        %960 = vmatpush1.msra.mxu0 %v959
        %961 = vmatprep.subr.mxu0 0.0
        %v962 = vand.u32 %v354, 4294901760
        %963 = vmatpush1.msra.mxu0 %v962
        %964 = vmatprep.subr.mxu0 0.0
        %965 = vmatpush1.msra.mxu0 0.0
        %966 = vmatprep.subr.mxu0 0.0
        %967 = vmatpush1.msra.mxu0 0.0
        %968 = vmatprep.subr.mxu0 0.0
        %969 = vmatpush1.msra.mxu0 0.0
        %970 = vmatprep.subr.mxu0 0.0
        %971 = vmatpush1.msra.mxu0 0.0
        %972 = vmatprep.subr.mxu0 0.0
        %973 = vmatpush1.msra.mxu0 0.0
        %974 = vmatprep.subr.mxu0 0.0
        %975 = vmatpush1.msra.mxu0 0.0
        %976 = vmatprep.subr.mxu0 0.0
        %977 = vmatpush1.msra.mxu0 0.0
        %978 = vmatprep.subr.mxu0 0.0
        %979 = vmatpush1.msra.mxu0 0.0
        %980 = vmatprep.subr.mxu0 0.0
        %981 = vmatpush1.msra.mxu0 0.0
        %982 = vmatprep.subr.mxu0 0.0
        %983 = vmatpush1.msra.mxu0 0.0
        %984 = vmatprep.subr.mxu0 0.0
        %985 = vmatpush1.msra.mxu0 0.0
        %986 = vmatprep.subr.mxu0 0.0
        %987 = vmatpush1.msra.mxu0 0.0
        %988 = vmatprep.subr.mxu0 0.0
        %989 = vmatpush1.msra.mxu0 0.0
        %990 = vmatprep.subr.mxu0 0.0
        %991 = vmatpush1.msra.mxu0 0.0
        %992 = vmatprep.subr.mxu0 0.0
        %993 = vmatpush1.msra.mxu0 0.0
        %994 = vmatprep.subr.mxu0 0.0
        %995 = vmatpush1.msra.mxu0 0.0
        %996 = vmatprep.mubr.f32.mxu0 0.0
        %v997 = vand.u32 %v338, 4294901760
        %998 = vmatmul.mubr.f32.gmra.mrb[0].mxu0 %v997
        %v999 = vpop.f32.mrb[0].mxu0
        %v1000 = vadd.f32 %v913, %v999
        %v1001 = vpop.f32.mrb[0].mxu0
        %1002 = vdwg.mxu0
        %v1003 = vmax.f32 %v1000, 0.0
        %v1004 = vld [vmem:[#allocation7] sm:$0xff]
        %v1005 = vld [vmem:[#allocation7 + $0x8] sm:$0xff]
        %v1006 = vld [vmem:[#allocation7 + $0x10] sm:$0xff]
        %v1007 = vld [vmem:[#allocation7 + $0x18] sm:$0xff]
        %v1008 = vld [vmem:[#allocation7 + $0x20] sm:$0xff]
        %v1009 = vld [vmem:[#allocation7 + $0x28] sm:$0xff]
        %v1010 = vld [vmem:[#allocation7 + $0x30] sm:$0xff]
        %v1011 = vld [vmem:[#allocation7 + $0x38] sm:$0xff]
        %v1012 = vld [vmem:[#allocation7 + $0x40] sm:$0xff]
        %v1013 = vld [vmem:[#allocation7 + $0x48] sm:$0xff]
        %v1014 = vld [vmem:[#allocation7 + $0x50] sm:$0xff]
        %v1015 = vld [vmem:[#allocation7 + $0x58] sm:$0xff]
        %v1016 = vld [vmem:[#allocation7 + $0x60] sm:$0xff]
        %v1017 = vld [vmem:[#allocation7 + $0x68] sm:$0xff]
        %v1018 = vld [vmem:[#allocation7 + $0x70] sm:$0xff]
        %v1019 = vld [vmem:[#allocation7 + $0x78] sm:$0xff]
        %v1020 = vld [vmem:[%s4] sm:$0x1]
        %v1022 = vlaneseq
        %v1023 = vshrl.u32 %v1022, 7
        %v1024 = vsub.s32 0, %v1023
        %v1025 = vrot.slane %v1020, %v1024
        %1027 = vmatprep.subr.mxu0 0.0
        %v1028 = vand.u32 %v1004, 4294901760
        %1029 = vmatpush1.msra.mxu0 %v1028
        %1030 = vmatprep.subr.mxu0 0.0
        %v1031 = vand.u32 %v1005, 4294901760
        %1032 = vmatpush1.msra.mxu0 %v1031
        %1033 = vmatprep.subr.mxu0 0.0
        %v1034 = vand.u32 %v1006, 4294901760
        %1035 = vmatpush1.msra.mxu0 %v1034
        %1036 = vmatprep.subr.mxu0 0.0
        %v1037 = vand.u32 %v1007, 4294901760
        %1038 = vmatpush1.msra.mxu0 %v1037
        %1039 = vmatprep.subr.mxu0 0.0
        %v1040 = vand.u32 %v1008, 4294901760
        %1041 = vmatpush1.msra.mxu0 %v1040
        %1042 = vmatprep.subr.mxu0 0.0
        %v1043 = vand.u32 %v1009, 4294901760
        %1044 = vmatpush1.msra.mxu0 %v1043
        %1045 = vmatprep.subr.mxu0 0.0
        %v1046 = vand.u32 %v1010, 4294901760
        %1047 = vmatpush1.msra.mxu0 %v1046
        %1048 = vmatprep.subr.mxu0 0.0
        %v1049 = vand.u32 %v1011, 4294901760
        %1050 = vmatpush1.msra.mxu0 %v1049
        %1051 = vmatprep.subr.mxu0 0.0
        %v1052 = vand.u32 %v1012, 4294901760
        %1053 = vmatpush1.msra.mxu0 %v1052
        %1054 = vmatprep.subr.mxu0 0.0
        %v1055 = vand.u32 %v1013, 4294901760
        %1056 = vmatpush1.msra.mxu0 %v1055
        %1057 = vmatprep.subr.mxu0 0.0
        %v1058 = vand.u32 %v1014, 4294901760
        %1059 = vmatpush1.msra.mxu0 %v1058
        %1060 = vmatprep.subr.mxu0 0.0
        %v1061 = vand.u32 %v1015, 4294901760
        %1062 = vmatpush1.msra.mxu0 %v1061
        %1063 = vmatprep.subr.mxu0 0.0
        %v1064 = vand.u32 %v1016, 4294901760
        %1065 = vmatpush1.msra.mxu0 %v1064
        %1066 = vmatprep.subr.mxu0 0.0
        %v1067 = vand.u32 %v1017, 4294901760
        %1068 = vmatpush1.msra.mxu0 %v1067
        %1069 = vmatprep.subr.mxu0 0.0
        %v1070 = vand.u32 %v1018, 4294901760
        %1071 = vmatpush1.msra.mxu0 %v1070
        %1072 = vmatprep.subr.mxu0 0.0
        %v1073 = vand.u32 %v1019, 4294901760
        %1074 = vmatpush1.msra.mxu0 %v1073
        %1075 = vmatprep.subr.mxu0 0.0
        %1076 = vmatpush1.msra.mxu0 0.0
        %1077 = vmatprep.subr.mxu0 0.0
        %1078 = vmatpush1.msra.mxu0 0.0
        %1079 = vmatprep.subr.mxu0 0.0
        %1080 = vmatpush1.msra.mxu0 0.0
        %1081 = vmatprep.subr.mxu0 0.0
        %1082 = vmatpush1.msra.mxu0 0.0
        %1083 = vmatprep.subr.mxu0 0.0
        %1084 = vmatpush1.msra.mxu0 0.0
        %1085 = vmatprep.subr.mxu0 0.0
        %1086 = vmatpush1.msra.mxu0 0.0
        %1087 = vmatprep.subr.mxu0 0.0
        %1088 = vmatpush1.msra.mxu0 0.0
        %1089 = vmatprep.subr.mxu0 0.0
        %1090 = vmatpush1.msra.mxu0 0.0
        %1091 = vmatprep.subr.mxu0 0.0
        %1092 = vmatpush1.msra.mxu0 0.0
        %1093 = vmatprep.subr.mxu0 0.0
        %1094 = vmatpush1.msra.mxu0 0.0
        %1095 = vmatprep.subr.mxu0 0.0
        %1096 = vmatpush1.msra.mxu0 0.0
        %1097 = vmatprep.subr.mxu0 0.0
        %1098 = vmatpush1.msra.mxu0 0.0
        %1099 = vmatprep.subr.mxu0 0.0
        %1100 = vmatpush1.msra.mxu0 0.0
        %1101 = vmatprep.subr.mxu0 0.0
        %1102 = vmatpush1.msra.mxu0 0.0
        %1103 = vmatprep.subr.mxu0 0.0
        %1104 = vmatpush1.msra.mxu0 0.0
        %1105 = vmatprep.subr.mxu0 0.0
        %1106 = vmatpush1.msra.mxu0 0.0
        %1107 = vmatprep.mubr.f32.mxu0 0.0
        %v1108 = vand.u32 %v1003, 4294901760
        %v1109 = vsub.f32 %v1003, %v1108
        %v1110 = vand.u32 %v1109, 4294901760
        %v1111 = vsub.f32 %v1109, %v1110
        %v1112 = vand.u32 %v1111, 4294901760
        %1113 = vmatmul.mubr.f32.gmra.mrb[0].mxu0 %v1112
        %v1114 = vpop.f32.mrb[0].mxu0
        %v1115 = vadd.f32 %v1025, %v1114
        %v1116 = vpop.f32.mrb[0].mxu0
        %1117 = vdwg.mxu0
        %1118 = vmatprep.subr.mxu0 0.0
        %v1119 = vand.u32 %v1004, 4294901760
        %v1120 = vsub.f32 %v1004, %v1119
        %v1121 = vand.u32 %v1120, 4294901760
        %v1122 = vsub.f32 %v1120, %v1121
        %v1123 = vand.u32 %v1122, 4294901760
        %1124 = vmatpush1.msra.mxu0 %v1123
        %1125 = vmatprep.subr.mxu0 0.0
        %v1126 = vand.u32 %v1005, 4294901760
        %v1127 = vsub.f32 %v1005, %v1126
        %v1128 = vand.u32 %v1127, 4294901760
        %v1129 = vsub.f32 %v1127, %v1128
        %v1130 = vand.u32 %v1129, 4294901760
        %1131 = vmatpush1.msra.mxu0 %v1130
        %1132 = vmatprep.subr.mxu0 0.0
        %v1133 = vand.u32 %v1006, 4294901760
        %v1134 = vsub.f32 %v1006, %v1133
        %v1135 = vand.u32 %v1134, 4294901760
        %v1136 = vsub.f32 %v1134, %v1135
        %v1137 = vand.u32 %v1136, 4294901760
        %1138 = vmatpush1.msra.mxu0 %v1137
        %1139 = vmatprep.subr.mxu0 0.0
        %v1140 = vand.u32 %v1007, 4294901760
        %v1141 = vsub.f32 %v1007, %v1140
        %v1142 = vand.u32 %v1141, 4294901760
        %v1143 = vsub.f32 %v1141, %v1142
        %v1144 = vand.u32 %v1143, 4294901760
        %1145 = vmatpush1.msra.mxu0 %v1144
        %1146 = vmatprep.subr.mxu0 0.0
        %v1147 = vand.u32 %v1008, 4294901760
        %v1148 = vsub.f32 %v1008, %v1147
        %v1149 = vand.u32 %v1148, 4294901760
        %v1150 = vsub.f32 %v1148, %v1149
        %v1151 = vand.u32 %v1150, 4294901760
        %1152 = vmatpush1.msra.mxu0 %v1151
        %1153 = vmatprep.subr.mxu0 0.0
        %v1154 = vand.u32 %v1009, 4294901760
        %v1155 = vsub.f32 %v1009, %v1154
        %v1156 = vand.u32 %v1155, 4294901760
        %v1157 = vsub.f32 %v1155, %v1156
        %v1158 = vand.u32 %v1157, 4294901760
        %1159 = vmatpush1.msra.mxu0 %v1158
        %1160 = vmatprep.subr.mxu0 0.0
        %v1161 = vand.u32 %v1010, 4294901760
        %v1162 = vsub.f32 %v1010, %v1161
        %v1163 = vand.u32 %v1162, 4294901760
        %v1164 = vsub.f32 %v1162, %v1163
        %v1165 = vand.u32 %v1164, 4294901760
        %1166 = vmatpush1.msra.mxu0 %v1165
        %1167 = vmatprep.subr.mxu0 0.0
        %v1168 = vand.u32 %v1011, 4294901760
        %v1169 = vsub.f32 %v1011, %v1168
        %v1170 = vand.u32 %v1169, 4294901760
        %v1171 = vsub.f32 %v1169, %v1170
        %v1172 = vand.u32 %v1171, 4294901760
        %1173 = vmatpush1.msra.mxu0 %v1172
        %1174 = vmatprep.subr.mxu0 0.0
        %v1175 = vand.u32 %v1012, 4294901760
        %v1176 = vsub.f32 %v1012, %v1175
        %v1177 = vand.u32 %v1176, 4294901760
        %v1178 = vsub.f32 %v1176, %v1177
        %v1179 = vand.u32 %v1178, 4294901760
        %1180 = vmatpush1.msra.mxu0 %v1179
        %1181 = vmatprep.subr.mxu0 0.0
        %v1182 = vand.u32 %v1013, 4294901760
        %v1183 = vsub.f32 %v1013, %v1182
        %v1184 = vand.u32 %v1183, 4294901760
        %v1185 = vsub.f32 %v1183, %v1184
        %v1186 = vand.u32 %v1185, 4294901760
        %1187 = vmatpush1.msra.mxu0 %v1186
        %1188 = vmatprep.subr.mxu0 0.0
        %v1189 = vand.u32 %v1014, 4294901760
        %v1190 = vsub.f32 %v1014, %v1189
        %v1191 = vand.u32 %v1190, 4294901760
        %v1192 = vsub.f32 %v1190, %v1191
        %v1193 = vand.u32 %v1192, 4294901760
        %1194 = vmatpush1.msra.mxu0 %v1193
        %1195 = vmatprep.subr.mxu0 0.0
        %v1196 = vand.u32 %v1015, 4294901760
        %v1197 = vsub.f32 %v1015, %v1196
        %v1198 = vand.u32 %v1197, 4294901760
        %v1199 = vsub.f32 %v1197, %v1198
        %v1200 = vand.u32 %v1199, 4294901760
        %1201 = vmatpush1.msra.mxu0 %v1200
        %1202 = vmatprep.subr.mxu0 0.0
        %v1203 = vand.u32 %v1016, 4294901760
        %v1204 = vsub.f32 %v1016, %v1203
        %v1205 = vand.u32 %v1204, 4294901760
        %v1206 = vsub.f32 %v1204, %v1205
        %v1207 = vand.u32 %v1206, 4294901760
        %1208 = vmatpush1.msra.mxu0 %v1207
        %1209 = vmatprep.subr.mxu0 0.0
        %v1210 = vand.u32 %v1017, 4294901760
        %v1211 = vsub.f32 %v1017, %v1210
        %v1212 = vand.u32 %v1211, 4294901760
        %v1213 = vsub.f32 %v1211, %v1212
        %v1214 = vand.u32 %v1213, 4294901760
        %1215 = vmatpush1.msra.mxu0 %v1214
        %1216 = vmatprep.subr.mxu0 0.0
        %v1217 = vand.u32 %v1018, 4294901760
        %v1218 = vsub.f32 %v1018, %v1217
        %v1219 = vand.u32 %v1218, 4294901760
        %v1220 = vsub.f32 %v1218, %v1219
        %v1221 = vand.u32 %v1220, 4294901760
        %1222 = vmatpush1.msra.mxu0 %v1221
        %1223 = vmatprep.subr.mxu0 0.0
        %v1224 = vand.u32 %v1019, 4294901760
        %v1225 = vsub.f32 %v1019, %v1224
        %v1226 = vand.u32 %v1225, 4294901760
        %v1227 = vsub.f32 %v1225, %v1226
        %v1228 = vand.u32 %v1227, 4294901760
        %1229 = vmatpush1.msra.mxu0 %v1228
        %1230 = vmatprep.subr.mxu0 0.0
        %1231 = vmatpush1.msra.mxu0 0.0
        %1232 = vmatprep.subr.mxu0 0.0
        %1233 = vmatpush1.msra.mxu0 0.0
        %1234 = vmatprep.subr.mxu0 0.0
        %1235 = vmatpush1.msra.mxu0 0.0
        %1236 = vmatprep.subr.mxu0 0.0
        %1237 = vmatpush1.msra.mxu0 0.0
        %1238 = vmatprep.subr.mxu0 0.0
        %1239 = vmatpush1.msra.mxu0 0.0
        %1240 = vmatprep.subr.mxu0 0.0
        %1241 = vmatpush1.msra.mxu0 0.0
        %1242 = vmatprep.subr.mxu0 0.0
        %1243 = vmatpush1.msra.mxu0 0.0
        %1244 = vmatprep.subr.mxu0 0.0
        %1245 = vmatpush1.msra.mxu0 0.0
        %1246 = vmatprep.subr.mxu0 0.0
        %1247 = vmatpush1.msra.mxu0 0.0
        %1248 = vmatprep.subr.mxu0 0.0
        %1249 = vmatpush1.msra.mxu0 0.0
        %1250 = vmatprep.subr.mxu0 0.0
        %1251 = vmatpush1.msra.mxu0 0.0
        %1252 = vmatprep.subr.mxu0 0.0
        %1253 = vmatpush1.msra.mxu0 0.0
        %1254 = vmatprep.subr.mxu0 0.0
        %1255 = vmatpush1.msra.mxu0 0.0
        %1256 = vmatprep.subr.mxu0 0.0
        %1257 = vmatpush1.msra.mxu0 0.0
        %1258 = vmatprep.subr.mxu0 0.0
        %1259 = vmatpush1.msra.mxu0 0.0
        %1260 = vmatprep.subr.mxu0 0.0
        %1261 = vmatpush1.msra.mxu0 0.0
        %1262 = vmatprep.mubr.f32.mxu0 0.0
        %v1263 = vand.u32 %v1003, 4294901760
        %1264 = vmatmul.mubr.f32.gmra.mrb[0].mxu0 %v1263
        %v1265 = vpop.f32.mrb[0].mxu0
        %v1266 = vadd.f32 %v1115, %v1265
        %v1267 = vpop.f32.mrb[0].mxu0
        %1268 = vdwg.mxu0
        %1269 = vmatprep.subr.mxu0 0.0
        %v1270 = vand.u32 %v1004, 4294901760
        %v1271 = vsub.f32 %v1004, %v1270
        %1272 = vmatpush1.msra.mxu0 %v1271
        %1273 = vmatprep.subr.mxu0 0.0
        %v1274 = vand.u32 %v1005, 4294901760
        %v1275 = vsub.f32 %v1005, %v1274
        %1276 = vmatpush1.msra.mxu0 %v1275
        %1277 = vmatprep.subr.mxu0 0.0
        %v1278 = vand.u32 %v1006, 4294901760
        %v1279 = vsub.f32 %v1006, %v1278
        %1280 = vmatpush1.msra.mxu0 %v1279
        %1281 = vmatprep.subr.mxu0 0.0
        %v1282 = vand.u32 %v1007, 4294901760
        %v1283 = vsub.f32 %v1007, %v1282
        %1284 = vmatpush1.msra.mxu0 %v1283
        %1285 = vmatprep.subr.mxu0 0.0
        %v1286 = vand.u32 %v1008, 4294901760
        %v1287 = vsub.f32 %v1008, %v1286
        %1288 = vmatpush1.msra.mxu0 %v1287
        %1289 = vmatprep.subr.mxu0 0.0
        %v1290 = vand.u32 %v1009, 4294901760
        %v1291 = vsub.f32 %v1009, %v1290
        %1292 = vmatpush1.msra.mxu0 %v1291
        %1293 = vmatprep.subr.mxu0 0.0
        %v1294 = vand.u32 %v1010, 4294901760
        %v1295 = vsub.f32 %v1010, %v1294
        %1296 = vmatpush1.msra.mxu0 %v1295
        %1297 = vmatprep.subr.mxu0 0.0
        %v1298 = vand.u32 %v1011, 4294901760
        %v1299 = vsub.f32 %v1011, %v1298
        %1300 = vmatpush1.msra.mxu0 %v1299
        %1301 = vmatprep.subr.mxu0 0.0
        %v1302 = vand.u32 %v1012, 4294901760
        %v1303 = vsub.f32 %v1012, %v1302
        %1304 = vmatpush1.msra.mxu0 %v1303
        %1305 = vmatprep.subr.mxu0 0.0
        %v1306 = vand.u32 %v1013, 4294901760
        %v1307 = vsub.f32 %v1013, %v1306
        %1308 = vmatpush1.msra.mxu0 %v1307
        %1309 = vmatprep.subr.mxu0 0.0
        %v1310 = vand.u32 %v1014, 4294901760
        %v1311 = vsub.f32 %v1014, %v1310
        %1312 = vmatpush1.msra.mxu0 %v1311
        %1313 = vmatprep.subr.mxu0 0.0
        %v1314 = vand.u32 %v1015, 4294901760
        %v1315 = vsub.f32 %v1015, %v1314
        %1316 = vmatpush1.msra.mxu0 %v1315
        %1317 = vmatprep.subr.mxu0 0.0
        %v1318 = vand.u32 %v1016, 4294901760
        %v1319 = vsub.f32 %v1016, %v1318
        %1320 = vmatpush1.msra.mxu0 %v1319
        %1321 = vmatprep.subr.mxu0 0.0
        %v1322 = vand.u32 %v1017, 4294901760
        %v1323 = vsub.f32 %v1017, %v1322
        %1324 = vmatpush1.msra.mxu0 %v1323
        %1325 = vmatprep.subr.mxu0 0.0
        %v1326 = vand.u32 %v1018, 4294901760
        %v1327 = vsub.f32 %v1018, %v1326
        %1328 = vmatpush1.msra.mxu0 %v1327
        %1329 = vmatprep.subr.mxu0 0.0
        %v1330 = vand.u32 %v1019, 4294901760
        %v1331 = vsub.f32 %v1019, %v1330
        %1332 = vmatpush1.msra.mxu0 %v1331
        %1333 = vmatprep.subr.mxu0 0.0
        %1334 = vmatpush1.msra.mxu0 0.0
        %1335 = vmatprep.subr.mxu0 0.0
        %1336 = vmatpush1.msra.mxu0 0.0
        %1337 = vmatprep.subr.mxu0 0.0
        %1338 = vmatpush1.msra.mxu0 0.0
        %1339 = vmatprep.subr.mxu0 0.0
        %1340 = vmatpush1.msra.mxu0 0.0
        %1341 = vmatprep.subr.mxu0 0.0
        %1342 = vmatpush1.msra.mxu0 0.0
        %1343 = vmatprep.subr.mxu0 0.0
        %1344 = vmatpush1.msra.mxu0 0.0
        %1345 = vmatprep.subr.mxu0 0.0
        %1346 = vmatpush1.msra.mxu0 0.0
        %1347 = vmatprep.subr.mxu0 0.0
        %1348 = vmatpush1.msra.mxu0 0.0
        %1349 = vmatprep.subr.mxu0 0.0
        %1350 = vmatpush1.msra.mxu0 0.0
        %1351 = vmatprep.subr.mxu0 0.0
        %1352 = vmatpush1.msra.mxu0 0.0
        %1353 = vmatprep.subr.mxu0 0.0
        %1354 = vmatpush1.msra.mxu0 0.0
        %1355 = vmatprep.subr.mxu0 0.0
        %1356 = vmatpush1.msra.mxu0 0.0
        %1357 = vmatprep.subr.mxu0 0.0
        %1358 = vmatpush1.msra.mxu0 0.0
        %1359 = vmatprep.subr.mxu0 0.0
        %1360 = vmatpush1.msra.mxu0 0.0
        %1361 = vmatprep.subr.mxu0 0.0
        %1362 = vmatpush1.msra.mxu0 0.0
        %1363 = vmatprep.subr.mxu0 0.0
        %1364 = vmatpush1.msra.mxu0 0.0
        %1365 = vmatprep.mubr.f32.mxu0 0.0
        %v1366 = vand.u32 %v1003, 4294901760
        %v1367 = vsub.f32 %v1003, %v1366
        %1368 = vmatmul.mubr.f32.gmra.mrb[0].mxu0 %v1367
        %v1369 = vpop.f32.mrb[0].mxu0
        %v1370 = vadd.f32 %v1266, %v1369
        %v1371 = vpop.f32.mrb[0].mxu0
        %1372 = vdwg.mxu0
        %1373 = vmatprep.subr.mxu0 0.0
        %v1374 = vand.u32 %v1004, 4294901760
        %1375 = vmatpush1.msra.mxu0 %v1374
        %1376 = vmatprep.subr.mxu0 0.0
        %v1377 = vand.u32 %v1005, 4294901760
        %1378 = vmatpush1.msra.mxu0 %v1377
        %1379 = vmatprep.subr.mxu0 0.0
        %v1380 = vand.u32 %v1006, 4294901760
        %1381 = vmatpush1.msra.mxu0 %v1380
        %1382 = vmatprep.subr.mxu0 0.0
        %v1383 = vand.u32 %v1007, 4294901760
        %1384 = vmatpush1.msra.mxu0 %v1383
        %1385 = vmatprep.subr.mxu0 0.0
        %v1386 = vand.u32 %v1008, 4294901760
        %1387 = vmatpush1.msra.mxu0 %v1386
        %1388 = vmatprep.subr.mxu0 0.0
        %v1389 = vand.u32 %v1009, 4294901760
        %1390 = vmatpush1.msra.mxu0 %v1389
        %1391 = vmatprep.subr.mxu0 0.0
        %v1392 = vand.u32 %v1010, 4294901760
        %1393 = vmatpush1.msra.mxu0 %v1392
        %1394 = vmatprep.subr.mxu0 0.0
        %v1395 = vand.u32 %v1011, 4294901760
        %1396 = vmatpush1.msra.mxu0 %v1395
        %1397 = vmatprep.subr.mxu0 0.0
        %v1398 = vand.u32 %v1012, 4294901760
        %1399 = vmatpush1.msra.mxu0 %v1398
        %1400 = vmatprep.subr.mxu0 0.0
        %v1401 = vand.u32 %v1013, 4294901760
        %1402 = vmatpush1.msra.mxu0 %v1401
        %1403 = vmatprep.subr.mxu0 0.0
        %v1404 = vand.u32 %v1014, 4294901760
        %1405 = vmatpush1.msra.mxu0 %v1404
        %1406 = vmatprep.subr.mxu0 0.0
        %v1407 = vand.u32 %v1015, 4294901760
        %1408 = vmatpush1.msra.mxu0 %v1407
        %1409 = vmatprep.subr.mxu0 0.0
        %v1410 = vand.u32 %v1016, 4294901760
        %1411 = vmatpush1.msra.mxu0 %v1410
        %1412 = vmatprep.subr.mxu0 0.0
        %v1413 = vand.u32 %v1017, 4294901760
        %1414 = vmatpush1.msra.mxu0 %v1413
        %1415 = vmatprep.subr.mxu0 0.0
        %v1416 = vand.u32 %v1018, 4294901760
        %1417 = vmatpush1.msra.mxu0 %v1416
        %1418 = vmatprep.subr.mxu0 0.0
        %v1419 = vand.u32 %v1019, 4294901760
        %1420 = vmatpush1.msra.mxu0 %v1419
        %1421 = vmatprep.subr.mxu0 0.0
        %1422 = vmatpush1.msra.mxu0 0.0
        %1423 = vmatprep.subr.mxu0 0.0
        %1424 = vmatpush1.msra.mxu0 0.0
        %1425 = vmatprep.subr.mxu0 0.0
        %1426 = vmatpush1.msra.mxu0 0.0
        %1427 = vmatprep.subr.mxu0 0.0
        %1428 = vmatpush1.msra.mxu0 0.0
        %1429 = vmatprep.subr.mxu0 0.0
        %1430 = vmatpush1.msra.mxu0 0.0
        %1431 = vmatprep.subr.mxu0 0.0
        %1432 = vmatpush1.msra.mxu0 0.0
        %1433 = vmatprep.subr.mxu0 0.0
        %1434 = vmatpush1.msra.mxu0 0.0
        %1435 = vmatprep.subr.mxu0 0.0
        %1436 = vmatpush1.msra.mxu0 0.0
        %1437 = vmatprep.subr.mxu0 0.0
        %1438 = vmatpush1.msra.mxu0 0.0
        %1439 = vmatprep.subr.mxu0 0.0
        %1440 = vmatpush1.msra.mxu0 0.0
        %1441 = vmatprep.subr.mxu0 0.0
        %1442 = vmatpush1.msra.mxu0 0.0
        %1443 = vmatprep.subr.mxu0 0.0
        %1444 = vmatpush1.msra.mxu0 0.0
        %1445 = vmatprep.subr.mxu0 0.0
        %1446 = vmatpush1.msra.mxu0 0.0
        %1447 = vmatprep.subr.mxu0 0.0
        %1448 = vmatpush1.msra.mxu0 0.0
        %1449 = vmatprep.subr.mxu0 0.0
        %1450 = vmatpush1.msra.mxu0 0.0
        %1451 = vmatprep.subr.mxu0 0.0
        %1452 = vmatpush1.msra.mxu0 0.0
        %1453 = vmatprep.mubr.f32.mxu0 0.0
        %v1454 = vand.u32 %v1003, 4294901760
        %v1455 = vsub.f32 %v1003, %v1454
        %v1456 = vand.u32 %v1455, 4294901760
        %1457 = vmatmul.mubr.f32.gmra.mrb[0].mxu0 %v1456
        %v1458 = vpop.f32.mrb[0].mxu0
        %v1459 = vadd.f32 %v1370, %v1458
        %v1460 = vpop.f32.mrb[0].mxu0
        %1461 = vdwg.mxu0
        %1462 = vmatprep.subr.mxu0 0.0
        %v1463 = vand.u32 %v1004, 4294901760
        %v1464 = vsub.f32 %v1004, %v1463
        %v1465 = vand.u32 %v1464, 4294901760
        %1466 = vmatpush1.msra.mxu0 %v1465
        %1467 = vmatprep.subr.mxu0 0.0
        %v1468 = vand.u32 %v1005, 4294901760
        %v1469 = vsub.f32 %v1005, %v1468
        %v1470 = vand.u32 %v1469, 4294901760
        %1471 = vmatpush1.msra.mxu0 %v1470
        %1472 = vmatprep.subr.mxu0 0.0
        %v1473 = vand.u32 %v1006, 4294901760
        %v1474 = vsub.f32 %v1006, %v1473
        %v1475 = vand.u32 %v1474, 4294901760
        %1476 = vmatpush1.msra.mxu0 %v1475
        %1477 = vmatprep.subr.mxu0 0.0
        %v1478 = vand.u32 %v1007, 4294901760
        %v1479 = vsub.f32 %v1007, %v1478
        %v1480 = vand.u32 %v1479, 4294901760
        %1481 = vmatpush1.msra.mxu0 %v1480
        %1482 = vmatprep.subr.mxu0 0.0
        %v1483 = vand.u32 %v1008, 4294901760
        %v1484 = vsub.f32 %v1008, %v1483
        %v1485 = vand.u32 %v1484, 4294901760
        %1486 = vmatpush1.msra.mxu0 %v1485
        %1487 = vmatprep.subr.mxu0 0.0
        %v1488 = vand.u32 %v1009, 4294901760
        %v1489 = vsub.f32 %v1009, %v1488
        %v1490 = vand.u32 %v1489, 4294901760
        %1491 = vmatpush1.msra.mxu0 %v1490
        %1492 = vmatprep.subr.mxu0 0.0
        %v1493 = vand.u32 %v1010, 4294901760
        %v1494 = vsub.f32 %v1010, %v1493
        %v1495 = vand.u32 %v1494, 4294901760
        %1496 = vmatpush1.msra.mxu0 %v1495
        %1497 = vmatprep.subr.mxu0 0.0
        %v1498 = vand.u32 %v1011, 4294901760
        %v1499 = vsub.f32 %v1011, %v1498
        %v1500 = vand.u32 %v1499, 4294901760
        %1501 = vmatpush1.msra.mxu0 %v1500
        %1502 = vmatprep.subr.mxu0 0.0
        %v1503 = vand.u32 %v1012, 4294901760
        %v1504 = vsub.f32 %v1012, %v1503
        %v1505 = vand.u32 %v1504, 4294901760
        %1506 = vmatpush1.msra.mxu0 %v1505
        %1507 = vmatprep.subr.mxu0 0.0
        %v1508 = vand.u32 %v1013, 4294901760
        %v1509 = vsub.f32 %v1013, %v1508
        %v1510 = vand.u32 %v1509, 4294901760
        %1511 = vmatpush1.msra.mxu0 %v1510
        %1512 = vmatprep.subr.mxu0 0.0
        %v1513 = vand.u32 %v1014, 4294901760
        %v1514 = vsub.f32 %v1014, %v1513
        %v1515 = vand.u32 %v1514, 4294901760
        %1516 = vmatpush1.msra.mxu0 %v1515
        %1517 = vmatprep.subr.mxu0 0.0
        %v1518 = vand.u32 %v1015, 4294901760
        %v1519 = vsub.f32 %v1015, %v1518
        %v1520 = vand.u32 %v1519, 4294901760
        %1521 = vmatpush1.msra.mxu0 %v1520
        %1522 = vmatprep.subr.mxu0 0.0
        %v1523 = vand.u32 %v1016, 4294901760
        %v1524 = vsub.f32 %v1016, %v1523
        %v1525 = vand.u32 %v1524, 4294901760
        %1526 = vmatpush1.msra.mxu0 %v1525
        %1527 = vmatprep.subr.mxu0 0.0
        %v1528 = vand.u32 %v1017, 4294901760
        %v1529 = vsub.f32 %v1017, %v1528
        %v1530 = vand.u32 %v1529, 4294901760
        %1531 = vmatpush1.msra.mxu0 %v1530
        %1532 = vmatprep.subr.mxu0 0.0
        %v1533 = vand.u32 %v1018, 4294901760
        %v1534 = vsub.f32 %v1018, %v1533
        %v1535 = vand.u32 %v1534, 4294901760
        %1536 = vmatpush1.msra.mxu0 %v1535
        %1537 = vmatprep.subr.mxu0 0.0
        %v1538 = vand.u32 %v1019, 4294901760
        %v1539 = vsub.f32 %v1019, %v1538
        %v1540 = vand.u32 %v1539, 4294901760
        %1541 = vmatpush1.msra.mxu0 %v1540
        %1542 = vmatprep.subr.mxu0 0.0
        %1543 = vmatpush1.msra.mxu0 0.0
        %1544 = vmatprep.subr.mxu0 0.0
        %1545 = vmatpush1.msra.mxu0 0.0
        %1546 = vmatprep.subr.mxu0 0.0
        %1547 = vmatpush1.msra.mxu0 0.0
        %1548 = vmatprep.subr.mxu0 0.0
        %1549 = vmatpush1.msra.mxu0 0.0
        %1550 = vmatprep.subr.mxu0 0.0
        %1551 = vmatpush1.msra.mxu0 0.0
        %1552 = vmatprep.subr.mxu0 0.0
        %1553 = vmatpush1.msra.mxu0 0.0
        %1554 = vmatprep.subr.mxu0 0.0
        %1555 = vmatpush1.msra.mxu0 0.0
        %1556 = vmatprep.subr.mxu0 0.0
        %1557 = vmatpush1.msra.mxu0 0.0
        %1558 = vmatprep.subr.mxu0 0.0
        %1559 = vmatpush1.msra.mxu0 0.0
        %1560 = vmatprep.subr.mxu0 0.0
        %1561 = vmatpush1.msra.mxu0 0.0
        %1562 = vmatprep.subr.mxu0 0.0
        %1563 = vmatpush1.msra.mxu0 0.0
        %1564 = vmatprep.subr.mxu0 0.0
        %1565 = vmatpush1.msra.mxu0 0.0
        %1566 = vmatprep.subr.mxu0 0.0
        %1567 = vmatpush1.msra.mxu0 0.0
        %1568 = vmatprep.subr.mxu0 0.0
        %1569 = vmatpush1.msra.mxu0 0.0
        %1570 = vmatprep.subr.mxu0 0.0
        %1571 = vmatpush1.msra.mxu0 0.0
        %1572 = vmatprep.subr.mxu0 0.0
        %1573 = vmatpush1.msra.mxu0 0.0
        %1574 = vmatprep.mubr.f32.mxu0 0.0
        %v1575 = vand.u32 %v1003, 4294901760
        %1576 = vmatmul.mubr.f32.gmra.mrb[0].mxu0 %v1575
        %v1577 = vpop.f32.mrb[0].mxu0
        %v1578 = vadd.f32 %v1459, %v1577
        %v1579 = vpop.f32.mrb[0].mxu0
        %1580 = vdwg.mxu0
        %1581 = vmatprep.subr.mxu0 0.0
        %v1582 = vand.u32 %v1004, 4294901760
        %1583 = vmatpush1.msra.mxu0 %v1582
        %1584 = vmatprep.subr.mxu0 0.0
        %v1585 = vand.u32 %v1005, 4294901760
        %1586 = vmatpush1.msra.mxu0 %v1585
        %1587 = vmatprep.subr.mxu0 0.0
        %v1588 = vand.u32 %v1006, 4294901760
        %1589 = vmatpush1.msra.mxu0 %v1588
        %1590 = vmatprep.subr.mxu0 0.0
        %v1591 = vand.u32 %v1007, 4294901760
        %1592 = vmatpush1.msra.mxu0 %v1591
        %1593 = vmatprep.subr.mxu0 0.0
        %v1594 = vand.u32 %v1008, 4294901760
        %1595 = vmatpush1.msra.mxu0 %v1594
        %1596 = vmatprep.subr.mxu0 0.0
        %v1597 = vand.u32 %v1009, 4294901760
        %1598 = vmatpush1.msra.mxu0 %v1597
        %1599 = vmatprep.subr.mxu0 0.0
        %v1600 = vand.u32 %v1010, 4294901760
        %1601 = vmatpush1.msra.mxu0 %v1600
        %1602 = vmatprep.subr.mxu0 0.0
        %v1603 = vand.u32 %v1011, 4294901760
        %1604 = vmatpush1.msra.mxu0 %v1603
        %1605 = vmatprep.subr.mxu0 0.0
        %v1606 = vand.u32 %v1012, 4294901760
        %1607 = vmatpush1.msra.mxu0 %v1606
        %1608 = vmatprep.subr.mxu0 0.0
        %v1609 = vand.u32 %v1013, 4294901760
        %1610 = vmatpush1.msra.mxu0 %v1609
        %1611 = vmatprep.subr.mxu0 0.0
        %v1612 = vand.u32 %v1014, 4294901760
        %1613 = vmatpush1.msra.mxu0 %v1612
        %1614 = vmatprep.subr.mxu0 0.0
        %v1615 = vand.u32 %v1015, 4294901760
        %1616 = vmatpush1.msra.mxu0 %v1615
        %1617 = vmatprep.subr.mxu0 0.0
        %v1618 = vand.u32 %v1016, 4294901760
        %1619 = vmatpush1.msra.mxu0 %v1618
        %1620 = vmatprep.subr.mxu0 0.0
        %v1621 = vand.u32 %v1017, 4294901760
        %1622 = vmatpush1.msra.mxu0 %v1621
        %1623 = vmatprep.subr.mxu0 0.0
        %v1624 = vand.u32 %v1018, 4294901760
        %1625 = vmatpush1.msra.mxu0 %v1624
        %1626 = vmatprep.subr.mxu0 0.0
        %v1627 = vand.u32 %v1019, 4294901760
        %1628 = vmatpush1.msra.mxu0 %v1627
        %1629 = vmatprep.subr.mxu0 0.0
        %1630 = vmatpush1.msra.mxu0 0.0
        %1631 = vmatprep.subr.mxu0 0.0
        %1632 = vmatpush1.msra.mxu0 0.0
        %1633 = vmatprep.subr.mxu0 0.0
        %1634 = vmatpush1.msra.mxu0 0.0
        %1635 = vmatprep.subr.mxu0 0.0
        %1636 = vmatpush1.msra.mxu0 0.0
        %1637 = vmatprep.subr.mxu0 0.0
        %1638 = vmatpush1.msra.mxu0 0.0
        %1639 = vmatprep.subr.mxu0 0.0
        %1640 = vmatpush1.msra.mxu0 0.0
        %1641 = vmatprep.subr.mxu0 0.0
        %1642 = vmatpush1.msra.mxu0 0.0
        %1643 = vmatprep.subr.mxu0 0.0
        %1644 = vmatpush1.msra.mxu0 0.0
        %1645 = vmatprep.subr.mxu0 0.0
        %1646 = vmatpush1.msra.mxu0 0.0
        %1647 = vmatprep.subr.mxu0 0.0
        %1648 = vmatpush1.msra.mxu0 0.0
        %1649 = vmatprep.subr.mxu0 0.0
        %1650 = vmatpush1.msra.mxu0 0.0
        %1651 = vmatprep.subr.mxu0 0.0
        %1652 = vmatpush1.msra.mxu0 0.0
        %1653 = vmatprep.subr.mxu0 0.0
        %1654 = vmatpush1.msra.mxu0 0.0
        %1655 = vmatprep.subr.mxu0 0.0
        %1656 = vmatpush1.msra.mxu0 0.0
        %1657 = vmatprep.subr.mxu0 0.0
        %1658 = vmatpush1.msra.mxu0 0.0
        %1659 = vmatprep.subr.mxu0 0.0
        %1660 = vmatpush1.msra.mxu0 0.0
        %1661 = vmatprep.mubr.f32.mxu0 0.0
        %v1662 = vand.u32 %v1003, 4294901760
        %1663 = vmatmul.mubr.f32.gmra.mrb[0].mxu0 %v1662
        %v1664 = vpop.f32.mrb[0].mxu0
        %v1665 = vadd.f32 %v1578, %v1664
        %v1666 = vpop.f32.mrb[0].mxu0
        %1667 = vdwg.mxu0
        %v1668 = vmax.f32 %v1665, 0.0
        %v1669 = vld [vmem:[#allocation8] sm:$0xff]
        %v1670 = vld [vmem:[#allocation8 + $0x8] sm:$0xff]
        %v1671 = vld [vmem:[#allocation8 + $0x10] sm:$0xff]
        %v1672 = vld [vmem:[#allocation8 + $0x18] sm:$0xff]
        %v1673 = vld [vmem:[#allocation8 + $0x20] sm:$0xff]
        %v1674 = vld [vmem:[#allocation8 + $0x28] sm:$0xff]
        %v1675 = vld [vmem:[#allocation8 + $0x30] sm:$0xff]
        %v1676 = vld [vmem:[#allocation8 + $0x38] sm:$0xff]
        %v1677 = vld [vmem:[#allocation8 + $0x40] sm:$0xff]
        %v1678 = vld [vmem:[#allocation8 + $0x48] sm:$0xff]
        %v1679 = vld [vmem:[#allocation8 + $0x50] sm:$0xff]
        %v1680 = vld [vmem:[#allocation8 + $0x58] sm:$0xff]
        %v1681 = vld [vmem:[#allocation8 + $0x60] sm:$0xff]
        %v1682 = vld [vmem:[#allocation8 + $0x68] sm:$0xff]
        %v1683 = vld [vmem:[#allocation8 + $0x70] sm:$0xff]
        %v1684 = vld [vmem:[#allocation8 + $0x78] sm:$0xff]
        %v1685 = vld [vmem:[%s6] sm:$0x1]
        %v1687 = vlaneseq
        %v1688 = vshrl.u32 %v1687, 7
        %v1689 = vsub.s32 0, %v1688
        %v1690 = vrot.slane %v1685, %v1689
        %1692 = vmatprep.subr.mxu0 0.0
        %v1693 = vand.u32 %v1669, 4294901760
        %1694 = vmatpush1.msra.mxu0 %v1693
        %1695 = vmatprep.subr.mxu0 0.0
        %v1696 = vand.u32 %v1670, 4294901760
        %1697 = vmatpush1.msra.mxu0 %v1696
        %1698 = vmatprep.subr.mxu0 0.0
        %v1699 = vand.u32 %v1671, 4294901760
        %1700 = vmatpush1.msra.mxu0 %v1699
        %1701 = vmatprep.subr.mxu0 0.0
        %v1702 = vand.u32 %v1672, 4294901760
        %1703 = vmatpush1.msra.mxu0 %v1702
        %1704 = vmatprep.subr.mxu0 0.0
        %v1705 = vand.u32 %v1673, 4294901760
        %1706 = vmatpush1.msra.mxu0 %v1705
        %1707 = vmatprep.subr.mxu0 0.0
        %v1708 = vand.u32 %v1674, 4294901760
        %1709 = vmatpush1.msra.mxu0 %v1708
        %1710 = vmatprep.subr.mxu0 0.0
        %v1711 = vand.u32 %v1675, 4294901760
        %1712 = vmatpush1.msra.mxu0 %v1711
        %1713 = vmatprep.subr.mxu0 0.0
        %v1714 = vand.u32 %v1676, 4294901760
        %1715 = vmatpush1.msra.mxu0 %v1714
        %1716 = vmatprep.subr.mxu0 0.0
        %v1717 = vand.u32 %v1677, 4294901760
        %1718 = vmatpush1.msra.mxu0 %v1717
        %1719 = vmatprep.subr.mxu0 0.0
        %v1720 = vand.u32 %v1678, 4294901760
        %1721 = vmatpush1.msra.mxu0 %v1720
        %1722 = vmatprep.subr.mxu0 0.0
        %v1723 = vand.u32 %v1679, 4294901760
        %1724 = vmatpush1.msra.mxu0 %v1723
        %1725 = vmatprep.subr.mxu0 0.0
        %v1726 = vand.u32 %v1680, 4294901760
        %1727 = vmatpush1.msra.mxu0 %v1726
        %1728 = vmatprep.subr.mxu0 0.0
        %v1729 = vand.u32 %v1681, 4294901760
        %1730 = vmatpush1.msra.mxu0 %v1729
        %1731 = vmatprep.subr.mxu0 0.0
        %v1732 = vand.u32 %v1682, 4294901760
        %1733 = vmatpush1.msra.mxu0 %v1732
        %1734 = vmatprep.subr.mxu0 0.0
        %v1735 = vand.u32 %v1683, 4294901760
        %1736 = vmatpush1.msra.mxu0 %v1735
        %1737 = vmatprep.subr.mxu0 0.0
        %v1738 = vand.u32 %v1684, 4294901760
        %1739 = vmatpush1.msra.mxu0 %v1738
        %1740 = vmatprep.subr.mxu0 0.0
        %1741 = vmatpush1.msra.mxu0 0.0
        %1742 = vmatprep.subr.mxu0 0.0
        %1743 = vmatpush1.msra.mxu0 0.0
        %1744 = vmatprep.subr.mxu0 0.0
        %1745 = vmatpush1.msra.mxu0 0.0
        %1746 = vmatprep.subr.mxu0 0.0
        %1747 = vmatpush1.msra.mxu0 0.0
        %1748 = vmatprep.subr.mxu0 0.0
        %1749 = vmatpush1.msra.mxu0 0.0
        %1750 = vmatprep.subr.mxu0 0.0
        %1751 = vmatpush1.msra.mxu0 0.0
        %1752 = vmatprep.subr.mxu0 0.0
        %1753 = vmatpush1.msra.mxu0 0.0
        %1754 = vmatprep.subr.mxu0 0.0
        %1755 = vmatpush1.msra.mxu0 0.0
        %1756 = vmatprep.subr.mxu0 0.0
        %1757 = vmatpush1.msra.mxu0 0.0
        %1758 = vmatprep.subr.mxu0 0.0
        %1759 = vmatpush1.msra.mxu0 0.0
        %1760 = vmatprep.subr.mxu0 0.0
        %1761 = vmatpush1.msra.mxu0 0.0
        %1762 = vmatprep.subr.mxu0 0.0
        %1763 = vmatpush1.msra.mxu0 0.0
        %1764 = vmatprep.subr.mxu0 0.0
        %1765 = vmatpush1.msra.mxu0 0.0
        %1766 = vmatprep.subr.mxu0 0.0
        %1767 = vmatpush1.msra.mxu0 0.0
        %1768 = vmatprep.subr.mxu0 0.0
        %1769 = vmatpush1.msra.mxu0 0.0
        %1770 = vmatprep.subr.mxu0 0.0
        %1771 = vmatpush1.msra.mxu0 0.0
        %1772 = vmatprep.mubr.f32.mxu0 0.0
        %v1773 = vand.u32 %v1668, 4294901760
        %v1774 = vsub.f32 %v1668, %v1773
        %v1775 = vand.u32 %v1774, 4294901760
        %v1776 = vsub.f32 %v1774, %v1775
        %v1777 = vand.u32 %v1776, 4294901760
        %1778 = vmatmul.mubr.f32.gmra.mrb[0].mxu0 %v1777
        %v1779 = vpop.f32.mrb[0].mxu0
        %v1780 = vadd.f32 %v1690, %v1779
        %v1781 = vpop.f32.mrb[0].mxu0
        %1782 = vdwg.mxu0
        %1783 = vmatprep.subr.mxu0 0.0
        %v1784 = vand.u32 %v1669, 4294901760
        %v1785 = vsub.f32 %v1669, %v1784
        %v1786 = vand.u32 %v1785, 4294901760
        %v1787 = vsub.f32 %v1785, %v1786
        %v1788 = vand.u32 %v1787, 4294901760
        %1789 = vmatpush1.msra.mxu0 %v1788
        %1790 = vmatprep.subr.mxu0 0.0
        %v1791 = vand.u32 %v1670, 4294901760
        %v1792 = vsub.f32 %v1670, %v1791
        %v1793 = vand.u32 %v1792, 4294901760
        %v1794 = vsub.f32 %v1792, %v1793
        %v1795 = vand.u32 %v1794, 4294901760
        %1796 = vmatpush1.msra.mxu0 %v1795
        %1797 = vmatprep.subr.mxu0 0.0
        %v1798 = vand.u32 %v1671, 4294901760
        %v1799 = vsub.f32 %v1671, %v1798
        %v1800 = vand.u32 %v1799, 4294901760
        %v1801 = vsub.f32 %v1799, %v1800
        %v1802 = vand.u32 %v1801, 4294901760
        %1803 = vmatpush1.msra.mxu0 %v1802
        %1804 = vmatprep.subr.mxu0 0.0
        %v1805 = vand.u32 %v1672, 4294901760
        %v1806 = vsub.f32 %v1672, %v1805
        %v1807 = vand.u32 %v1806, 4294901760
        %v1808 = vsub.f32 %v1806, %v1807
        %v1809 = vand.u32 %v1808, 4294901760
        %1810 = vmatpush1.msra.mxu0 %v1809
        %1811 = vmatprep.subr.mxu0 0.0
        %v1812 = vand.u32 %v1673, 4294901760
        %v1813 = vsub.f32 %v1673, %v1812
        %v1814 = vand.u32 %v1813, 4294901760
        %v1815 = vsub.f32 %v1813, %v1814
        %v1816 = vand.u32 %v1815, 4294901760
        %1817 = vmatpush1.msra.mxu0 %v1816
        %1818 = vmatprep.subr.mxu0 0.0
        %v1819 = vand.u32 %v1674, 4294901760
        %v1820 = vsub.f32 %v1674, %v1819
        %v1821 = vand.u32 %v1820, 4294901760
        %v1822 = vsub.f32 %v1820, %v1821
        %v1823 = vand.u32 %v1822, 4294901760
        %1824 = vmatpush1.msra.mxu0 %v1823
        %1825 = vmatprep.subr.mxu0 0.0
        %v1826 = vand.u32 %v1675, 4294901760
        %v1827 = vsub.f32 %v1675, %v1826
        %v1828 = vand.u32 %v1827, 4294901760
        %v1829 = vsub.f32 %v1827, %v1828
        %v1830 = vand.u32 %v1829, 4294901760
        %1831 = vmatpush1.msra.mxu0 %v1830
        %1832 = vmatprep.subr.mxu0 0.0
        %v1833 = vand.u32 %v1676, 4294901760
        %v1834 = vsub.f32 %v1676, %v1833
        %v1835 = vand.u32 %v1834, 4294901760
        %v1836 = vsub.f32 %v1834, %v1835
        %v1837 = vand.u32 %v1836, 4294901760
        %1838 = vmatpush1.msra.mxu0 %v1837
        %1839 = vmatprep.subr.mxu0 0.0
        %v1840 = vand.u32 %v1677, 4294901760
        %v1841 = vsub.f32 %v1677, %v1840
        %v1842 = vand.u32 %v1841, 4294901760
        %v1843 = vsub.f32 %v1841, %v1842
        %v1844 = vand.u32 %v1843, 4294901760
        %1845 = vmatpush1.msra.mxu0 %v1844
        %1846 = vmatprep.subr.mxu0 0.0
        %v1847 = vand.u32 %v1678, 4294901760
        %v1848 = vsub.f32 %v1678, %v1847
        %v1849 = vand.u32 %v1848, 4294901760
        %v1850 = vsub.f32 %v1848, %v1849
        %v1851 = vand.u32 %v1850, 4294901760
        %1852 = vmatpush1.msra.mxu0 %v1851
        %1853 = vmatprep.subr.mxu0 0.0
        %v1854 = vand.u32 %v1679, 4294901760
        %v1855 = vsub.f32 %v1679, %v1854
        %v1856 = vand.u32 %v1855, 4294901760
        %v1857 = vsub.f32 %v1855, %v1856
        %v1858 = vand.u32 %v1857, 4294901760
        %1859 = vmatpush1.msra.mxu0 %v1858
        %1860 = vmatprep.subr.mxu0 0.0
        %v1861 = vand.u32 %v1680, 4294901760
        %v1862 = vsub.f32 %v1680, %v1861
        %v1863 = vand.u32 %v1862, 4294901760
        %v1864 = vsub.f32 %v1862, %v1863
        %v1865 = vand.u32 %v1864, 4294901760
        %1866 = vmatpush1.msra.mxu0 %v1865
        %1867 = vmatprep.subr.mxu0 0.0
        %v1868 = vand.u32 %v1681, 4294901760
        %v1869 = vsub.f32 %v1681, %v1868
        %v1870 = vand.u32 %v1869, 4294901760
        %v1871 = vsub.f32 %v1869, %v1870
        %v1872 = vand.u32 %v1871, 4294901760
        %1873 = vmatpush1.msra.mxu0 %v1872
        %1874 = vmatprep.subr.mxu0 0.0
        %v1875 = vand.u32 %v1682, 4294901760
        %v1876 = vsub.f32 %v1682, %v1875
        %v1877 = vand.u32 %v1876, 4294901760
        %v1878 = vsub.f32 %v1876, %v1877
        %v1879 = vand.u32 %v1878, 4294901760
        %1880 = vmatpush1.msra.mxu0 %v1879
        %1881 = vmatprep.subr.mxu0 0.0
        %v1882 = vand.u32 %v1683, 4294901760
        %v1883 = vsub.f32 %v1683, %v1882
        %v1884 = vand.u32 %v1883, 4294901760
        %v1885 = vsub.f32 %v1883, %v1884
        %v1886 = vand.u32 %v1885, 4294901760
        %1887 = vmatpush1.msra.mxu0 %v1886
        %1888 = vmatprep.subr.mxu0 0.0
        %v1889 = vand.u32 %v1684, 4294901760
        %v1890 = vsub.f32 %v1684, %v1889
        %v1891 = vand.u32 %v1890, 4294901760
        %v1892 = vsub.f32 %v1890, %v1891
        %v1893 = vand.u32 %v1892, 4294901760
        %1894 = vmatpush1.msra.mxu0 %v1893
        %1895 = vmatprep.subr.mxu0 0.0
        %1896 = vmatpush1.msra.mxu0 0.0
        %1897 = vmatprep.subr.mxu0 0.0
        %1898 = vmatpush1.msra.mxu0 0.0
        %1899 = vmatprep.subr.mxu0 0.0
        %1900 = vmatpush1.msra.mxu0 0.0
        %1901 = vmatprep.subr.mxu0 0.0
        %1902 = vmatpush1.msra.mxu0 0.0
        %1903 = vmatprep.subr.mxu0 0.0
        %1904 = vmatpush1.msra.mxu0 0.0
        %1905 = vmatprep.subr.mxu0 0.0
        %1906 = vmatpush1.msra.mxu0 0.0
        %1907 = vmatprep.subr.mxu0 0.0
        %1908 = vmatpush1.msra.mxu0 0.0
        %1909 = vmatprep.subr.mxu0 0.0
        %1910 = vmatpush1.msra.mxu0 0.0
        %1911 = vmatprep.subr.mxu0 0.0
        %1912 = vmatpush1.msra.mxu0 0.0
        %1913 = vmatprep.subr.mxu0 0.0
        %1914 = vmatpush1.msra.mxu0 0.0
        %1915 = vmatprep.subr.mxu0 0.0
        %1916 = vmatpush1.msra.mxu0 0.0
        %1917 = vmatprep.subr.mxu0 0.0
        %1918 = vmatpush1.msra.mxu0 0.0
        %1919 = vmatprep.subr.mxu0 0.0
        %1920 = vmatpush1.msra.mxu0 0.0
        %1921 = vmatprep.subr.mxu0 0.0
        %1922 = vmatpush1.msra.mxu0 0.0
        %1923 = vmatprep.subr.mxu0 0.0
        %1924 = vmatpush1.msra.mxu0 0.0
        %1925 = vmatprep.subr.mxu0 0.0
        %1926 = vmatpush1.msra.mxu0 0.0
        %1927 = vmatprep.mubr.f32.mxu0 0.0
        %v1928 = vand.u32 %v1668, 4294901760
        %1929 = vmatmul.mubr.f32.gmra.mrb[0].mxu0 %v1928
        %v1930 = vpop.f32.mrb[0].mxu0
        %v1931 = vadd.f32 %v1780, %v1930
        %v1932 = vpop.f32.mrb[0].mxu0
        %1933 = vdwg.mxu0
        %1934 = vmatprep.subr.mxu0 0.0
        %v1935 = vand.u32 %v1669, 4294901760
        %v1936 = vsub.f32 %v1669, %v1935
        %1937 = vmatpush1.msra.mxu0 %v1936
        %1938 = vmatprep.subr.mxu0 0.0
        %v1939 = vand.u32 %v1670, 4294901760
        %v1940 = vsub.f32 %v1670, %v1939
        %1941 = vmatpush1.msra.mxu0 %v1940
        %1942 = vmatprep.subr.mxu0 0.0
        %v1943 = vand.u32 %v1671, 4294901760
        %v1944 = vsub.f32 %v1671, %v1943
        %1945 = vmatpush1.msra.mxu0 %v1944
        %1946 = vmatprep.subr.mxu0 0.0
        %v1947 = vand.u32 %v1672, 4294901760
        %v1948 = vsub.f32 %v1672, %v1947
        %1949 = vmatpush1.msra.mxu0 %v1948
        %1950 = vmatprep.subr.mxu0 0.0
        %v1951 = vand.u32 %v1673, 4294901760
        %v1952 = vsub.f32 %v1673, %v1951
        %1953 = vmatpush1.msra.mxu0 %v1952
        %1954 = vmatprep.subr.mxu0 0.0
        %v1955 = vand.u32 %v1674, 4294901760
        %v1956 = vsub.f32 %v1674, %v1955
        %1957 = vmatpush1.msra.mxu0 %v1956
        %1958 = vmatprep.subr.mxu0 0.0
        %v1959 = vand.u32 %v1675, 4294901760
        %v1960 = vsub.f32 %v1675, %v1959
        %1961 = vmatpush1.msra.mxu0 %v1960
        %1962 = vmatprep.subr.mxu0 0.0
        %v1963 = vand.u32 %v1676, 4294901760
        %v1964 = vsub.f32 %v1676, %v1963
        %1965 = vmatpush1.msra.mxu0 %v1964
        %1966 = vmatprep.subr.mxu0 0.0
        %v1967 = vand.u32 %v1677, 4294901760
        %v1968 = vsub.f32 %v1677, %v1967
        %1969 = vmatpush1.msra.mxu0 %v1968
        %1970 = vmatprep.subr.mxu0 0.0
        %v1971 = vand.u32 %v1678, 4294901760
        %v1972 = vsub.f32 %v1678, %v1971
        %1973 = vmatpush1.msra.mxu0 %v1972
        %1974 = vmatprep.subr.mxu0 0.0
        %v1975 = vand.u32 %v1679, 4294901760
        %v1976 = vsub.f32 %v1679, %v1975
        %1977 = vmatpush1.msra.mxu0 %v1976
        %1978 = vmatprep.subr.mxu0 0.0
        %v1979 = vand.u32 %v1680, 4294901760
        %v1980 = vsub.f32 %v1680, %v1979
        %1981 = vmatpush1.msra.mxu0 %v1980
        %1982 = vmatprep.subr.mxu0 0.0
        %v1983 = vand.u32 %v1681, 4294901760
        %v1984 = vsub.f32 %v1681, %v1983
        %1985 = vmatpush1.msra.mxu0 %v1984
        %1986 = vmatprep.subr.mxu0 0.0
        %v1987 = vand.u32 %v1682, 4294901760
        %v1988 = vsub.f32 %v1682, %v1987
        %1989 = vmatpush1.msra.mxu0 %v1988
        %1990 = vmatprep.subr.mxu0 0.0
        %v1991 = vand.u32 %v1683, 4294901760
        %v1992 = vsub.f32 %v1683, %v1991
        %1993 = vmatpush1.msra.mxu0 %v1992
        %1994 = vmatprep.subr.mxu0 0.0
        %v1995 = vand.u32 %v1684, 4294901760
        %v1996 = vsub.f32 %v1684, %v1995
        %1997 = vmatpush1.msra.mxu0 %v1996
        %1998 = vmatprep.subr.mxu0 0.0
        %1999 = vmatpush1.msra.mxu0 0.0
        %2000 = vmatprep.subr.mxu0 0.0
        %2001 = vmatpush1.msra.mxu0 0.0
        %2002 = vmatprep.subr.mxu0 0.0
        %2003 = vmatpush1.msra.mxu0 0.0
        %2004 = vmatprep.subr.mxu0 0.0
        %2005 = vmatpush1.msra.mxu0 0.0
        %2006 = vmatprep.subr.mxu0 0.0
        %2007 = vmatpush1.msra.mxu0 0.0
        %2008 = vmatprep.subr.mxu0 0.0
        %2009 = vmatpush1.msra.mxu0 0.0
        %2010 = vmatprep.subr.mxu0 0.0
        %2011 = vmatpush1.msra.mxu0 0.0
        %2012 = vmatprep.subr.mxu0 0.0
        %2013 = vmatpush1.msra.mxu0 0.0
        %2014 = vmatprep.subr.mxu0 0.0
        %2015 = vmatpush1.msra.mxu0 0.0
        %2016 = vmatprep.subr.mxu0 0.0
        %2017 = vmatpush1.msra.mxu0 0.0
        %2018 = vmatprep.subr.mxu0 0.0
        %2019 = vmatpush1.msra.mxu0 0.0
        %2020 = vmatprep.subr.mxu0 0.0
        %2021 = vmatpush1.msra.mxu0 0.0
        %2022 = vmatprep.subr.mxu0 0.0
        %2023 = vmatpush1.msra.mxu0 0.0
        %2024 = vmatprep.subr.mxu0 0.0
        %2025 = vmatpush1.msra.mxu0 0.0
        %2026 = vmatprep.subr.mxu0 0.0
        %2027 = vmatpush1.msra.mxu0 0.0
        %2028 = vmatprep.subr.mxu0 0.0
        %2029 = vmatpush1.msra.mxu0 0.0
        %2030 = vmatprep.mubr.f32.mxu0 0.0
        %v2031 = vand.u32 %v1668, 4294901760
        %v2032 = vsub.f32 %v1668, %v2031
        %2033 = vmatmul.mubr.f32.gmra.mrb[0].mxu0 %v2032
        %v2034 = vpop.f32.mrb[0].mxu0
        %v2035 = vadd.f32 %v1931, %v2034
        %v2036 = vpop.f32.mrb[0].mxu0
        %2037 = vdwg.mxu0
        %2038 = vmatprep.subr.mxu0 0.0
        %v2039 = vand.u32 %v1669, 4294901760
        %2040 = vmatpush1.msra.mxu0 %v2039
        %2041 = vmatprep.subr.mxu0 0.0
        %v2042 = vand.u32 %v1670, 4294901760
        %2043 = vmatpush1.msra.mxu0 %v2042
        %2044 = vmatprep.subr.mxu0 0.0
        %v2045 = vand.u32 %v1671, 4294901760
        %2046 = vmatpush1.msra.mxu0 %v2045
        %2047 = vmatprep.subr.mxu0 0.0
        %v2048 = vand.u32 %v1672, 4294901760
        %2049 = vmatpush1.msra.mxu0 %v2048
        %2050 = vmatprep.subr.mxu0 0.0
        %v2051 = vand.u32 %v1673, 4294901760
        %2052 = vmatpush1.msra.mxu0 %v2051
        %2053 = vmatprep.subr.mxu0 0.0
        %v2054 = vand.u32 %v1674, 4294901760
        %2055 = vmatpush1.msra.mxu0 %v2054
        %2056 = vmatprep.subr.mxu0 0.0
        %v2057 = vand.u32 %v1675, 4294901760
        %2058 = vmatpush1.msra.mxu0 %v2057
        %2059 = vmatprep.subr.mxu0 0.0
        %v2060 = vand.u32 %v1676, 4294901760
        %2061 = vmatpush1.msra.mxu0 %v2060
        %2062 = vmatprep.subr.mxu0 0.0
        %v2063 = vand.u32 %v1677, 4294901760
        %2064 = vmatpush1.msra.mxu0 %v2063
        %2065 = vmatprep.subr.mxu0 0.0
        %v2066 = vand.u32 %v1678, 4294901760
        %2067 = vmatpush1.msra.mxu0 %v2066
        %2068 = vmatprep.subr.mxu0 0.0
        %v2069 = vand.u32 %v1679, 4294901760
        %2070 = vmatpush1.msra.mxu0 %v2069
        %2071 = vmatprep.subr.mxu0 0.0
        %v2072 = vand.u32 %v1680, 4294901760
        %2073 = vmatpush1.msra.mxu0 %v2072
        %2074 = vmatprep.subr.mxu0 0.0
        %v2075 = vand.u32 %v1681, 4294901760
        %2076 = vmatpush1.msra.mxu0 %v2075
        %2077 = vmatprep.subr.mxu0 0.0
        %v2078 = vand.u32 %v1682, 4294901760
        %2079 = vmatpush1.msra.mxu0 %v2078
        %2080 = vmatprep.subr.mxu0 0.0
        %v2081 = vand.u32 %v1683, 4294901760
        %2082 = vmatpush1.msra.mxu0 %v2081
        %2083 = vmatprep.subr.mxu0 0.0
        %v2084 = vand.u32 %v1684, 4294901760
        %2085 = vmatpush1.msra.mxu0 %v2084
        %2086 = vmatprep.subr.mxu0 0.0
        %2087 = vmatpush1.msra.mxu0 0.0
        %2088 = vmatprep.subr.mxu0 0.0
        %2089 = vmatpush1.msra.mxu0 0.0
        %2090 = vmatprep.subr.mxu0 0.0
        %2091 = vmatpush1.msra.mxu0 0.0
        %2092 = vmatprep.subr.mxu0 0.0
        %2093 = vmatpush1.msra.mxu0 0.0
        %2094 = vmatprep.subr.mxu0 0.0
        %2095 = vmatpush1.msra.mxu0 0.0
        %2096 = vmatprep.subr.mxu0 0.0
        %2097 = vmatpush1.msra.mxu0 0.0
        %2098 = vmatprep.subr.mxu0 0.0
        %2099 = vmatpush1.msra.mxu0 0.0
        %2100 = vmatprep.subr.mxu0 0.0
        %2101 = vmatpush1.msra.mxu0 0.0
        %2102 = vmatprep.subr.mxu0 0.0
        %2103 = vmatpush1.msra.mxu0 0.0
        %2104 = vmatprep.subr.mxu0 0.0
        %2105 = vmatpush1.msra.mxu0 0.0
        %2106 = vmatprep.subr.mxu0 0.0
        %2107 = vmatpush1.msra.mxu0 0.0
        %2108 = vmatprep.subr.mxu0 0.0
        %2109 = vmatpush1.msra.mxu0 0.0
        %2110 = vmatprep.subr.mxu0 0.0
        %2111 = vmatpush1.msra.mxu0 0.0
        %2112 = vmatprep.subr.mxu0 0.0
        %2113 = vmatpush1.msra.mxu0 0.0
        %2114 = vmatprep.subr.mxu0 0.0
        %2115 = vmatpush1.msra.mxu0 0.0
        %2116 = vmatprep.subr.mxu0 0.0
        %2117 = vmatpush1.msra.mxu0 0.0
        %2118 = vmatprep.mubr.f32.mxu0 0.0
        %v2119 = vand.u32 %v1668, 4294901760
        %v2120 = vsub.f32 %v1668, %v2119
        %v2121 = vand.u32 %v2120, 4294901760
        %2122 = vmatmul.mubr.f32.gmra.mrb[0].mxu0 %v2121
        %v2123 = vpop.f32.mrb[0].mxu0
        %v2124 = vadd.f32 %v2035, %v2123
        %v2125 = vpop.f32.mrb[0].mxu0
        %2126 = vdwg.mxu0
        %2127 = vmatprep.subr.mxu0 0.0
        %v2128 = vand.u32 %v1669, 4294901760
        %v2129 = vsub.f32 %v1669, %v2128
        %v2130 = vand.u32 %v2129, 4294901760
        %2131 = vmatpush1.msra.mxu0 %v2130
        %2132 = vmatprep.subr.mxu0 0.0
        %v2133 = vand.u32 %v1670, 4294901760
        %v2134 = vsub.f32 %v1670, %v2133
        %v2135 = vand.u32 %v2134, 4294901760
        %2136 = vmatpush1.msra.mxu0 %v2135
        %2137 = vmatprep.subr.mxu0 0.0
        %v2138 = vand.u32 %v1671, 4294901760
        %v2139 = vsub.f32 %v1671, %v2138
        %v2140 = vand.u32 %v2139, 4294901760
        %2141 = vmatpush1.msra.mxu0 %v2140
        %2142 = vmatprep.subr.mxu0 0.0
        %v2143 = vand.u32 %v1672, 4294901760
        %v2144 = vsub.f32 %v1672, %v2143
        %v2145 = vand.u32 %v2144, 4294901760
        %2146 = vmatpush1.msra.mxu0 %v2145
        %2147 = vmatprep.subr.mxu0 0.0
        %v2148 = vand.u32 %v1673, 4294901760
        %v2149 = vsub.f32 %v1673, %v2148
        %v2150 = vand.u32 %v2149, 4294901760
        %2151 = vmatpush1.msra.mxu0 %v2150
        %2152 = vmatprep.subr.mxu0 0.0
        %v2153 = vand.u32 %v1674, 4294901760
        %v2154 = vsub.f32 %v1674, %v2153
        %v2155 = vand.u32 %v2154, 4294901760
        %2156 = vmatpush1.msra.mxu0 %v2155
        %2157 = vmatprep.subr.mxu0 0.0
        %v2158 = vand.u32 %v1675, 4294901760
        %v2159 = vsub.f32 %v1675, %v2158
        %v2160 = vand.u32 %v2159, 4294901760
        %2161 = vmatpush1.msra.mxu0 %v2160
        %2162 = vmatprep.subr.mxu0 0.0
        %v2163 = vand.u32 %v1676, 4294901760
        %v2164 = vsub.f32 %v1676, %v2163
        %v2165 = vand.u32 %v2164, 4294901760
        %2166 = vmatpush1.msra.mxu0 %v2165
        %2167 = vmatprep.subr.mxu0 0.0
        %v2168 = vand.u32 %v1677, 4294901760
        %v2169 = vsub.f32 %v1677, %v2168
        %v2170 = vand.u32 %v2169, 4294901760
        %2171 = vmatpush1.msra.mxu0 %v2170
        %2172 = vmatprep.subr.mxu0 0.0
        %v2173 = vand.u32 %v1678, 4294901760
        %v2174 = vsub.f32 %v1678, %v2173
        %v2175 = vand.u32 %v2174, 4294901760
        %2176 = vmatpush1.msra.mxu0 %v2175
        %2177 = vmatprep.subr.mxu0 0.0
        %v2178 = vand.u32 %v1679, 4294901760
        %v2179 = vsub.f32 %v1679, %v2178
        %v2180 = vand.u32 %v2179, 4294901760
        %2181 = vmatpush1.msra.mxu0 %v2180
        %2182 = vmatprep.subr.mxu0 0.0
        %v2183 = vand.u32 %v1680, 4294901760
        %v2184 = vsub.f32 %v1680, %v2183
        %v2185 = vand.u32 %v2184, 4294901760
        %2186 = vmatpush1.msra.mxu0 %v2185
        %2187 = vmatprep.subr.mxu0 0.0
        %v2188 = vand.u32 %v1681, 4294901760
        %v2189 = vsub.f32 %v1681, %v2188
        %v2190 = vand.u32 %v2189, 4294901760
        %2191 = vmatpush1.msra.mxu0 %v2190
        %2192 = vmatprep.subr.mxu0 0.0
        %v2193 = vand.u32 %v1682, 4294901760
        %v2194 = vsub.f32 %v1682, %v2193
        %v2195 = vand.u32 %v2194, 4294901760
        %2196 = vmatpush1.msra.mxu0 %v2195
        %2197 = vmatprep.subr.mxu0 0.0
        %v2198 = vand.u32 %v1683, 4294901760
        %v2199 = vsub.f32 %v1683, %v2198
        %v2200 = vand.u32 %v2199, 4294901760
        %2201 = vmatpush1.msra.mxu0 %v2200
        %2202 = vmatprep.subr.mxu0 0.0
        %v2203 = vand.u32 %v1684, 4294901760
        %v2204 = vsub.f32 %v1684, %v2203
        %v2205 = vand.u32 %v2204, 4294901760
        %2206 = vmatpush1.msra.mxu0 %v2205
        %2207 = vmatprep.subr.mxu0 0.0
        %2208 = vmatpush1.msra.mxu0 0.0
        %2209 = vmatprep.subr.mxu0 0.0
        %2210 = vmatpush1.msra.mxu0 0.0
        %2211 = vmatprep.subr.mxu0 0.0
        %2212 = vmatpush1.msra.mxu0 0.0
        %2213 = vmatprep.subr.mxu0 0.0
        %2214 = vmatpush1.msra.mxu0 0.0
        %2215 = vmatprep.subr.mxu0 0.0
        %2216 = vmatpush1.msra.mxu0 0.0
        %2217 = vmatprep.subr.mxu0 0.0
        %2218 = vmatpush1.msra.mxu0 0.0
        %2219 = vmatprep.subr.mxu0 0.0
        %2220 = vmatpush1.msra.mxu0 0.0
        %2221 = vmatprep.subr.mxu0 0.0
        %2222 = vmatpush1.msra.mxu0 0.0
        %2223 = vmatprep.subr.mxu0 0.0
        %2224 = vmatpush1.msra.mxu0 0.0
        %2225 = vmatprep.subr.mxu0 0.0
        %2226 = vmatpush1.msra.mxu0 0.0
        %2227 = vmatprep.subr.mxu0 0.0
        %2228 = vmatpush1.msra.mxu0 0.0
        %2229 = vmatprep.subr.mxu0 0.0
        %2230 = vmatpush1.msra.mxu0 0.0
        %2231 = vmatprep.subr.mxu0 0.0
        %2232 = vmatpush1.msra.mxu0 0.0
        %2233 = vmatprep.subr.mxu0 0.0
        %2234 = vmatpush1.msra.mxu0 0.0
        %2235 = vmatprep.subr.mxu0 0.0
        %2236 = vmatpush1.msra.mxu0 0.0
        %2237 = vmatprep.subr.mxu0 0.0
        %2238 = vmatpush1.msra.mxu0 0.0
        %2239 = vmatprep.mubr.f32.mxu0 0.0
        %v2240 = vand.u32 %v1668, 4294901760
        %2241 = vmatmul.mubr.f32.gmra.mrb[0].mxu0 %v2240
        %v2242 = vpop.f32.mrb[0].mxu0
        %v2243 = vadd.f32 %v2124, %v2242
        %v2244 = vpop.f32.mrb[0].mxu0
        %2245 = vdwg.mxu0
        %2246 = vmatprep.subr.mxu0 0.0
        %v2247 = vand.u32 %v1669, 4294901760
        %2248 = vmatpush1.msra.mxu0 %v2247
        %2249 = vmatprep.subr.mxu0 0.0
        %v2250 = vand.u32 %v1670, 4294901760
        %2251 = vmatpush1.msra.mxu0 %v2250
        %2252 = vmatprep.subr.mxu0 0.0
        %v2253 = vand.u32 %v1671, 4294901760
        %2254 = vmatpush1.msra.mxu0 %v2253
        %2255 = vmatprep.subr.mxu0 0.0
        %v2256 = vand.u32 %v1672, 4294901760
        %2257 = vmatpush1.msra.mxu0 %v2256
        %2258 = vmatprep.subr.mxu0 0.0
        %v2259 = vand.u32 %v1673, 4294901760
        %2260 = vmatpush1.msra.mxu0 %v2259
        %2261 = vmatprep.subr.mxu0 0.0
        %v2262 = vand.u32 %v1674, 4294901760
        %2263 = vmatpush1.msra.mxu0 %v2262
        %2264 = vmatprep.subr.mxu0 0.0
        %v2265 = vand.u32 %v1675, 4294901760
        %2266 = vmatpush1.msra.mxu0 %v2265
        %2267 = vmatprep.subr.mxu0 0.0
        %v2268 = vand.u32 %v1676, 4294901760
        %2269 = vmatpush1.msra.mxu0 %v2268
        %2270 = vmatprep.subr.mxu0 0.0
        %v2271 = vand.u32 %v1677, 4294901760
        %2272 = vmatpush1.msra.mxu0 %v2271
        %2273 = vmatprep.subr.mxu0 0.0
        %v2274 = vand.u32 %v1678, 4294901760
        %2275 = vmatpush1.msra.mxu0 %v2274
        %2276 = vmatprep.subr.mxu0 0.0
        %v2277 = vand.u32 %v1679, 4294901760
        %2278 = vmatpush1.msra.mxu0 %v2277
        %2279 = vmatprep.subr.mxu0 0.0
        %v2280 = vand.u32 %v1680, 4294901760
        %2281 = vmatpush1.msra.mxu0 %v2280
        %2282 = vmatprep.subr.mxu0 0.0
        %v2283 = vand.u32 %v1681, 4294901760
        %2284 = vmatpush1.msra.mxu0 %v2283
        %2285 = vmatprep.subr.mxu0 0.0
        %v2286 = vand.u32 %v1682, 4294901760
        %2287 = vmatpush1.msra.mxu0 %v2286
        %2288 = vmatprep.subr.mxu0 0.0
        %v2289 = vand.u32 %v1683, 4294901760
        %2290 = vmatpush1.msra.mxu0 %v2289
        %2291 = vmatprep.subr.mxu0 0.0
        %v2292 = vand.u32 %v1684, 4294901760
        %2293 = vmatpush1.msra.mxu0 %v2292
        %2294 = vmatprep.subr.mxu0 0.0
        %2295 = vmatpush1.msra.mxu0 0.0
        %2296 = vmatprep.subr.mxu0 0.0
        %2297 = vmatpush1.msra.mxu0 0.0
        %2298 = vmatprep.subr.mxu0 0.0
        %2299 = vmatpush1.msra.mxu0 0.0
        %2300 = vmatprep.subr.mxu0 0.0
        %2301 = vmatpush1.msra.mxu0 0.0
        %2302 = vmatprep.subr.mxu0 0.0
        %2303 = vmatpush1.msra.mxu0 0.0
        %2304 = vmatprep.subr.mxu0 0.0
        %2305 = vmatpush1.msra.mxu0 0.0
        %2306 = vmatprep.subr.mxu0 0.0
        %2307 = vmatpush1.msra.mxu0 0.0
        %2308 = vmatprep.subr.mxu0 0.0
        %2309 = vmatpush1.msra.mxu0 0.0
        %2310 = vmatprep.subr.mxu0 0.0
        %2311 = vmatpush1.msra.mxu0 0.0
        %2312 = vmatprep.subr.mxu0 0.0
        %2313 = vmatpush1.msra.mxu0 0.0
        %2314 = vmatprep.subr.mxu0 0.0
        %2315 = vmatpush1.msra.mxu0 0.0
        %2316 = vmatprep.subr.mxu0 0.0
        %2317 = vmatpush1.msra.mxu0 0.0
        %2318 = vmatprep.subr.mxu0 0.0
        %2319 = vmatpush1.msra.mxu0 0.0
        %2320 = vmatprep.subr.mxu0 0.0
        %2321 = vmatpush1.msra.mxu0 0.0
        %2322 = vmatprep.subr.mxu0 0.0
        %2323 = vmatpush1.msra.mxu0 0.0
        %2324 = vmatprep.subr.mxu0 0.0
        %2325 = vmatpush1.msra.mxu0 0.0
        %2326 = vmatprep.mubr.f32.mxu0 0.0
        %v2327 = vand.u32 %v1668, 4294901760
        %2328 = vmatmul.mubr.f32.gmra.mrb[0].mxu0 %v2327
        %v2329 = vpop.f32.mrb[0].mxu0
        %v2330 = vadd.f32 %v2243, %v2329
        %v2331 = vpop.f32.mrb[0].mxu0
        %2332 = vdwg.mxu0
        %2333 = vst [vmem:[%s337] sm:$0xff] %v2330
        %s2334 = sand.u32 %s186, 1
        %s2335 = scalar_lea.sflag [#allocation4], %s2334
        %s2336 = sand.u32 %s186, 1
        %s2337 = smul.addr %s2336, 8
        %s2338 = scalar_lea.vmem [#allocation10], %s2337
        // Predicated region
        $region65: #{tpu_custom_call.1} parent=47 // pred_check
          %p2339 = pneg %p196
        $region66: #{tpu_custom_call.1} parent=47 // pred_check_branch
          %2341 = sbr.rel (%p2339) target = $region68
        $region67: #{tpu_custom_call.1} parent=47 // pred_region
          %s2343 = ssub.s32 128, 128
          %2344 = vsyncadd %s2335, %s2343
          %s2345 = smul.addr %s26, 128
          %s2346 = scalar_lea.hbm %s7, %s2345
          %s2348 = sshll.u32 %s2338, 4
          %s2349 = int_to_ptr.vmem [resolvable:$true] %s2348
          %2351 = dma.vmem_to_hbm [thread:$0]  %s2349, 128, %s2346, %s2335
        $region68: #{tpu_custom_call.1} parent=47 // pred_fallthru
          _
      $region48: #{tpu_custom_call.1} parent=5 // pred_fallthru
        _
      %p2352 = scmp.le.s32.totalorder 2, %s21
      // Predicated region
      $region69: #{tpu_custom_call.1} parent=5 // pred_check
        %p2353 = pneg %p2352
      $region70: #{tpu_custom_call.1} parent=5 // pred_check_branch
        %2355 = sbr.rel (%p2353) target = $region72
      $region71: #{tpu_custom_call.1} parent=5 // pred_region
        %s2356 = ssub.s32 %s21, 2
        // Predicated region
        $region73: #{tpu_custom_call.1} parent=71 // pred_check
          %p2357 = pneg %p202
        $region74: #{tpu_custom_call.1} parent=71 // pred_check_branch
          %2359 = sbr.rel (%p2357) target = $region76
        $region75: #{tpu_custom_call.1} parent=71 // pred_region
          %s2360 = sand.u32 %s187, 1
          %s2361 = scalar_lea.sflag [#allocation4], %s2360
          %s2362 = sand.u32 %s187, 1
          %s2363 = smul.addr %s2362, 8
          %s2364 = scalar_lea.vmem [#allocation10], %s2363
          %2365 = dma.done %s2361, 128
        $region76: #{tpu_custom_call.1} parent=71 // pred_fallthru
          _
      $region72: #{tpu_custom_call.1} parent=5 // pred_fallthru
        _
    $region6: #{tpu_custom_call.1} parent=1 // loop_footer
      %s25 = sadd.s32 1, %s21
    $region7: #{tpu_custom_call.1} parent=1 // loop_footer_branch
      %20 = sbr.rel target = $region3
    $region8: #{tpu_custom_call.1} parent=1 // loop_exit
      _
    %2366 = vsyncpa [#allocation3], 1
    %s2367 = scalar_lea.sflag [#allocation3], 1
    %2368 = vsyncpa %s2367, 1
    %2369 = vsyncpa [#allocation6], 1
    %2370 = vsyncpa [#allocation9], 1
    %2371 = vsyncpa [#allocation4], 1
    %s2372 = scalar_lea.sflag [#allocation4], 1
    %2373 = vsyncpa %s2372, 1

// kernel: tpu_custom_call.1
$region0: #{tpu_custom_call.1}
  #allocation0 [shape = 'u32[]', space=smem, size = 0x4, offset = 0x4, fixed_abs, tag = 'smem constant byte address 0x4 - core index']
  #allocation1 [shape = 'u32[144,128]{1,0:T(1,128)}', space=vmem, size = 0x12000, scoped, tag = 'internal scratch']
  %s0 = inlined_call_operand.hbm [shape: f32[16,128], index: 0, kind: input, shape index: {}]
  %s1 = inlined_call_operand.hbm [shape: f32[128,128], index: 1, kind: input, shape index: {}]
  %s2 = inlined_call_operand.vmem [shape: f32[1,128], index: 2, kind: input, shape index: {}]
  %s3 = inlined_call_operand.hbm [shape: f32[128,128], index: 3, kind: input, shape index: {}]
  %s4 = inlined_call_operand.vmem [shape: f32[1,128], index: 4, kind: input, shape index: {}]
  %s5 = inlined_call_operand.hbm [shape: f32[128,128], index: 5, kind: input, shape index: {}]
  %s6 = inlined_call_operand.vmem [shape: f32[1,128], index: 6, kind: input, shape index: {}]
  %s7 = inlined_call_operand.hbm [shape: f32[16,128], index: 7, kind: output, shape index: {}]
  %s8 = sld [smem:[#allocation0]]
  $region77: #{tpu_custom_call.1} parent=0
    _
  %s10 = ssub.s32 1, %s8
  %s11 = scalar_select 0, %s10, %s8
  $region1: #{tpu_custom_call.1} parent=0
    #allocation2 [shape = 'u8[8192]{0}', space=vmem, size = 0x2000, scoped, tag = 'input window, operand 0']
    #allocation3 [shape = 's32[2]{0}', space=sflag, size = 0x8, scoped, tag = 'scoped memory for tpu_custom_call.1']
    #allocation4 [shape = 's32[2]{0}', space=sflag, size = 0x8, scoped, tag = 'scoped memory for tpu_custom_call.1']
    #allocation5 [shape = 'u8[65536]{0}', space=vmem, size = 0x10000, scoped, tag = 'input window, operand 1, single buffered']
    #allocation6 [shape = 's32[1]{0}', space=sflag, size = 0x4, scoped, tag = 'scoped memory for tpu_custom_call.1']
    #allocation7 [shape = 'u8[65536]{0}', space=vmem, size = 0x10000, scoped, tag = 'input window, operand 3, single buffered']
    #allocation8 [shape = 'u8[65536]{0}', space=vmem, size = 0x10000, scoped, tag = 'input window, operand 5, single buffered']
    #allocation9 [shape = 's32[1]{0}', space=sflag, size = 0x4, scoped, tag = 'scoped memory for tpu_custom_call.1']
    #allocation10 [shape = 'u8[8192]{0}', space=vmem, size = 0x2000, scoped, tag = 'output window, operand 0']
    %12 = vsyncpa [#allocation3], 0
    %s13 = scalar_lea.sflag [#allocation3], 1
    %14 = vsyncpa %s13, 0
    %15 = vsyncpa [#allocation6], 0
    %16 = vsyncpa [#allocation9], 0
    %17 = vsyncpa [#allocation4], 0
    %s18 = scalar_lea.sflag [#allocation4], 1
    %19 = vsyncpa %s18, 0
    loop: start=0, step=1, limit=4
    $region2: #{tpu_custom_call.1} parent=1 // loop_pre_header
      _
    $region3: #{tpu_custom_call.1} parent=1 // loop_header
      %s21 = sphi 0, %s25
      %p22 = scmp.ge.s32.totalorder %s21, 4
      %s31 = sphi 0, %s33
      %s34 = sphi 0, %s31
      %s35 = sphi 0, %s34
      %s51 = sphi 0, %s35
      %s55 = sphi 0, %s55
      %s57 = sphi 0, %s55
      %s58 = sphi 0, %s57
      %s72 = sphi 0, %s58
      %s76 = sphi 0, %s76
      %s78 = sphi 0, %s76
      %s79 = sphi 0, %s78
      %s93 = sphi 0, %s79
      %s97 = sphi 0, %s97
      %s99 = sphi 0, %s97
      %s100 = sphi 0, %s99
      %s114 = sphi 0, %s100
      %s118 = sphi 0, %s118
      %s120 = sphi 0, %s118
      %s121 = sphi 0, %s120
      %s135 = sphi 0, %s121
      %s139 = sphi 0, %s139
      %s141 = sphi 0, %s139
      %s142 = sphi 0, %s141
      %s156 = sphi 0, %s142
      %s160 = sphi 0, %s160
      %s162 = sphi 0, %s160
      %s163 = sphi 0, %s162
      %s177 = sphi 0, %s163
      %s183 = sphi 0, %s185
      %s186 = sphi 0, %s183
      %s187 = sphi 0, %s186
      %s203 = sphi 0, %s187
    $region4: #{tpu_custom_call.1} parent=1 // loop_header_branch
      %24 = sbr.rel (%p22) target = $region8
    $region5: #{tpu_custom_call.1} parent=1 // loop_body
      %s26 = ssub.s32 %s21, 1
      %s27 = ssub.s32 %s21, 2
      %s28 = sadd.s32 %s21, 1
      %s29 = ssub.s32 %s21, %s28
      %p30 = scmp.eq.s32.totalorder %s29, 0
      %s32 = sadd.s32 %s31, 1
      %s33 = scalar_select %p30, %s31, %s32
      %p36 = pneg %p30
      %p37 = scmp.eq.s32.totalorder %s21, 1
      %p38 = por %p36, %p37
      %p39 = scmp.ne.s32.totalorder %s31, %s34
      %p40 = scmp.eq.s32.totalorder %s21, 0
      %p41 = por %p39, %p40
      %p42 = scmp.ne.s32.totalorder %s31, %s34
      %p43 = scmp.eq.s32.totalorder %s26, 1
      %p44 = por %p42, %p43
      %p45 = scmp.ne.s32.totalorder %s34, %s35
      %p46 = scmp.eq.s32.totalorder %s26, 0
      %p47 = por %p45, %p46
      %p48 = scmp.ne.s32.totalorder %s34, %s35
      %p49 = scmp.eq.s32.totalorder %s27, 1
      %p50 = por %p48, %p49
      %p52 = scmp.ne.s32.totalorder %s35, %s51
      %p53 = scmp.eq.s32.totalorder %s27, 0
      %p54 = por %p52, %p53
      %s56 = sadd.s32 %s55, 1
      %p59 = scmp.eq.s32.totalorder %s21, 1
      %p60 = scmp.ne.s32.totalorder %s55, %s57
      %p61 = scmp.eq.s32.totalorder %s21, 0
      %p62 = por %p60, %p61
      %p63 = scmp.ne.s32.totalorder %s55, %s57
      %p64 = scmp.eq.s32.totalorder %s26, 1
      %p65 = por %p63, %p64
      %p66 = scmp.ne.s32.totalorder %s57, %s58
      %p67 = scmp.eq.s32.totalorder %s26, 0
      %p68 = por %p66, %p67
      %p69 = scmp.ne.s32.totalorder %s57, %s58
      %p70 = scmp.eq.s32.totalorder %s27, 1
      %p71 = por %p69, %p70
      %p73 = scmp.ne.s32.totalorder %s58, %s72
      %p74 = scmp.eq.s32.totalorder %s27, 0
      %p75 = por %p73, %p74
      %s77 = sadd.s32 %s76, 1
      %p80 = scmp.eq.s32.totalorder %s21, 1
      %p81 = scmp.ne.s32.totalorder %s76, %s78
      %p82 = scmp.eq.s32.totalorder %s21, 0
      %p83 = por %p81, %p82
      %p84 = scmp.ne.s32.totalorder %s76, %s78
      %p85 = scmp.eq.s32.totalorder %s26, 1
      %p86 = por %p84, %p85
      %p87 = scmp.ne.s32.totalorder %s78, %s79
      %p88 = scmp.eq.s32.totalorder %s26, 0
      %p89 = por %p87, %p88
      %p90 = scmp.ne.s32.totalorder %s78, %s79
      %p91 = scmp.eq.s32.totalorder %s27, 1
      %p92 = por %p90, %p91
      %p94 = scmp.ne.s32.totalorder %s79, %s93
      %p95 = scmp.eq.s32.totalorder %s27, 0
      %p96 = por %p94, %p95
      %s98 = sadd.s32 %s97, 1
      %p101 = scmp.eq.s32.totalorder %s21, 1
      %p102 = scmp.ne.s32.totalorder %s97, %s99
      %p103 = scmp.eq.s32.totalorder %s21, 0
      %p104 = por %p102, %p103
      %p105 = scmp.ne.s32.totalorder %s97, %s99
      %p106 = scmp.eq.s32.totalorder %s26, 1
      %p107 = por %p105, %p106
      %p108 = scmp.ne.s32.totalorder %s99, %s100
      %p109 = scmp.eq.s32.totalorder %s26, 0
      %p110 = por %p108, %p109
      %p111 = scmp.ne.s32.totalorder %s99, %s100
      %p112 = scmp.eq.s32.totalorder %s27, 1
      %p113 = por %p111, %p112
      %p115 = scmp.ne.s32.totalorder %s100, %s114
      %p116 = scmp.eq.s32.totalorder %s27, 0
      %p117 = por %p115, %p116
      %s119 = sadd.s32 %s118, 1
      %p122 = scmp.eq.s32.totalorder %s21, 1
      %p123 = scmp.ne.s32.totalorder %s118, %s120
      %p124 = scmp.eq.s32.totalorder %s21, 0
      %p125 = por %p123, %p124
      %p126 = scmp.ne.s32.totalorder %s118, %s120
      %p127 = scmp.eq.s32.totalorder %s26, 1
      %p128 = por %p126, %p127
      %p129 = scmp.ne.s32.totalorder %s120, %s121
      %p130 = scmp.eq.s32.totalorder %s26, 0
      %p131 = por %p129, %p130
      %p132 = scmp.ne.s32.totalorder %s120, %s121
      %p133 = scmp.eq.s32.totalorder %s27, 1
      %p134 = por %p132, %p133
      %p136 = scmp.ne.s32.totalorder %s121, %s135
      %p137 = scmp.eq.s32.totalorder %s27, 0
      %p138 = por %p136, %p137
      %s140 = sadd.s32 %s139, 1
      %p143 = scmp.eq.s32.totalorder %s21, 1
      %p144 = scmp.ne.s32.totalorder %s139, %s141
      %p145 = scmp.eq.s32.totalorder %s21, 0
      %p146 = por %p144, %p145
      %p147 = scmp.ne.s32.totalorder %s139, %s141
      %p148 = scmp.eq.s32.totalorder %s26, 1
      %p149 = por %p147, %p148
      %p150 = scmp.ne.s32.totalorder %s141, %s142
      %p151 = scmp.eq.s32.totalorder %s26, 0
      %p152 = por %p150, %p151
      %p153 = scmp.ne.s32.totalorder %s141, %s142
      %p154 = scmp.eq.s32.totalorder %s27, 1
      %p155 = por %p153, %p154
      %p157 = scmp.ne.s32.totalorder %s142, %s156
      %p158 = scmp.eq.s32.totalorder %s27, 0
      %p159 = por %p157, %p158
      %s161 = sadd.s32 %s160, 1
      %p164 = scmp.eq.s32.totalorder %s21, 1
      %p165 = scmp.ne.s32.totalorder %s160, %s162
      %p166 = scmp.eq.s32.totalorder %s21, 0
      %p167 = por %p165, %p166
      %p168 = scmp.ne.s32.totalorder %s160, %s162
      %p169 = scmp.eq.s32.totalorder %s26, 1
      %p170 = por %p168, %p169
      %p171 = scmp.ne.s32.totalorder %s162, %s163
      %p172 = scmp.eq.s32.totalorder %s26, 0
      %p173 = por %p171, %p172
      %p174 = scmp.ne.s32.totalorder %s162, %s163
      %p175 = scmp.eq.s32.totalorder %s27, 1
      %p176 = por %p174, %p175
      %p178 = scmp.ne.s32.totalorder %s163, %s177
      %p179 = scmp.eq.s32.totalorder %s27, 0
      %p180 = por %p178, %p179
      %s181 = ssub.s32 %s21, %s28
      %p182 = scmp.eq.s32.totalorder %s181, 0
      %s184 = sadd.s32 %s183, 1
      %s185 = scalar_select %p182, %s183, %s184
      %p188 = pneg %p182
      %p189 = scmp.eq.s32.totalorder %s21, 1
      %p190 = por %p188, %p189
      %p191 = scmp.ne.s32.totalorder %s183, %s186
      %p192 = scmp.eq.s32.totalorder %s21, 0
      %p193 = por %p191, %p192
      %p194 = scmp.ne.s32.totalorder %s183, %s186
      %p195 = scmp.eq.s32.totalorder %s26, 1
      %p196 = por %p194, %p195
      %p197 = scmp.ne.s32.totalorder %s186, %s187
      %p198 = scmp.eq.s32.totalorder %s26, 0
      %p199 = por %p197, %p198
      %p200 = scmp.ne.s32.totalorder %s186, %s187
      %p201 = scmp.eq.s32.totalorder %s27, 1
      %p202 = por %p200, %p201
      %p204 = scmp.ne.s32.totalorder %s187, %s203
      %p205 = scmp.eq.s32.totalorder %s27, 0
      %p206 = por %p204, %p205
      %p207 = scmp.le.s32.totalorder 1, %s21
      %p208 = scmp.lt.s32.totalorder %s21, 3
      %p209 = pnand %p207, %p208
      %p210 = pneg %p209
      // Predicated region
      $region9: #{tpu_custom_call.1} parent=5 // pred_check
        _
      $region10: #{tpu_custom_call.1} parent=5 // pred_check_branch
        %212 = sbr.rel (%p209) target = $region12
      $region11: #{tpu_custom_call.1} parent=5 // pred_region
        %s213 = ssub.s32 %s21, 1
        // Predicated region
        $region13: #{tpu_custom_call.1} parent=11 // pred_check
          %p214 = pneg %p68
        $region14: #{tpu_custom_call.1} parent=11 // pred_check_branch
          %216 = sbr.rel (%p214) target = $region16
        $region15: #{tpu_custom_call.1} parent=11 // pred_region
          %s218 = ssub.s32 2048, 2048
          %219 = vsyncadd [#allocation6], %s218
          %s220 = sshll.u32 [#allocation5], 4
          %s221 = int_to_ptr.vmem [resolvable:$true] %s220
          %226 = dma.hbm_to_vmem [thread:$0]  %s1, 2048, %s221, [#allocation6], 128, 128, 8
        $region16: #{tpu_custom_call.1} parent=11 // pred_fallthru
          _
        // Predicated region
        $region17: #{tpu_custom_call.1} parent=11 // pred_check
          %p227 = pneg %p89
        $region18: #{tpu_custom_call.1} parent=11 // pred_check_branch
          %229 = sbr.rel (%p227) target = $region20
        $region19: #{tpu_custom_call.1} parent=11 // pred_region
          _
        $region20: #{tpu_custom_call.1} parent=11 // pred_fallthru
          _
        // Predicated region
        $region21: #{tpu_custom_call.1} parent=11 // pred_check
          %p230 = pneg %p110
        $region22: #{tpu_custom_call.1} parent=11 // pred_check_branch
          %232 = sbr.rel (%p230) target = $region24
        $region23: #{tpu_custom_call.1} parent=11 // pred_region
          %s234 = ssub.s32 2048, 2048
          %235 = vsyncadd [#allocation6], %s234
          %s236 = sshll.u32 [#allocation7], 4
          %s237 = int_to_ptr.vmem [resolvable:$true] %s236
          %242 = dma.hbm_to_vmem [thread:$0]  %s3, 2048, %s237, [#allocation6], 128, 128, 8
        $region24: #{tpu_custom_call.1} parent=11 // pred_fallthru
          _
        // Predicated region
        $region25: #{tpu_custom_call.1} parent=11 // pred_check
          %p243 = pneg %p131
        $region26: #{tpu_custom_call.1} parent=11 // pred_check_branch
          %245 = sbr.rel (%p243) target = $region28
        $region27: #{tpu_custom_call.1} parent=11 // pred_region
          _
        $region28: #{tpu_custom_call.1} parent=11 // pred_fallthru
          _
        // Predicated region
        $region29: #{tpu_custom_call.1} parent=11 // pred_check
          %p246 = pneg %p152
        $region30: #{tpu_custom_call.1} parent=11 // pred_check_branch
          %248 = sbr.rel (%p246) target = $region32
        $region31: #{tpu_custom_call.1} parent=11 // pred_region
          %s250 = ssub.s32 2048, 2048
          %251 = vsyncadd [#allocation9], %s250
          %s252 = sshll.u32 [#allocation8], 4
          %s253 = int_to_ptr.vmem [resolvable:$true] %s252
          %258 = dma.hbm_to_vmem [thread:$0]  %s5, 2048, %s253, [#allocation9], 128, 128, 8
        $region32: #{tpu_custom_call.1} parent=11 // pred_fallthru
          _
        // Predicated region
        $region33: #{tpu_custom_call.1} parent=11 // pred_check
          %p259 = pneg %p173
        $region34: #{tpu_custom_call.1} parent=11 // pred_check_branch
          %261 = sbr.rel (%p259) target = $region36
        $region35: #{tpu_custom_call.1} parent=11 // pred_region
          _
        $region36: #{tpu_custom_call.1} parent=11 // pred_fallthru
          _
      $region12: #{tpu_custom_call.1} parent=5 // pred_fallthru
        _
      %p262 = scmp.lt.s32.totalorder %s21, 2
      // Predicated region
      $region37: #{tpu_custom_call.1} parent=5 // pred_check
        %p263 = pneg %p262
      $region38: #{tpu_custom_call.1} parent=5 // pred_check_branch
        %265 = sbr.rel (%p263) target = $region40
      $region39: #{tpu_custom_call.1} parent=5 // pred_region
        // Predicated region
        $region41: #{tpu_custom_call.1} parent=39 // pred_check
          %p266 = pneg %p41
        $region42: #{tpu_custom_call.1} parent=39 // pred_check_branch
          %268 = sbr.rel (%p266) target = $region44
        $region43: #{tpu_custom_call.1} parent=39 // pred_region
          %s269 = sand.u32 %s31, 1
          %s270 = scalar_lea.sflag [#allocation3], %s269
          %s271 = sand.u32 %s31, 1
          %s272 = smul.addr %s271, 8
          %s273 = scalar_lea.vmem [#allocation2], %s272
          %s275 = ssub.s32 128, 128
          %276 = vsyncadd %s270, %s275
          %s277 = smul.addr %s21, 128
          %s278 = scalar_lea.hbm %s0, %s277
          %s280 = sshll.u32 %s273, 4
          %s281 = int_to_ptr.vmem [resolvable:$true] %s280
          %283 = dma.hbm_to_vmem [thread:$0]  %s278, 128, %s281, %s270
        $region44: #{tpu_custom_call.1} parent=39 // pred_fallthru
          _
      $region40: #{tpu_custom_call.1} parent=5 // pred_fallthru
        _
      %p284 = scmp.le.s32.totalorder 1, %s21
      %p285 = scmp.lt.s32.totalorder %s21, 3
      %p286 = pnand %p284, %p285
      %p287 = pneg %p286
      // Predicated region
      $region45: #{tpu_custom_call.1} parent=5 // pred_check
        _
      $region46: #{tpu_custom_call.1} parent=5 // pred_check_branch
        %289 = sbr.rel (%p286) target = $region48
      $region47: #{tpu_custom_call.1} parent=5 // pred_region
        %s290 = ssub.s32 %s21, 1
        %s291 = sand.u32 %s34, 1
        %s292 = scalar_lea.sflag [#allocation3], %s291
        %s293 = sand.u32 %s34, 1
        %s294 = smul.addr %s293, 8
        %s295 = scalar_lea.vmem [#allocation2], %s294
        // Predicated region
        $region49: #{tpu_custom_call.1} parent=47 // pred_check
          %p296 = pneg %p47
        $region50: #{tpu_custom_call.1} parent=47 // pred_check_branch
          %298 = sbr.rel (%p296) target = $region52
        $region51: #{tpu_custom_call.1} parent=47 // pred_region
          %299 = dma.done %s292, 128
        $region52: #{tpu_custom_call.1} parent=47 // pred_fallthru
          _
        // Predicated region
        $region53: #{tpu_custom_call.1} parent=47 // pred_check
          %p300 = pneg %p68
        $region54: #{tpu_custom_call.1} parent=47 // pred_check_branch
          %302 = sbr.rel (%p300) target = $region56
        $region55: #{tpu_custom_call.1} parent=47 // pred_region
          %303 = dma.done [#allocation6], 2048
        $region56: #{tpu_custom_call.1} parent=47 // pred_fallthru
          _
        // Predicated region
        $region57: #{tpu_custom_call.1} parent=47 // pred_check
          %p304 = pneg %p110
        $region58: #{tpu_custom_call.1} parent=47 // pred_check_branch
          %306 = sbr.rel (%p304) target = $region60
        $region59: #{tpu_custom_call.1} parent=47 // pred_region
          %307 = dma.done [#allocation6], 2048
        $region60: #{tpu_custom_call.1} parent=47 // pred_fallthru
          _
        // Predicated region
        $region61: #{tpu_custom_call.1} parent=47 // pred_check
          %p308 = pneg %p152
        $region62: #{tpu_custom_call.1} parent=47 // pred_check_branch
          %310 = sbr.rel (%p308) target = $region64
        $region63: #{tpu_custom_call.1} parent=47 // pred_region
          %311 = dma.done [#allocation9], 2048
        $region64: #{tpu_custom_call.1} parent=47 // pred_fallthru
          _
        %s312 = sand.u32 %s34, 1
        %s313 = scalar_lea.sflag [#allocation3], %s312
        %s314 = sand.u32 %s34, 1
        %s315 = smul.addr %s314, 8
        %s316 = scalar_lea.vmem [#allocation2], %s315
        %p317 = pneg %p47
        %p318 = pneg %p44
        %p319 = pneg %p68
        %p320 = pneg %p65
        %p321 = pneg %p89
        %p322 = pneg %p86
        %p323 = pneg %p110
        %p324 = pneg %p107
        %p325 = pneg %p131
        %p326 = pneg %p128
        %p327 = pneg %p152
        %p328 = pneg %p149
        %p329 = pneg %p173
        %p330 = pneg %p170
        %p331 = pneg %p199
        %p332 = pneg %p196
        %s333 = sand.u32 %s186, 1
        %s334 = scalar_lea.sflag [#allocation4], %s333
        %s335 = sand.u32 %s186, 1
        %s336 = smul.addr %s335, 8
        %s337 = scalar_lea.vmem [#allocation10], %s336
        %v338 = vld [vmem:[%s295] sm:$0xff]
        %v339 = vld [vmem:[#allocation5] sm:$0xff]
        %v340 = vld [vmem:[#allocation5 + $0x8] sm:$0xff]
        %v341 = vld [vmem:[#allocation5 + $0x10] sm:$0xff]
        %v342 = vld [vmem:[#allocation5 + $0x18] sm:$0xff]
        %v343 = vld [vmem:[#allocation5 + $0x20] sm:$0xff]
        %v344 = vld [vmem:[#allocation5 + $0x28] sm:$0xff]
        %v345 = vld [vmem:[#allocation5 + $0x30] sm:$0xff]
        %v346 = vld [vmem:[#allocation5 + $0x38] sm:$0xff]
        %v347 = vld [vmem:[#allocation5 + $0x40] sm:$0xff]
        %v348 = vld [vmem:[#allocation5 + $0x48] sm:$0xff]
        %v349 = vld [vmem:[#allocation5 + $0x50] sm:$0xff]
        %v350 = vld [vmem:[#allocation5 + $0x58] sm:$0xff]
        %v351 = vld [vmem:[#allocation5 + $0x60] sm:$0xff]
        %v352 = vld [vmem:[#allocation5 + $0x68] sm:$0xff]
        %v353 = vld [vmem:[#allocation5 + $0x70] sm:$0xff]
        %v354 = vld [vmem:[#allocation5 + $0x78] sm:$0xff]
        %v355 = vld [vmem:[%s2] sm:$0x1]
        %v357 = vlaneseq
        %v358 = vshrl.u32 %v357, 7
        %v359 = vsub.s32 0, %v358
        %v360 = vrot.slane %v355, %v359
        %362 = vmatprep.subr.mxu0 0.0
        %v363 = vand.u32 %v339, 4294901760
        %364 = vmatpush1.msra.mxu0 %v363
        %365 = vmatprep.subr.mxu0 0.0
        %v366 = vand.u32 %v340, 4294901760
        %367 = vmatpush1.msra.mxu0 %v366
        %368 = vmatprep.subr.mxu0 0.0
        %v369 = vand.u32 %v341, 4294901760
        %370 = vmatpush1.msra.mxu0 %v369
        %371 = vmatprep.subr.mxu0 0.0
        %v372 = vand.u32 %v342, 4294901760
        %373 = vmatpush1.msra.mxu0 %v372
        %374 = vmatprep.subr.mxu0 0.0
        %v375 = vand.u32 %v343, 4294901760
        %376 = vmatpush1.msra.mxu0 %v375
        %377 = vmatprep.subr.mxu0 0.0
        %v378 = vand.u32 %v344, 4294901760
        %379 = vmatpush1.msra.mxu0 %v378
        %380 = vmatprep.subr.mxu0 0.0
        %v381 = vand.u32 %v345, 4294901760
        %382 = vmatpush1.msra.mxu0 %v381
        %383 = vmatprep.subr.mxu0 0.0
        %v384 = vand.u32 %v346, 4294901760
        %385 = vmatpush1.msra.mxu0 %v384
        %386 = vmatprep.subr.mxu0 0.0
        %v387 = vand.u32 %v347, 4294901760
        %388 = vmatpush1.msra.mxu0 %v387
        %389 = vmatprep.subr.mxu0 0.0
        %v390 = vand.u32 %v348, 4294901760
        %391 = vmatpush1.msra.mxu0 %v390
        %392 = vmatprep.subr.mxu0 0.0
        %v393 = vand.u32 %v349, 4294901760
        %394 = vmatpush1.msra.mxu0 %v393
        %395 = vmatprep.subr.mxu0 0.0
        %v396 = vand.u32 %v350, 4294901760
        %397 = vmatpush1.msra.mxu0 %v396
        %398 = vmatprep.subr.mxu0 0.0
        %v399 = vand.u32 %v351, 4294901760
        %400 = vmatpush1.msra.mxu0 %v399
        %401 = vmatprep.subr.mxu0 0.0
        %v402 = vand.u32 %v352, 4294901760
        %403 = vmatpush1.msra.mxu0 %v402
        %404 = vmatprep.subr.mxu0 0.0
        %v405 = vand.u32 %v353, 4294901760
        %406 = vmatpush1.msra.mxu0 %v405
        %407 = vmatprep.subr.mxu0 0.0
        %v408 = vand.u32 %v354, 4294901760
        %409 = vmatpush1.msra.mxu0 %v408
        %410 = vmatprep.subr.mxu0 0.0
        %411 = vmatpush1.msra.mxu0 0.0
        %412 = vmatprep.subr.mxu0 0.0
        %413 = vmatpush1.msra.mxu0 0.0
        %414 = vmatprep.subr.mxu0 0.0
        %415 = vmatpush1.msra.mxu0 0.0
        %416 = vmatprep.subr.mxu0 0.0
        %417 = vmatpush1.msra.mxu0 0.0
        %418 = vmatprep.subr.mxu0 0.0
        %419 = vmatpush1.msra.mxu0 0.0
        %420 = vmatprep.subr.mxu0 0.0
        %421 = vmatpush1.msra.mxu0 0.0
        %422 = vmatprep.subr.mxu0 0.0
        %423 = vmatpush1.msra.mxu0 0.0
        %424 = vmatprep.subr.mxu0 0.0
        %425 = vmatpush1.msra.mxu0 0.0
        %426 = vmatprep.subr.mxu0 0.0
        %427 = vmatpush1.msra.mxu0 0.0
        %428 = vmatprep.subr.mxu0 0.0
        %429 = vmatpush1.msra.mxu0 0.0
        %430 = vmatprep.subr.mxu0 0.0
        %431 = vmatpush1.msra.mxu0 0.0
        %432 = vmatprep.subr.mxu0 0.0
        %433 = vmatpush1.msra.mxu0 0.0
        %434 = vmatprep.subr.mxu0 0.0
        %435 = vmatpush1.msra.mxu0 0.0
        %436 = vmatprep.subr.mxu0 0.0
        %437 = vmatpush1.msra.mxu0 0.0
        %438 = vmatprep.subr.mxu0 0.0
        %439 = vmatpush1.msra.mxu0 0.0
        %440 = vmatprep.subr.mxu0 0.0
        %441 = vmatpush1.msra.mxu0 0.0
        %442 = vmatprep.mubr.f32.mxu0 0.0
        %v443 = vand.u32 %v338, 4294901760
        %v444 = vsub.f32 %v338, %v443
        %v445 = vand.u32 %v444, 4294901760
        %v446 = vsub.f32 %v444, %v445
        %v447 = vand.u32 %v446, 4294901760
        %448 = vmatmul.mubr.f32.gmra.mrb[0].mxu0 %v447
        %v449 = vpop.f32.mrb[0].mxu0
        %v450 = vadd.f32 %v360, %v449
        %v451 = vpop.f32.mrb[0].mxu0
        %452 = vdwg.mxu0
        %453 = vmatprep.subr.mxu0 0.0
        %v454 = vand.u32 %v339, 4294901760
        %v455 = vsub.f32 %v339, %v454
        %v456 = vand.u32 %v455, 4294901760
        %v457 = vsub.f32 %v455, %v456
        %v458 = vand.u32 %v457, 4294901760
        %459 = vmatpush1.msra.mxu0 %v458
        %460 = vmatprep.subr.mxu0 0.0
        %v461 = vand.u32 %v340, 4294901760
        %v462 = vsub.f32 %v340, %v461
        %v463 = vand.u32 %v462, 4294901760
        %v464 = vsub.f32 %v462, %v463
        %v465 = vand.u32 %v464, 4294901760
        %466 = vmatpush1.msra.mxu0 %v465
        %467 = vmatprep.subr.mxu0 0.0
        %v468 = vand.u32 %v341, 4294901760
        %v469 = vsub.f32 %v341, %v468
        %v470 = vand.u32 %v469, 4294901760
        %v471 = vsub.f32 %v469, %v470
        %v472 = vand.u32 %v471, 4294901760
        %473 = vmatpush1.msra.mxu0 %v472
        %474 = vmatprep.subr.mxu0 0.0
        %v475 = vand.u32 %v342, 4294901760
        %v476 = vsub.f32 %v342, %v475
        %v477 = vand.u32 %v476, 4294901760
        %v478 = vsub.f32 %v476, %v477
        %v479 = vand.u32 %v478, 4294901760
        %480 = vmatpush1.msra.mxu0 %v479
        %481 = vmatprep.subr.mxu0 0.0
        %v482 = vand.u32 %v343, 4294901760
        %v483 = vsub.f32 %v343, %v482
        %v484 = vand.u32 %v483, 4294901760
        %v485 = vsub.f32 %v483, %v484
        %v486 = vand.u32 %v485, 4294901760
        %487 = vmatpush1.msra.mxu0 %v486
        %488 = vmatprep.subr.mxu0 0.0
        %v489 = vand.u32 %v344, 4294901760
        %v490 = vsub.f32 %v344, %v489
        %v491 = vand.u32 %v490, 4294901760
        %v492 = vsub.f32 %v490, %v491
        %v493 = vand.u32 %v492, 4294901760
        %494 = vmatpush1.msra.mxu0 %v493
        %495 = vmatprep.subr.mxu0 0.0
        %v496 = vand.u32 %v345, 4294901760
        %v497 = vsub.f32 %v345, %v496
        %v498 = vand.u32 %v497, 4294901760
        %v499 = vsub.f32 %v497, %v498
        %v500 = vand.u32 %v499, 4294901760
        %501 = vmatpush1.msra.mxu0 %v500
        %502 = vmatprep.subr.mxu0 0.0
        %v503 = vand.u32 %v346, 4294901760
        %v504 = vsub.f32 %v346, %v503
        %v505 = vand.u32 %v504, 4294901760
        %v506 = vsub.f32 %v504, %v505
        %v507 = vand.u32 %v506, 4294901760
        %508 = vmatpush1.msra.mxu0 %v507
        %509 = vmatprep.subr.mxu0 0.0
        %v510 = vand.u32 %v347, 4294901760
        %v511 = vsub.f32 %v347, %v510
        %v512 = vand.u32 %v511, 4294901760
        %v513 = vsub.f32 %v511, %v512
        %v514 = vand.u32 %v513, 4294901760
        %515 = vmatpush1.msra.mxu0 %v514
        %516 = vmatprep.subr.mxu0 0.0
        %v517 = vand.u32 %v348, 4294901760
        %v518 = vsub.f32 %v348, %v517
        %v519 = vand.u32 %v518, 4294901760
        %v520 = vsub.f32 %v518, %v519
        %v521 = vand.u32 %v520, 4294901760
        %522 = vmatpush1.msra.mxu0 %v521
        %523 = vmatprep.subr.mxu0 0.0
        %v524 = vand.u32 %v349, 4294901760
        %v525 = vsub.f32 %v349, %v524
        %v526 = vand.u32 %v525, 4294901760
        %v527 = vsub.f32 %v525, %v526
        %v528 = vand.u32 %v527, 4294901760
        %529 = vmatpush1.msra.mxu0 %v528
        %530 = vmatprep.subr.mxu0 0.0
        %v531 = vand.u32 %v350, 4294901760
        %v532 = vsub.f32 %v350, %v531
        %v533 = vand.u32 %v532, 4294901760
        %v534 = vsub.f32 %v532, %v533
        %v535 = vand.u32 %v534, 4294901760
        %536 = vmatpush1.msra.mxu0 %v535
        %537 = vmatprep.subr.mxu0 0.0
        %v538 = vand.u32 %v351, 4294901760
        %v539 = vsub.f32 %v351, %v538
        %v540 = vand.u32 %v539, 4294901760
        %v541 = vsub.f32 %v539, %v540
        %v542 = vand.u32 %v541, 4294901760
        %543 = vmatpush1.msra.mxu0 %v542
        %544 = vmatprep.subr.mxu0 0.0
        %v545 = vand.u32 %v352, 4294901760
        %v546 = vsub.f32 %v352, %v545
        %v547 = vand.u32 %v546, 4294901760
        %v548 = vsub.f32 %v546, %v547
        %v549 = vand.u32 %v548, 4294901760
        %550 = vmatpush1.msra.mxu0 %v549
        %551 = vmatprep.subr.mxu0 0.0
        %v552 = vand.u32 %v353, 4294901760
        %v553 = vsub.f32 %v353, %v552
        %v554 = vand.u32 %v553, 4294901760
        %v555 = vsub.f32 %v553, %v554
        %v556 = vand.u32 %v555, 4294901760
        %557 = vmatpush1.msra.mxu0 %v556
        %558 = vmatprep.subr.mxu0 0.0
        %v559 = vand.u32 %v354, 4294901760
        %v560 = vsub.f32 %v354, %v559
        %v561 = vand.u32 %v560, 4294901760
        %v562 = vsub.f32 %v560, %v561
        %v563 = vand.u32 %v562, 4294901760
        %564 = vmatpush1.msra.mxu0 %v563
        %565 = vmatprep.subr.mxu0 0.0
        %566 = vmatpush1.msra.mxu0 0.0
        %567 = vmatprep.subr.mxu0 0.0
        %568 = vmatpush1.msra.mxu0 0.0
        %569 = vmatprep.subr.mxu0 0.0
        %570 = vmatpush1.msra.mxu0 0.0
        %571 = vmatprep.subr.mxu0 0.0
        %572 = vmatpush1.msra.mxu0 0.0
        %573 = vmatprep.subr.mxu0 0.0
        %574 = vmatpush1.msra.mxu0 0.0
        %575 = vmatprep.subr.mxu0 0.0
        %576 = vmatpush1.msra.mxu0 0.0
        %577 = vmatprep.subr.mxu0 0.0
        %578 = vmatpush1.msra.mxu0 0.0
        %579 = vmatprep.subr.mxu0 0.0
        %580 = vmatpush1.msra.mxu0 0.0
        %581 = vmatprep.subr.mxu0 0.0
        %582 = vmatpush1.msra.mxu0 0.0
        %583 = vmatprep.subr.mxu0 0.0
        %584 = vmatpush1.msra.mxu0 0.0
        %585 = vmatprep.subr.mxu0 0.0
        %586 = vmatpush1.msra.mxu0 0.0
        %587 = vmatprep.subr.mxu0 0.0
        %588 = vmatpush1.msra.mxu0 0.0
        %589 = vmatprep.subr.mxu0 0.0
        %590 = vmatpush1.msra.mxu0 0.0
        %591 = vmatprep.subr.mxu0 0.0
        %592 = vmatpush1.msra.mxu0 0.0
        %593 = vmatprep.subr.mxu0 0.0
        %594 = vmatpush1.msra.mxu0 0.0
        %595 = vmatprep.subr.mxu0 0.0
        %596 = vmatpush1.msra.mxu0 0.0
        %597 = vmatprep.mubr.f32.mxu0 0.0
        %v598 = vand.u32 %v338, 4294901760
        %599 = vmatmul.mubr.f32.gmra.mrb[0].mxu0 %v598
        %v600 = vpop.f32.mrb[0].mxu0
        %v601 = vadd.f32 %v450, %v600
        %v602 = vpop.f32.mrb[0].mxu0
        %603 = vdwg.mxu0
        %604 = vmatprep.subr.mxu0 0.0
        %v605 = vand.u32 %v339, 4294901760
        %v606 = vsub.f32 %v339, %v605
        %607 = vmatpush1.msra.mxu0 %v606
        %608 = vmatprep.subr.mxu0 0.0
        %v609 = vand.u32 %v340, 4294901760
        %v610 = vsub.f32 %v340, %v609
        %611 = vmatpush1.msra.mxu0 %v610
        %612 = vmatprep.subr.mxu0 0.0
        %v613 = vand.u32 %v341, 4294901760
        %v614 = vsub.f32 %v341, %v613
        %615 = vmatpush1.msra.mxu0 %v614
        %616 = vmatprep.subr.mxu0 0.0
        %v617 = vand.u32 %v342, 4294901760
        %v618 = vsub.f32 %v342, %v617
        %619 = vmatpush1.msra.mxu0 %v618
        %620 = vmatprep.subr.mxu0 0.0
        %v621 = vand.u32 %v343, 4294901760
        %v622 = vsub.f32 %v343, %v621
        %623 = vmatpush1.msra.mxu0 %v622
        %624 = vmatprep.subr.mxu0 0.0
        %v625 = vand.u32 %v344, 4294901760
        %v626 = vsub.f32 %v344, %v625
        %627 = vmatpush1.msra.mxu0 %v626
        %628 = vmatprep.subr.mxu0 0.0
        %v629 = vand.u32 %v345, 4294901760
        %v630 = vsub.f32 %v345, %v629
        %631 = vmatpush1.msra.mxu0 %v630
        %632 = vmatprep.subr.mxu0 0.0
        %v633 = vand.u32 %v346, 4294901760
        %v634 = vsub.f32 %v346, %v633
        %635 = vmatpush1.msra.mxu0 %v634
        %636 = vmatprep.subr.mxu0 0.0
        %v637 = vand.u32 %v347, 4294901760
        %v638 = vsub.f32 %v347, %v637
        %639 = vmatpush1.msra.mxu0 %v638
        %640 = vmatprep.subr.mxu0 0.0
        %v641 = vand.u32 %v348, 4294901760
        %v642 = vsub.f32 %v348, %v641
        %643 = vmatpush1.msra.mxu0 %v642
        %644 = vmatprep.subr.mxu0 0.0
        %v645 = vand.u32 %v349, 4294901760
        %v646 = vsub.f32 %v349, %v645
        %647 = vmatpush1.msra.mxu0 %v646
        %648 = vmatprep.subr.mxu0 0.0
        %v649 = vand.u32 %v350, 4294901760
        %v650 = vsub.f32 %v350, %v649
        %651 = vmatpush1.msra.mxu0 %v650
        %652 = vmatprep.subr.mxu0 0.0
        %v653 = vand.u32 %v351, 4294901760
        %v654 = vsub.f32 %v351, %v653
        %655 = vmatpush1.msra.mxu0 %v654
        %656 = vmatprep.subr.mxu0 0.0
        %v657 = vand.u32 %v352, 4294901760
        %v658 = vsub.f32 %v352, %v657
        %659 = vmatpush1.msra.mxu0 %v658
        %660 = vmatprep.subr.mxu0 0.0
        %v661 = vand.u32 %v353, 4294901760
        %v662 = vsub.f32 %v353, %v661
        %663 = vmatpush1.msra.mxu0 %v662
        %664 = vmatprep.subr.mxu0 0.0
        %v665 = vand.u32 %v354, 4294901760
        %v666 = vsub.f32 %v354, %v665
        %667 = vmatpush1.msra.mxu0 %v666
        %668 = vmatprep.subr.mxu0 0.0
        %669 = vmatpush1.msra.mxu0 0.0
        %670 = vmatprep.subr.mxu0 0.0
        %671 = vmatpush1.msra.mxu0 0.0
        %672 = vmatprep.subr.mxu0 0.0
        %673 = vmatpush1.msra.mxu0 0.0
        %674 = vmatprep.subr.mxu0 0.0
        %675 = vmatpush1.msra.mxu0 0.0
        %676 = vmatprep.subr.mxu0 0.0
        %677 = vmatpush1.msra.mxu0 0.0
        %678 = vmatprep.subr.mxu0 0.0
        %679 = vmatpush1.msra.mxu0 0.0
        %680 = vmatprep.subr.mxu0 0.0
        %681 = vmatpush1.msra.mxu0 0.0
        %682 = vmatprep.subr.mxu0 0.0
        %683 = vmatpush1.msra.mxu0 0.0
        %684 = vmatprep.subr.mxu0 0.0
        %685 = vmatpush1.msra.mxu0 0.0
        %686 = vmatprep.subr.mxu0 0.0
        %687 = vmatpush1.msra.mxu0 0.0
        %688 = vmatprep.subr.mxu0 0.0
        %689 = vmatpush1.msra.mxu0 0.0
        %690 = vmatprep.subr.mxu0 0.0
        %691 = vmatpush1.msra.mxu0 0.0
        %692 = vmatprep.subr.mxu0 0.0
        %693 = vmatpush1.msra.mxu0 0.0
        %694 = vmatprep.subr.mxu0 0.0
        %695 = vmatpush1.msra.mxu0 0.0
        %696 = vmatprep.subr.mxu0 0.0
        %697 = vmatpush1.msra.mxu0 0.0
        %698 = vmatprep.subr.mxu0 0.0
        %699 = vmatpush1.msra.mxu0 0.0
        %700 = vmatprep.mubr.f32.mxu0 0.0
        %v701 = vand.u32 %v338, 4294901760
        %v702 = vsub.f32 %v338, %v701
        %703 = vmatmul.mubr.f32.gmra.mrb[0].mxu0 %v702
        %v704 = vpop.f32.mrb[0].mxu0
        %v705 = vadd.f32 %v601, %v704
        %v706 = vpop.f32.mrb[0].mxu0
        %707 = vdwg.mxu0
        %708 = vmatprep.subr.mxu0 0.0
        %v709 = vand.u32 %v339, 4294901760
        %710 = vmatpush1.msra.mxu0 %v709
        %711 = vmatprep.subr.mxu0 0.0
        %v712 = vand.u32 %v340, 4294901760
        %713 = vmatpush1.msra.mxu0 %v712
        %714 = vmatprep.subr.mxu0 0.0
        %v715 = vand.u32 %v341, 4294901760
        %716 = vmatpush1.msra.mxu0 %v715
        %717 = vmatprep.subr.mxu0 0.0
        %v718 = vand.u32 %v342, 4294901760
        %719 = vmatpush1.msra.mxu0 %v718
        %720 = vmatprep.subr.mxu0 0.0
        %v721 = vand.u32 %v343, 4294901760
        %722 = vmatpush1.msra.mxu0 %v721
        %723 = vmatprep.subr.mxu0 0.0
        %v724 = vand.u32 %v344, 4294901760
        %725 = vmatpush1.msra.mxu0 %v724
        %726 = vmatprep.subr.mxu0 0.0
        %v727 = vand.u32 %v345, 4294901760
        %728 = vmatpush1.msra.mxu0 %v727
        %729 = vmatprep.subr.mxu0 0.0
        %v730 = vand.u32 %v346, 4294901760
        %731 = vmatpush1.msra.mxu0 %v730
        %732 = vmatprep.subr.mxu0 0.0
        %v733 = vand.u32 %v347, 4294901760
        %734 = vmatpush1.msra.mxu0 %v733
        %735 = vmatprep.subr.mxu0 0.0
        %v736 = vand.u32 %v348, 4294901760
        %737 = vmatpush1.msra.mxu0 %v736
        %738 = vmatprep.subr.mxu0 0.0
        %v739 = vand.u32 %v349, 4294901760
        %740 = vmatpush1.msra.mxu0 %v739
        %741 = vmatprep.subr.mxu0 0.0
        %v742 = vand.u32 %v350, 4294901760
        %743 = vmatpush1.msra.mxu0 %v742
        %744 = vmatprep.subr.mxu0 0.0
        %v745 = vand.u32 %v351, 4294901760
        %746 = vmatpush1.msra.mxu0 %v745
        %747 = vmatprep.subr.mxu0 0.0
        %v748 = vand.u32 %v352, 4294901760
        %749 = vmatpush1.msra.mxu0 %v748
        %750 = vmatprep.subr.mxu0 0.0
        %v751 = vand.u32 %v353, 4294901760
        %752 = vmatpush1.msra.mxu0 %v751
        %753 = vmatprep.subr.mxu0 0.0
        %v754 = vand.u32 %v354, 4294901760
        %755 = vmatpush1.msra.mxu0 %v754
        %756 = vmatprep.subr.mxu0 0.0
        %757 = vmatpush1.msra.mxu0 0.0
        %758 = vmatprep.subr.mxu0 0.0
        %759 = vmatpush1.msra.mxu0 0.0
        %760 = vmatprep.subr.mxu0 0.0
        %761 = vmatpush1.msra.mxu0 0.0
        %762 = vmatprep.subr.mxu0 0.0
        %763 = vmatpush1.msra.mxu0 0.0
        %764 = vmatprep.subr.mxu0 0.0
        %765 = vmatpush1.msra.mxu0 0.0
        %766 = vmatprep.subr.mxu0 0.0
        %767 = vmatpush1.msra.mxu0 0.0
        %768 = vmatprep.subr.mxu0 0.0
        %769 = vmatpush1.msra.mxu0 0.0
        %770 = vmatprep.subr.mxu0 0.0
        %771 = vmatpush1.msra.mxu0 0.0
        %772 = vmatprep.subr.mxu0 0.0
        %773 = vmatpush1.msra.mxu0 0.0
        %774 = vmatprep.subr.mxu0 0.0
        %775 = vmatpush1.msra.mxu0 0.0
        %776 = vmatprep.subr.mxu0 0.0
        %777 = vmatpush1.msra.mxu0 0.0
        %778 = vmatprep.subr.mxu0 0.0
        %779 = vmatpush1.msra.mxu0 0.0
        %780 = vmatprep.subr.mxu0 0.0
        %781 = vmatpush1.msra.mxu0 0.0
        %782 = vmatprep.subr.mxu0 0.0
        %783 = vmatpush1.msra.mxu0 0.0
        %784 = vmatprep.subr.mxu0 0.0
        %785 = vmatpush1.msra.mxu0 0.0
        %786 = vmatprep.subr.mxu0 0.0
        %787 = vmatpush1.msra.mxu0 0.0
        %788 = vmatprep.mubr.f32.mxu0 0.0
        %v789 = vand.u32 %v338, 4294901760
        %v790 = vsub.f32 %v338, %v789
        %v791 = vand.u32 %v790, 4294901760
        %792 = vmatmul.mubr.f32.gmra.mrb[0].mxu0 %v791
        %v793 = vpop.f32.mrb[0].mxu0
        %v794 = vadd.f32 %v705, %v793
        %v795 = vpop.f32.mrb[0].mxu0
        %796 = vdwg.mxu0
        %797 = vmatprep.subr.mxu0 0.0
        %v798 = vand.u32 %v339, 4294901760
        %v799 = vsub.f32 %v339, %v798
        %v800 = vand.u32 %v799, 4294901760
        %801 = vmatpush1.msra.mxu0 %v800
        %802 = vmatprep.subr.mxu0 0.0
        %v803 = vand.u32 %v340, 4294901760
        %v804 = vsub.f32 %v340, %v803
        %v805 = vand.u32 %v804, 4294901760
        %806 = vmatpush1.msra.mxu0 %v805
        %807 = vmatprep.subr.mxu0 0.0
        %v808 = vand.u32 %v341, 4294901760
        %v809 = vsub.f32 %v341, %v808
        %v810 = vand.u32 %v809, 4294901760
        %811 = vmatpush1.msra.mxu0 %v810
        %812 = vmatprep.subr.mxu0 0.0
        %v813 = vand.u32 %v342, 4294901760
        %v814 = vsub.f32 %v342, %v813
        %v815 = vand.u32 %v814, 4294901760
        %816 = vmatpush1.msra.mxu0 %v815
        %817 = vmatprep.subr.mxu0 0.0
        %v818 = vand.u32 %v343, 4294901760
        %v819 = vsub.f32 %v343, %v818
        %v820 = vand.u32 %v819, 4294901760
        %821 = vmatpush1.msra.mxu0 %v820
        %822 = vmatprep.subr.mxu0 0.0
        %v823 = vand.u32 %v344, 4294901760
        %v824 = vsub.f32 %v344, %v823
        %v825 = vand.u32 %v824, 4294901760
        %826 = vmatpush1.msra.mxu0 %v825
        %827 = vmatprep.subr.mxu0 0.0
        %v828 = vand.u32 %v345, 4294901760
        %v829 = vsub.f32 %v345, %v828
        %v830 = vand.u32 %v829, 4294901760
        %831 = vmatpush1.msra.mxu0 %v830
        %832 = vmatprep.subr.mxu0 0.0
        %v833 = vand.u32 %v346, 4294901760
        %v834 = vsub.f32 %v346, %v833
        %v835 = vand.u32 %v834, 4294901760
        %836 = vmatpush1.msra.mxu0 %v835
        %837 = vmatprep.subr.mxu0 0.0
        %v838 = vand.u32 %v347, 4294901760
        %v839 = vsub.f32 %v347, %v838
        %v840 = vand.u32 %v839, 4294901760
        %841 = vmatpush1.msra.mxu0 %v840
        %842 = vmatprep.subr.mxu0 0.0
        %v843 = vand.u32 %v348, 4294901760
        %v844 = vsub.f32 %v348, %v843
        %v845 = vand.u32 %v844, 4294901760
        %846 = vmatpush1.msra.mxu0 %v845
        %847 = vmatprep.subr.mxu0 0.0
        %v848 = vand.u32 %v349, 4294901760
        %v849 = vsub.f32 %v349, %v848
        %v850 = vand.u32 %v849, 4294901760
        %851 = vmatpush1.msra.mxu0 %v850
        %852 = vmatprep.subr.mxu0 0.0
        %v853 = vand.u32 %v350, 4294901760
        %v854 = vsub.f32 %v350, %v853
        %v855 = vand.u32 %v854, 4294901760
        %856 = vmatpush1.msra.mxu0 %v855
        %857 = vmatprep.subr.mxu0 0.0
        %v858 = vand.u32 %v351, 4294901760
        %v859 = vsub.f32 %v351, %v858
        %v860 = vand.u32 %v859, 4294901760
        %861 = vmatpush1.msra.mxu0 %v860
        %862 = vmatprep.subr.mxu0 0.0
        %v863 = vand.u32 %v352, 4294901760
        %v864 = vsub.f32 %v352, %v863
        %v865 = vand.u32 %v864, 4294901760
        %866 = vmatpush1.msra.mxu0 %v865
        %867 = vmatprep.subr.mxu0 0.0
        %v868 = vand.u32 %v353, 4294901760
        %v869 = vsub.f32 %v353, %v868
        %v870 = vand.u32 %v869, 4294901760
        %871 = vmatpush1.msra.mxu0 %v870
        %872 = vmatprep.subr.mxu0 0.0
        %v873 = vand.u32 %v354, 4294901760
        %v874 = vsub.f32 %v354, %v873
        %v875 = vand.u32 %v874, 4294901760
        %876 = vmatpush1.msra.mxu0 %v875
        %877 = vmatprep.subr.mxu0 0.0
        %878 = vmatpush1.msra.mxu0 0.0
        %879 = vmatprep.subr.mxu0 0.0
        %880 = vmatpush1.msra.mxu0 0.0
        %881 = vmatprep.subr.mxu0 0.0
        %882 = vmatpush1.msra.mxu0 0.0
        %883 = vmatprep.subr.mxu0 0.0
        %884 = vmatpush1.msra.mxu0 0.0
        %885 = vmatprep.subr.mxu0 0.0
        %886 = vmatpush1.msra.mxu0 0.0
        %887 = vmatprep.subr.mxu0 0.0
        %888 = vmatpush1.msra.mxu0 0.0
        %889 = vmatprep.subr.mxu0 0.0
        %890 = vmatpush1.msra.mxu0 0.0
        %891 = vmatprep.subr.mxu0 0.0
        %892 = vmatpush1.msra.mxu0 0.0
        %893 = vmatprep.subr.mxu0 0.0
        %894 = vmatpush1.msra.mxu0 0.0
        %895 = vmatprep.subr.mxu0 0.0
        %896 = vmatpush1.msra.mxu0 0.0
        %897 = vmatprep.subr.mxu0 0.0
        %898 = vmatpush1.msra.mxu0 0.0
        %899 = vmatprep.subr.mxu0 0.0
        %900 = vmatpush1.msra.mxu0 0.0
        %901 = vmatprep.subr.mxu0 0.0
        %902 = vmatpush1.msra.mxu0 0.0
        %903 = vmatprep.subr.mxu0 0.0
        %904 = vmatpush1.msra.mxu0 0.0
        %905 = vmatprep.subr.mxu0 0.0
        %906 = vmatpush1.msra.mxu0 0.0
        %907 = vmatprep.subr.mxu0 0.0
        %908 = vmatpush1.msra.mxu0 0.0
        %909 = vmatprep.mubr.f32.mxu0 0.0
        %v910 = vand.u32 %v338, 4294901760
        %911 = vmatmul.mubr.f32.gmra.mrb[0].mxu0 %v910
        %v912 = vpop.f32.mrb[0].mxu0
        %v913 = vadd.f32 %v794, %v912
        %v914 = vpop.f32.mrb[0].mxu0
        %915 = vdwg.mxu0
        %916 = vmatprep.subr.mxu0 0.0
        %v917 = vand.u32 %v339, 4294901760
        %918 = vmatpush1.msra.mxu0 %v917
        %919 = vmatprep.subr.mxu0 0.0
        %v920 = vand.u32 %v340, 4294901760
        %921 = vmatpush1.msra.mxu0 %v920
        %922 = vmatprep.subr.mxu0 0.0
        %v923 = vand.u32 %v341, 4294901760
        %924 = vmatpush1.msra.mxu0 %v923
        %925 = vmatprep.subr.mxu0 0.0
        %v926 = vand.u32 %v342, 4294901760
        %927 = vmatpush1.msra.mxu0 %v926
        %928 = vmatprep.subr.mxu0 0.0
        %v929 = vand.u32 %v343, 4294901760
        %930 = vmatpush1.msra.mxu0 %v929
        %931 = vmatprep.subr.mxu0 0.0
        %v932 = vand.u32 %v344, 4294901760
        %933 = vmatpush1.msra.mxu0 %v932
        %934 = vmatprep.subr.mxu0 0.0
        %v935 = vand.u32 %v345, 4294901760
        %936 = vmatpush1.msra.mxu0 %v935
        %937 = vmatprep.subr.mxu0 0.0
        %v938 = vand.u32 %v346, 4294901760
        %939 = vmatpush1.msra.mxu0 %v938
        %940 = vmatprep.subr.mxu0 0.0
        %v941 = vand.u32 %v347, 4294901760
        %942 = vmatpush1.msra.mxu0 %v941
        %943 = vmatprep.subr.mxu0 0.0
        %v944 = vand.u32 %v348, 4294901760
        %945 = vmatpush1.msra.mxu0 %v944
        %946 = vmatprep.subr.mxu0 0.0
        %v947 = vand.u32 %v349, 4294901760
        %948 = vmatpush1.msra.mxu0 %v947
        %949 = vmatprep.subr.mxu0 0.0
        %v950 = vand.u32 %v350, 4294901760
        %951 = vmatpush1.msra.mxu0 %v950
        %952 = vmatprep.subr.mxu0 0.0
        %v953 = vand.u32 %v351, 4294901760
        %954 = vmatpush1.msra.mxu0 %v953
        %955 = vmatprep.subr.mxu0 0.0
        %v956 = vand.u32 %v352, 4294901760
        %957 = vmatpush1.msra.mxu0 %v956
        %958 = vmatprep.subr.mxu0 0.0
        %v959 = vand.u32 %v353, 4294901760
        %960 = vmatpush1.msra.mxu0 %v959
        %961 = vmatprep.subr.mxu0 0.0
        %v962 = vand.u32 %v354, 4294901760
        %963 = vmatpush1.msra.mxu0 %v962
        %964 = vmatprep.subr.mxu0 0.0
        %965 = vmatpush1.msra.mxu0 0.0
        %966 = vmatprep.subr.mxu0 0.0
        %967 = vmatpush1.msra.mxu0 0.0
        %968 = vmatprep.subr.mxu0 0.0
        %969 = vmatpush1.msra.mxu0 0.0
        %970 = vmatprep.subr.mxu0 0.0
        %971 = vmatpush1.msra.mxu0 0.0
        %972 = vmatprep.subr.mxu0 0.0
        %973 = vmatpush1.msra.mxu0 0.0
        %974 = vmatprep.subr.mxu0 0.0
        %975 = vmatpush1.msra.mxu0 0.0
        %976 = vmatprep.subr.mxu0 0.0
        %977 = vmatpush1.msra.mxu0 0.0
        %978 = vmatprep.subr.mxu0 0.0
        %979 = vmatpush1.msra.mxu0 0.0
        %980 = vmatprep.subr.mxu0 0.0
        %981 = vmatpush1.msra.mxu0 0.0
        %982 = vmatprep.subr.mxu0 0.0
        %983 = vmatpush1.msra.mxu0 0.0
        %984 = vmatprep.subr.mxu0 0.0
        %985 = vmatpush1.msra.mxu0 0.0
        %986 = vmatprep.subr.mxu0 0.0
        %987 = vmatpush1.msra.mxu0 0.0
        %988 = vmatprep.subr.mxu0 0.0
        %989 = vmatpush1.msra.mxu0 0.0
        %990 = vmatprep.subr.mxu0 0.0
        %991 = vmatpush1.msra.mxu0 0.0
        %992 = vmatprep.subr.mxu0 0.0
        %993 = vmatpush1.msra.mxu0 0.0
        %994 = vmatprep.subr.mxu0 0.0
        %995 = vmatpush1.msra.mxu0 0.0
        %996 = vmatprep.mubr.f32.mxu0 0.0
        %v997 = vand.u32 %v338, 4294901760
        %998 = vmatmul.mubr.f32.gmra.mrb[0].mxu0 %v997
        %v999 = vpop.f32.mrb[0].mxu0
        %v1000 = vadd.f32 %v913, %v999
        %v1001 = vpop.f32.mrb[0].mxu0
        %1002 = vdwg.mxu0
        %v1003 = vmax.f32 %v1000, 0.0
        %v1004 = vld [vmem:[#allocation7] sm:$0xff]
        %v1005 = vld [vmem:[#allocation7 + $0x8] sm:$0xff]
        %v1006 = vld [vmem:[#allocation7 + $0x10] sm:$0xff]
        %v1007 = vld [vmem:[#allocation7 + $0x18] sm:$0xff]
        %v1008 = vld [vmem:[#allocation7 + $0x20] sm:$0xff]
        %v1009 = vld [vmem:[#allocation7 + $0x28] sm:$0xff]
        %v1010 = vld [vmem:[#allocation7 + $0x30] sm:$0xff]
        %v1011 = vld [vmem:[#allocation7 + $0x38] sm:$0xff]
        %v1012 = vld [vmem:[#allocation7 + $0x40] sm:$0xff]
        %v1013 = vld [vmem:[#allocation7 + $0x48] sm:$0xff]
        %v1014 = vld [vmem:[#allocation7 + $0x50] sm:$0xff]
        %v1015 = vld [vmem:[#allocation7 + $0x58] sm:$0xff]
        %v1016 = vld [vmem:[#allocation7 + $0x60] sm:$0xff]
        %v1017 = vld [vmem:[#allocation7 + $0x68] sm:$0xff]
        %v1018 = vld [vmem:[#allocation7 + $0x70] sm:$0xff]
        %v1019 = vld [vmem:[#allocation7 + $0x78] sm:$0xff]
        %v1020 = vld [vmem:[%s4] sm:$0x1]
        %v1022 = vlaneseq
        %v1023 = vshrl.u32 %v1022, 7
        %v1024 = vsub.s32 0, %v1023
        %v1025 = vrot.slane %v1020, %v1024
        %1027 = vmatprep.subr.mxu0 0.0
        %v1028 = vand.u32 %v1004, 4294901760
        %1029 = vmatpush1.msra.mxu0 %v1028
        %1030 = vmatprep.subr.mxu0 0.0
        %v1031 = vand.u32 %v1005, 4294901760
        %1032 = vmatpush1.msra.mxu0 %v1031
        %1033 = vmatprep.subr.mxu0 0.0
        %v1034 = vand.u32 %v1006, 4294901760
        %1035 = vmatpush1.msra.mxu0 %v1034
        %1036 = vmatprep.subr.mxu0 0.0
        %v1037 = vand.u32 %v1007, 4294901760
        %1038 = vmatpush1.msra.mxu0 %v1037
        %1039 = vmatprep.subr.mxu0 0.0
        %v1040 = vand.u32 %v1008, 4294901760
        %1041 = vmatpush1.msra.mxu0 %v1040
        %1042 = vmatprep.subr.mxu0 0.0
        %v1043 = vand.u32 %v1009, 4294901760
        %1044 = vmatpush1.msra.mxu0 %v1043
        %1045 = vmatprep.subr.mxu0 0.0
        %v1046 = vand.u32 %v1010, 4294901760
        %1047 = vmatpush1.msra.mxu0 %v1046
        %1048 = vmatprep.subr.mxu0 0.0
        %v1049 = vand.u32 %v1011, 4294901760
        %1050 = vmatpush1.msra.mxu0 %v1049
        %1051 = vmatprep.subr.mxu0 0.0
        %v1052 = vand.u32 %v1012, 4294901760
        %1053 = vmatpush1.msra.mxu0 %v1052
        %1054 = vmatprep.subr.mxu0 0.0
        %v1055 = vand.u32 %v1013, 4294901760
        %1056 = vmatpush1.msra.mxu0 %v1055
        %1057 = vmatprep.subr.mxu0 0.0
        %v1058 = vand.u32 %v1014, 4294901760
        %1059 = vmatpush1.msra.mxu0 %v1058
        %1060 = vmatprep.subr.mxu0 0.0
        %v1061 = vand.u32 %v1015, 4294901760
        %1062 = vmatpush1.msra.mxu0 %v1061
        %1063 = vmatprep.subr.mxu0 0.0
        %v1064 = vand.u32 %v1016, 4294901760
        %1065 = vmatpush1.msra.mxu0 %v1064
        %1066 = vmatprep.subr.mxu0 0.0
        %v1067 = vand.u32 %v1017, 4294901760
        %1068 = vmatpush1.msra.mxu0 %v1067
        %1069 = vmatprep.subr.mxu0 0.0
        %v1070 = vand.u32 %v1018, 4294901760
        %1071 = vmatpush1.msra.mxu0 %v1070
        %1072 = vmatprep.subr.mxu0 0.0
        %v1073 = vand.u32 %v1019, 4294901760
        %1074 = vmatpush1.msra.mxu0 %v1073
        %1075 = vmatprep.subr.mxu0 0.0
        %1076 = vmatpush1.msra.mxu0 0.0
        %1077 = vmatprep.subr.mxu0 0.0
        %1078 = vmatpush1.msra.mxu0 0.0
        %1079 = vmatprep.subr.mxu0 0.0
        %1080 = vmatpush1.msra.mxu0 0.0
        %1081 = vmatprep.subr.mxu0 0.0
        %1082 = vmatpush1.msra.mxu0 0.0
        %1083 = vmatprep.subr.mxu0 0.0
        %1084 = vmatpush1.msra.mxu0 0.0
        %1085 = vmatprep.subr.mxu0 0.0
        %1086 = vmatpush1.msra.mxu0 0.0
        %1087 = vmatprep.subr.mxu0 0.0
        %1088 = vmatpush1.msra.mxu0 0.0
        %1089 = vmatprep.subr.mxu0 0.0
        %1090 = vmatpush1.msra.mxu0 0.0
        %1091 = vmatprep.subr.mxu0 0.0
        %1092 = vmatpush1.msra.mxu0 0.0
        %1093 = vmatprep.subr.mxu0 0.0
        %1094 = vmatpush1.msra.mxu0 0.0
        %1095 = vmatprep.subr.mxu0 0.0
        %1096 = vmatpush1.msra.mxu0 0.0
        %1097 = vmatprep.subr.mxu0 0.0
        %1098 = vmatpush1.msra.mxu0 0.0
        %1099 = vmatprep.subr.mxu0 0.0
        %1100 = vmatpush1.msra.mxu0 0.0
        %1101 = vmatprep.subr.mxu0 0.0
        %1102 = vmatpush1.msra.mxu0 0.0
        %1103 = vmatprep.subr.mxu0 0.0
        %1104 = vmatpush1.msra.mxu0 0.0
        %1105 = vmatprep.subr.mxu0 0.0
        %1106 = vmatpush1.msra.mxu0 0.0
        %1107 = vmatprep.mubr.f32.mxu0 0.0
        %v1108 = vand.u32 %v1003, 4294901760
        %v1109 = vsub.f32 %v1003, %v1108
        %v1110 = vand.u32 %v1109, 4294901760
        %v1111 = vsub.f32 %v1109, %v1110
        %v1112 = vand.u32 %v1111, 4294901760
        %1113 = vmatmul.mubr.f32.gmra.mrb[0].mxu0 %v1112
        %v1114 = vpop.f32.mrb[0].mxu0
        %v1115 = vadd.f32 %v1025, %v1114
        %v1116 = vpop.f32.mrb[0].mxu0
        %1117 = vdwg.mxu0
        %1118 = vmatprep.subr.mxu0 0.0
        %v1119 = vand.u32 %v1004, 4294901760
        %v1120 = vsub.f32 %v1004, %v1119
        %v1121 = vand.u32 %v1120, 4294901760
        %v1122 = vsub.f32 %v1120, %v1121
        %v1123 = vand.u32 %v1122, 4294901760
        %1124 = vmatpush1.msra.mxu0 %v1123
        %1125 = vmatprep.subr.mxu0 0.0
        %v1126 = vand.u32 %v1005, 4294901760
        %v1127 = vsub.f32 %v1005, %v1126
        %v1128 = vand.u32 %v1127, 4294901760
        %v1129 = vsub.f32 %v1127, %v1128
        %v1130 = vand.u32 %v1129, 4294901760
        %1131 = vmatpush1.msra.mxu0 %v1130
        %1132 = vmatprep.subr.mxu0 0.0
        %v1133 = vand.u32 %v1006, 4294901760
        %v1134 = vsub.f32 %v1006, %v1133
        %v1135 = vand.u32 %v1134, 4294901760
        %v1136 = vsub.f32 %v1134, %v1135
        %v1137 = vand.u32 %v1136, 4294901760
        %1138 = vmatpush1.msra.mxu0 %v1137
        %1139 = vmatprep.subr.mxu0 0.0
        %v1140 = vand.u32 %v1007, 4294901760
        %v1141 = vsub.f32 %v1007, %v1140
        %v1142 = vand.u32 %v1141, 4294901760
        %v1143 = vsub.f32 %v1141, %v1142
        %v1144 = vand.u32 %v1143, 4294901760
        %1145 = vmatpush1.msra.mxu0 %v1144
        %1146 = vmatprep.subr.mxu0 0.0
        %v1147 = vand.u32 %v1008, 4294901760
        %v1148 = vsub.f32 %v1008, %v1147
        %v1149 = vand.u32 %v1148, 4294901760
        %v1150 = vsub.f32 %v1148, %v1149
        %v1151 = vand.u32 %v1150, 4294901760
        %1152 = vmatpush1.msra.mxu0 %v1151
        %1153 = vmatprep.subr.mxu0 0.0
        %v1154 = vand.u32 %v1009, 4294901760
        %v1155 = vsub.f32 %v1009, %v1154
        %v1156 = vand.u32 %v1155, 4294901760
        %v1157 = vsub.f32 %v1155, %v1156
        %v1158 = vand.u32 %v1157, 4294901760
        %1159 = vmatpush1.msra.mxu0 %v1158
        %1160 = vmatprep.subr.mxu0 0.0
        %v1161 = vand.u32 %v1010, 4294901760
        %v1162 = vsub.f32 %v1010, %v1161
        %v1163 = vand.u32 %v1162, 4294901760
        %v1164 = vsub.f32 %v1162, %v1163
        %v1165 = vand.u32 %v1164, 4294901760
        %1166 = vmatpush1.msra.mxu0 %v1165
        %1167 = vmatprep.subr.mxu0 0.0
        %v1168 = vand.u32 %v1011, 4294901760
        %v1169 = vsub.f32 %v1011, %v1168
        %v1170 = vand.u32 %v1169, 4294901760
        %v1171 = vsub.f32 %v1169, %v1170
        %v1172 = vand.u32 %v1171, 4294901760
        %1173 = vmatpush1.msra.mxu0 %v1172
        %1174 = vmatprep.subr.mxu0 0.0
        %v1175 = vand.u32 %v1012, 4294901760
        %v1176 = vsub.f32 %v1012, %v1175
        %v1177 = vand.u32 %v1176, 4294901760
        %v1178 = vsub.f32 %v1176, %v1177
        %v1179 = vand.u32 %v1178, 4294901760
        %1180 = vmatpush1.msra.mxu0 %v1179
        %1181 = vmatprep.subr.mxu0 0.0
        %v1182 = vand.u32 %v1013, 4294901760
        %v1183 = vsub.f32 %v1013, %v1182
        %v1184 = vand.u32 %v1183, 4294901760
        %v1185 = vsub.f32 %v1183, %v1184
        %v1186 = vand.u32 %v1185, 4294901760
        %1187 = vmatpush1.msra.mxu0 %v1186
        %1188 = vmatprep.subr.mxu0 0.0
        %v1189 = vand.u32 %v1014, 4294901760
        %v1190 = vsub.f32 %v1014, %v1189
        %v1191 = vand.u32 %v1190, 4294901760
        %v1192 = vsub.f32 %v1190, %v1191
        %v1193 = vand.u32 %v1192, 4294901760
        %1194 = vmatpush1.msra.mxu0 %v1193
        %1195 = vmatprep.subr.mxu0 0.0
        %v1196 = vand.u32 %v1015, 4294901760
        %v1197 = vsub.f32 %v1015, %v1196
        %v1198 = vand.u32 %v1197, 4294901760
        %v1199 = vsub.f32 %v1197, %v1198
        %v1200 = vand.u32 %v1199, 4294901760
        %1201 = vmatpush1.msra.mxu0 %v1200
        %1202 = vmatprep.subr.mxu0 0.0
        %v1203 = vand.u32 %v1016, 4294901760
        %v1204 = vsub.f32 %v1016, %v1203
        %v1205 = vand.u32 %v1204, 4294901760
        %v1206 = vsub.f32 %v1204, %v1205
        %v1207 = vand.u32 %v1206, 4294901760
        %1208 = vmatpush1.msra.mxu0 %v1207
        %1209 = vmatprep.subr.mxu0 0.0
        %v1210 = vand.u32 %v1017, 4294901760
        %v1211 = vsub.f32 %v1017, %v1210
        %v1212 = vand.u32 %v1211, 4294901760
        %v1213 = vsub.f32 %v1211, %v1212
        %v1214 = vand.u32 %v1213, 4294901760
        %1215 = vmatpush1.msra.mxu0 %v1214
        %1216 = vmatprep.subr.mxu0 0.0
        %v1217 = vand.u32 %v1018, 4294901760
        %v1218 = vsub.f32 %v1018, %v1217
        %v1219 = vand.u32 %v1218, 4294901760
        %v1220 = vsub.f32 %v1218, %v1219
        %v1221 = vand.u32 %v1220, 4294901760
        %1222 = vmatpush1.msra.mxu0 %v1221
        %1223 = vmatprep.subr.mxu0 0.0
        %v1224 = vand.u32 %v1019, 4294901760
        %v1225 = vsub.f32 %v1019, %v1224
        %v1226 = vand.u32 %v1225, 4294901760
        %v1227 = vsub.f32 %v1225, %v1226
        %v1228 = vand.u32 %v1227, 4294901760
        %1229 = vmatpush1.msra.mxu0 %v1228
        %1230 = vmatprep.subr.mxu0 0.0
        %1231 = vmatpush1.msra.mxu0 0.0
        %1232 = vmatprep.subr.mxu0 0.0
        %1233 = vmatpush1.msra.mxu0 0.0
        %1234 = vmatprep.subr.mxu0 0.0
        %1235 = vmatpush1.msra.mxu0 0.0
        %1236 = vmatprep.subr.mxu0 0.0
        %1237 = vmatpush1.msra.mxu0 0.0
        %1238 = vmatprep.subr.mxu0 0.0
        %1239 = vmatpush1.msra.mxu0 0.0
        %1240 = vmatprep.subr.mxu0 0.0
        %1241 = vmatpush1.msra.mxu0 0.0
        %1242 = vmatprep.subr.mxu0 0.0
        %1243 = vmatpush1.msra.mxu0 0.0
        %1244 = vmatprep.subr.mxu0 0.0
        %1245 = vmatpush1.msra.mxu0 0.0
        %1246 = vmatprep.subr.mxu0 0.0
        %1247 = vmatpush1.msra.mxu0 0.0
        %1248 = vmatprep.subr.mxu0 0.0
        %1249 = vmatpush1.msra.mxu0 0.0
        %1250 = vmatprep.subr.mxu0 0.0
        %1251 = vmatpush1.msra.mxu0 0.0
        %1252 = vmatprep.subr.mxu0 0.0
        %1253 = vmatpush1.msra.mxu0 0.0
        %1254 = vmatprep.subr.mxu0 0.0
        %1255 = vmatpush1.msra.mxu0 0.0
        %1256 = vmatprep.subr.mxu0 0.0
        %1257 = vmatpush1.msra.mxu0 0.0
        %1258 = vmatprep.subr.mxu0 0.0
        %1259 = vmatpush1.msra.mxu0 0.0
        %1260 = vmatprep.subr.mxu0 0.0
        %1261 = vmatpush1.msra.mxu0 0.0
        %1262 = vmatprep.mubr.f32.mxu0 0.0
        %v1263 = vand.u32 %v1003, 4294901760
        %1264 = vmatmul.mubr.f32.gmra.mrb[0].mxu0 %v1263
        %v1265 = vpop.f32.mrb[0].mxu0
        %v1266 = vadd.f32 %v1115, %v1265
        %v1267 = vpop.f32.mrb[0].mxu0
        %1268 = vdwg.mxu0
        %1269 = vmatprep.subr.mxu0 0.0
        %v1270 = vand.u32 %v1004, 4294901760
        %v1271 = vsub.f32 %v1004, %v1270
        %1272 = vmatpush1.msra.mxu0 %v1271
        %1273 = vmatprep.subr.mxu0 0.0
        %v1274 = vand.u32 %v1005, 4294901760
        %v1275 = vsub.f32 %v1005, %v1274
        %1276 = vmatpush1.msra.mxu0 %v1275
        %1277 = vmatprep.subr.mxu0 0.0
        %v1278 = vand.u32 %v1006, 4294901760
        %v1279 = vsub.f32 %v1006, %v1278
        %1280 = vmatpush1.msra.mxu0 %v1279
        %1281 = vmatprep.subr.mxu0 0.0
        %v1282 = vand.u32 %v1007, 4294901760
        %v1283 = vsub.f32 %v1007, %v1282
        %1284 = vmatpush1.msra.mxu0 %v1283
        %1285 = vmatprep.subr.mxu0 0.0
        %v1286 = vand.u32 %v1008, 4294901760
        %v1287 = vsub.f32 %v1008, %v1286
        %1288 = vmatpush1.msra.mxu0 %v1287
        %1289 = vmatprep.subr.mxu0 0.0
        %v1290 = vand.u32 %v1009, 4294901760
        %v1291 = vsub.f32 %v1009, %v1290
        %1292 = vmatpush1.msra.mxu0 %v1291
        %1293 = vmatprep.subr.mxu0 0.0
        %v1294 = vand.u32 %v1010, 4294901760
        %v1295 = vsub.f32 %v1010, %v1294
        %1296 = vmatpush1.msra.mxu0 %v1295
        %1297 = vmatprep.subr.mxu0 0.0
        %v1298 = vand.u32 %v1011, 4294901760
        %v1299 = vsub.f32 %v1011, %v1298
        %1300 = vmatpush1.msra.mxu0 %v1299
        %1301 = vmatprep.subr.mxu0 0.0
        %v1302 = vand.u32 %v1012, 4294901760
        %v1303 = vsub.f32 %v1012, %v1302
        %1304 = vmatpush1.msra.mxu0 %v1303
        %1305 = vmatprep.subr.mxu0 0.0
        %v1306 = vand.u32 %v1013, 4294901760
        %v1307 = vsub.f32 %v1013, %v1306
        %1308 = vmatpush1.msra.mxu0 %v1307
        %1309 = vmatprep.subr.mxu0 0.0
        %v1310 = vand.u32 %v1014, 4294901760
        %v1311 = vsub.f32 %v1014, %v1310
        %1312 = vmatpush1.msra.mxu0 %v1311
        %1313 = vmatprep.subr.mxu0 0.0
        %v1314 = vand.u32 %v1015, 4294901760
        %v1315 = vsub.f32 %v1015, %v1314
        %1316 = vmatpush1.msra.mxu0 %v1315
        %1317 = vmatprep.subr.mxu0 0.0
        %v1318 = vand.u32 %v1016, 4294901760
        %v1319 = vsub.f32 %v1016, %v1318
        %1320 = vmatpush1.msra.mxu0 %v1319
        %1321 = vmatprep.subr.mxu0 0.0
        %v1322 = vand.u32 %v1017, 4294901760
        %v1323 = vsub.f32 %v1017, %v1322
        %1324 = vmatpush1.msra.mxu0 %v1323
        %1325 = vmatprep.subr.mxu0 0.0
        %v1326 = vand.u32 %v1018, 4294901760
        %v1327 = vsub.f32 %v1018, %v1326
        %1328 = vmatpush1.msra.mxu0 %v1327
        %1329 = vmatprep.subr.mxu0 0.0
        %v1330 = vand.u32 %v1019, 4294901760
        %v1331 = vsub.f32 %v1019, %v1330
        %1332 = vmatpush1.msra.mxu0 %v1331
        %1333 = vmatprep.subr.mxu0 0.0
        %1334 = vmatpush1.msra.mxu0 0.0
        %1335 = vmatprep.subr.mxu0 0.0
        %1336 = vmatpush1.msra.mxu0 0.0
        %1337 = vmatprep.subr.mxu0 0.0
        %1338 = vmatpush1.msra.mxu0 0.0
        %1339 = vmatprep.subr.mxu0 0.0
        %1340 = vmatpush1.msra.mxu0 0.0
        %1341 = vmatprep.subr.mxu0 0.0
        %1342 = vmatpush1.msra.mxu0 0.0
        %1343 = vmatprep.subr.mxu0 0.0
        %1344 = vmatpush1.msra.mxu0 0.0
        %1345 = vmatprep.subr.mxu0 0.0
        %1346 = vmatpush1.msra.mxu0 0.0
        %1347 = vmatprep.subr.mxu0 0.0
        %1348 = vmatpush1.msra.mxu0 0.0
        %1349 = vmatprep.subr.mxu0 0.0
        %1350 = vmatpush1.msra.mxu0 0.0
        %1351 = vmatprep.subr.mxu0 0.0
        %1352 = vmatpush1.msra.mxu0 0.0
        %1353 = vmatprep.subr.mxu0 0.0
        %1354 = vmatpush1.msra.mxu0 0.0
        %1355 = vmatprep.subr.mxu0 0.0
        %1356 = vmatpush1.msra.mxu0 0.0
        %1357 = vmatprep.subr.mxu0 0.0
        %1358 = vmatpush1.msra.mxu0 0.0
        %1359 = vmatprep.subr.mxu0 0.0
        %1360 = vmatpush1.msra.mxu0 0.0
        %1361 = vmatprep.subr.mxu0 0.0
        %1362 = vmatpush1.msra.mxu0 0.0
        %1363 = vmatprep.subr.mxu0 0.0
        %1364 = vmatpush1.msra.mxu0 0.0
        %1365 = vmatprep.mubr.f32.mxu0 0.0
        %v1366 = vand.u32 %v1003, 4294901760
        %v1367 = vsub.f32 %v1003, %v1366
        %1368 = vmatmul.mubr.f32.gmra.mrb[0].mxu0 %v1367
        %v1369 = vpop.f32.mrb[0].mxu0
        %v1370 = vadd.f32 %v1266, %v1369
        %v1371 = vpop.f32.mrb[0].mxu0
        %1372 = vdwg.mxu0
        %1373 = vmatprep.subr.mxu0 0.0
        %v1374 = vand.u32 %v1004, 4294901760
        %1375 = vmatpush1.msra.mxu0 %v1374
        %1376 = vmatprep.subr.mxu0 0.0
        %v1377 = vand.u32 %v1005, 4294901760
        %1378 = vmatpush1.msra.mxu0 %v1377
        %1379 = vmatprep.subr.mxu0 0.0
        %v1380 = vand.u32 %v1006, 4294901760
        %1381 = vmatpush1.msra.mxu0 %v1380
        %1382 = vmatprep.subr.mxu0 0.0
        %v1383 = vand.u32 %v1007, 4294901760
        %1384 = vmatpush1.msra.mxu0 %v1383
        %1385 = vmatprep.subr.mxu0 0.0
        %v1386 = vand.u32 %v1008, 4294901760
        %1387 = vmatpush1.msra.mxu0 %v1386
        %1388 = vmatprep.subr.mxu0 0.0
        %v1389 = vand.u32 %v1009, 4294901760
        %1390 = vmatpush1.msra.mxu0 %v1389
        %1391 = vmatprep.subr.mxu0 0.0
        %v1392 = vand.u32 %v1010, 4294901760
        %1393 = vmatpush1.msra.mxu0 %v1392
        %1394 = vmatprep.subr.mxu0 0.0
        %v1395 = vand.u32 %v1011, 4294901760
        %1396 = vmatpush1.msra.mxu0 %v1395
        %1397 = vmatprep.subr.mxu0 0.0
        %v1398 = vand.u32 %v1012, 4294901760
        %1399 = vmatpush1.msra.mxu0 %v1398
        %1400 = vmatprep.subr.mxu0 0.0
        %v1401 = vand.u32 %v1013, 4294901760
        %1402 = vmatpush1.msra.mxu0 %v1401
        %1403 = vmatprep.subr.mxu0 0.0
        %v1404 = vand.u32 %v1014, 4294901760
        %1405 = vmatpush1.msra.mxu0 %v1404
        %1406 = vmatprep.subr.mxu0 0.0
        %v1407 = vand.u32 %v1015, 4294901760
        %1408 = vmatpush1.msra.mxu0 %v1407
        %1409 = vmatprep.subr.mxu0 0.0
        %v1410 = vand.u32 %v1016, 4294901760
        %1411 = vmatpush1.msra.mxu0 %v1410
        %1412 = vmatprep.subr.mxu0 0.0
        %v1413 = vand.u32 %v1017, 4294901760
        %1414 = vmatpush1.msra.mxu0 %v1413
        %1415 = vmatprep.subr.mxu0 0.0
        %v1416 = vand.u32 %v1018, 4294901760
        %1417 = vmatpush1.msra.mxu0 %v1416
        %1418 = vmatprep.subr.mxu0 0.0
        %v1419 = vand.u32 %v1019, 4294901760
        %1420 = vmatpush1.msra.mxu0 %v1419
        %1421 = vmatprep.subr.mxu0 0.0
        %1422 = vmatpush1.msra.mxu0 0.0
        %1423 = vmatprep.subr.mxu0 0.0
        %1424 = vmatpush1.msra.mxu0 0.0
        %1425 = vmatprep.subr.mxu0 0.0
        %1426 = vmatpush1.msra.mxu0 0.0
        %1427 = vmatprep.subr.mxu0 0.0
        %1428 = vmatpush1.msra.mxu0 0.0
        %1429 = vmatprep.subr.mxu0 0.0
        %1430 = vmatpush1.msra.mxu0 0.0
        %1431 = vmatprep.subr.mxu0 0.0
        %1432 = vmatpush1.msra.mxu0 0.0
        %1433 = vmatprep.subr.mxu0 0.0
        %1434 = vmatpush1.msra.mxu0 0.0
        %1435 = vmatprep.subr.mxu0 0.0
        %1436 = vmatpush1.msra.mxu0 0.0
        %1437 = vmatprep.subr.mxu0 0.0
        %1438 = vmatpush1.msra.mxu0 0.0
        %1439 = vmatprep.subr.mxu0 0.0
        %1440 = vmatpush1.msra.mxu0 0.0
        %1441 = vmatprep.subr.mxu0 0.0
        %1442 = vmatpush1.msra.mxu0 0.0
        %1443 = vmatprep.subr.mxu0 0.0
        %1444 = vmatpush1.msra.mxu0 0.0
        %1445 = vmatprep.subr.mxu0 0.0
        %1446 = vmatpush1.msra.mxu0 0.0
        %1447 = vmatprep.subr.mxu0 0.0
        %1448 = vmatpush1.msra.mxu0 0.0
        %1449 = vmatprep.subr.mxu0 0.0
        %1450 = vmatpush1.msra.mxu0 0.0
        %1451 = vmatprep.subr.mxu0 0.0
        %1452 = vmatpush1.msra.mxu0 0.0
        %1453 = vmatprep.mubr.f32.mxu0 0.0
        %v1454 = vand.u32 %v1003, 4294901760
        %v1455 = vsub.f32 %v1003, %v1454
        %v1456 = vand.u32 %v1455, 4294901760
        %1457 = vmatmul.mubr.f32.gmra.mrb[0].mxu0 %v1456
        %v1458 = vpop.f32.mrb[0].mxu0
        %v1459 = vadd.f32 %v1370, %v1458
        %v1460 = vpop.f32.mrb[0].mxu0
        %1461 = vdwg.mxu0
        %1462 = vmatprep.subr.mxu0 0.0
        %v1463 = vand.u32 %v1004, 4294901760
        %v1464 = vsub.f32 %v1004, %v1463
        %v1465 = vand.u32 %v1464, 4294901760
        %1466 = vmatpush1.msra.mxu0 %v1465
        %1467 = vmatprep.subr.mxu0 0.0
        %v1468 = vand.u32 %v1005, 4294901760
        %v1469 = vsub.f32 %v1005, %v1468
        %v1470 = vand.u32 %v1469, 4294901760
        %1471 = vmatpush1.msra.mxu0 %v1470
        %1472 = vmatprep.subr.mxu0 0.0
        %v1473 = vand.u32 %v1006, 4294901760
        %v1474 = vsub.f32 %v1006, %v1473
        %v1475 = vand.u32 %v1474, 4294901760
        %1476 = vmatpush1.msra.mxu0 %v1475
        %1477 = vmatprep.subr.mxu0 0.0
        %v1478 = vand.u32 %v1007, 4294901760
        %v1479 = vsub.f32 %v1007, %v1478
        %v1480 = vand.u32 %v1479, 4294901760
        %1481 = vmatpush1.msra.mxu0 %v1480
        %1482 = vmatprep.subr.mxu0 0.0
        %v1483 = vand.u32 %v1008, 4294901760
        %v1484 = vsub.f32 %v1008, %v1483
        %v1485 = vand.u32 %v1484, 4294901760
        %1486 = vmatpush1.msra.mxu0 %v1485
        %1487 = vmatprep.subr.mxu0 0.0
        %v1488 = vand.u32 %v1009, 4294901760
        %v1489 = vsub.f32 %v1009, %v1488
        %v1490 = vand.u32 %v1489, 4294901760
        %1491 = vmatpush1.msra.mxu0 %v1490
        %1492 = vmatprep.subr.mxu0 0.0
        %v1493 = vand.u32 %v1010, 4294901760
        %v1494 = vsub.f32 %v1010, %v1493
        %v1495 = vand.u32 %v1494, 4294901760
        %1496 = vmatpush1.msra.mxu0 %v1495
        %1497 = vmatprep.subr.mxu0 0.0
        %v1498 = vand.u32 %v1011, 4294901760
        %v1499 = vsub.f32 %v1011, %v1498
        %v1500 = vand.u32 %v1499, 4294901760
        %1501 = vmatpush1.msra.mxu0 %v1500
        %1502 = vmatprep.subr.mxu0 0.0
        %v1503 = vand.u32 %v1012, 4294901760
        %v1504 = vsub.f32 %v1012, %v1503
        %v1505 = vand.u32 %v1504, 4294901760
        %1506 = vmatpush1.msra.mxu0 %v1505
        %1507 = vmatprep.subr.mxu0 0.0
        %v1508 = vand.u32 %v1013, 4294901760
        %v1509 = vsub.f32 %v1013, %v1508
        %v1510 = vand.u32 %v1509, 4294901760
        %1511 = vmatpush1.msra.mxu0 %v1510
        %1512 = vmatprep.subr.mxu0 0.0
        %v1513 = vand.u32 %v1014, 4294901760
        %v1514 = vsub.f32 %v1014, %v1513
        %v1515 = vand.u32 %v1514, 4294901760
        %1516 = vmatpush1.msra.mxu0 %v1515
        %1517 = vmatprep.subr.mxu0 0.0
        %v1518 = vand.u32 %v1015, 4294901760
        %v1519 = vsub.f32 %v1015, %v1518
        %v1520 = vand.u32 %v1519, 4294901760
        %1521 = vmatpush1.msra.mxu0 %v1520
        %1522 = vmatprep.subr.mxu0 0.0
        %v1523 = vand.u32 %v1016, 4294901760
        %v1524 = vsub.f32 %v1016, %v1523
        %v1525 = vand.u32 %v1524, 4294901760
        %1526 = vmatpush1.msra.mxu0 %v1525
        %1527 = vmatprep.subr.mxu0 0.0
        %v1528 = vand.u32 %v1017, 4294901760
        %v1529 = vsub.f32 %v1017, %v1528
        %v1530 = vand.u32 %v1529, 4294901760
        %1531 = vmatpush1.msra.mxu0 %v1530
        %1532 = vmatprep.subr.mxu0 0.0
        %v1533 = vand.u32 %v1018, 4294901760
        %v1534 = vsub.f32 %v1018, %v1533
        %v1535 = vand.u32 %v1534, 4294901760
        %1536 = vmatpush1.msra.mxu0 %v1535
        %1537 = vmatprep.subr.mxu0 0.0
        %v1538 = vand.u32 %v1019, 4294901760
        %v1539 = vsub.f32 %v1019, %v1538
        %v1540 = vand.u32 %v1539, 4294901760
        %1541 = vmatpush1.msra.mxu0 %v1540
        %1542 = vmatprep.subr.mxu0 0.0
        %1543 = vmatpush1.msra.mxu0 0.0
        %1544 = vmatprep.subr.mxu0 0.0
        %1545 = vmatpush1.msra.mxu0 0.0
        %1546 = vmatprep.subr.mxu0 0.0
        %1547 = vmatpush1.msra.mxu0 0.0
        %1548 = vmatprep.subr.mxu0 0.0
        %1549 = vmatpush1.msra.mxu0 0.0
        %1550 = vmatprep.subr.mxu0 0.0
        %1551 = vmatpush1.msra.mxu0 0.0
        %1552 = vmatprep.subr.mxu0 0.0
        %1553 = vmatpush1.msra.mxu0 0.0
        %1554 = vmatprep.subr.mxu0 0.0
        %1555 = vmatpush1.msra.mxu0 0.0
        %1556 = vmatprep.subr.mxu0 0.0
        %1557 = vmatpush1.msra.mxu0 0.0
        %1558 = vmatprep.subr.mxu0 0.0
        %1559 = vmatpush1.msra.mxu0 0.0
        %1560 = vmatprep.subr.mxu0 0.0
        %1561 = vmatpush1.msra.mxu0 0.0
        %1562 = vmatprep.subr.mxu0 0.0
        %1563 = vmatpush1.msra.mxu0 0.0
        %1564 = vmatprep.subr.mxu0 0.0
        %1565 = vmatpush1.msra.mxu0 0.0
        %1566 = vmatprep.subr.mxu0 0.0
        %1567 = vmatpush1.msra.mxu0 0.0
        %1568 = vmatprep.subr.mxu0 0.0
        %1569 = vmatpush1.msra.mxu0 0.0
        %1570 = vmatprep.subr.mxu0 0.0
        %1571 = vmatpush1.msra.mxu0 0.0
        %1572 = vmatprep.subr.mxu0 0.0
        %1573 = vmatpush1.msra.mxu0 0.0
        %1574 = vmatprep.mubr.f32.mxu0 0.0
        %v1575 = vand.u32 %v1003, 4294901760
        %1576 = vmatmul.mubr.f32.gmra.mrb[0].mxu0 %v1575
        %v1577 = vpop.f32.mrb[0].mxu0
        %v1578 = vadd.f32 %v1459, %v1577
        %v1579 = vpop.f32.mrb[0].mxu0
        %1580 = vdwg.mxu0
        %1581 = vmatprep.subr.mxu0 0.0
        %v1582 = vand.u32 %v1004, 4294901760
        %1583 = vmatpush1.msra.mxu0 %v1582
        %1584 = vmatprep.subr.mxu0 0.0
        %v1585 = vand.u32 %v1005, 4294901760
        %1586 = vmatpush1.msra.mxu0 %v1585
        %1587 = vmatprep.subr.mxu0 0.0
        %v1588 = vand.u32 %v1006, 4294901760
        %1589 = vmatpush1.msra.mxu0 %v1588
        %1590 = vmatprep.subr.mxu0 0.0
        %v1591 = vand.u32 %v1007, 4294901760
        %1592 = vmatpush1.msra.mxu0 %v1591
        %1593 = vmatprep.subr.mxu0 0.0
        %v1594 = vand.u32 %v1008, 4294901760
        %1595 = vmatpush1.msra.mxu0 %v1594
        %1596 = vmatprep.subr.mxu0 0.0
        %v1597 = vand.u32 %v1009, 4294901760
        %1598 = vmatpush1.msra.mxu0 %v1597
        %1599 = vmatprep.subr.mxu0 0.0
        %v1600 = vand.u32 %v1010, 4294901760
        %1601 = vmatpush1.msra.mxu0 %v1600
        %1602 = vmatprep.subr.mxu0 0.0
        %v1603 = vand.u32 %v1011, 4294901760
        %1604 = vmatpush1.msra.mxu0 %v1603
        %1605 = vmatprep.subr.mxu0 0.0
        %v1606 = vand.u32 %v1012, 4294901760
        %1607 = vmatpush1.msra.mxu0 %v1606
        %1608 = vmatprep.subr.mxu0 0.0
        %v1609 = vand.u32 %v1013, 4294901760
        %1610 = vmatpush1.msra.mxu0 %v1609
        %1611 = vmatprep.subr.mxu0 0.0
        %v1612 = vand.u32 %v1014, 4294901760
        %1613 = vmatpush1.msra.mxu0 %v1612
        %1614 = vmatprep.subr.mxu0 0.0
        %v1615 = vand.u32 %v1015, 4294901760
        %1616 = vmatpush1.msra.mxu0 %v1615
        %1617 = vmatprep.subr.mxu0 0.0
        %v1618 = vand.u32 %v1016, 4294901760
        %1619 = vmatpush1.msra.mxu0 %v1618
        %1620 = vmatprep.subr.mxu0 0.0
        %v1621 = vand.u32 %v1017, 4294901760
        %1622 = vmatpush1.msra.mxu0 %v1621
        %1623 = vmatprep.subr.mxu0 0.0
        %v1624 = vand.u32 %v1018, 4294901760
        %1625 = vmatpush1.msra.mxu0 %v1624
        %1626 = vmatprep.subr.mxu0 0.0
        %v1627 = vand.u32 %v1019, 4294901760
        %1628 = vmatpush1.msra.mxu0 %v1627
        %1629 = vmatprep.subr.mxu0 0.0
        %1630 = vmatpush1.msra.mxu0 0.0
        %1631 = vmatprep.subr.mxu0 0.0
        %1632 = vmatpush1.msra.mxu0 0.0
        %1633 = vmatprep.subr.mxu0 0.0
        %1634 = vmatpush1.msra.mxu0 0.0
        %1635 = vmatprep.subr.mxu0 0.0
        %1636 = vmatpush1.msra.mxu0 0.0
        %1637 = vmatprep.subr.mxu0 0.0
        %1638 = vmatpush1.msra.mxu0 0.0
        %1639 = vmatprep.subr.mxu0 0.0
        %1640 = vmatpush1.msra.mxu0 0.0
        %1641 = vmatprep.subr.mxu0 0.0
        %1642 = vmatpush1.msra.mxu0 0.0
        %1643 = vmatprep.subr.mxu0 0.0
        %1644 = vmatpush1.msra.mxu0 0.0
        %1645 = vmatprep.subr.mxu0 0.0
        %1646 = vmatpush1.msra.mxu0 0.0
        %1647 = vmatprep.subr.mxu0 0.0
        %1648 = vmatpush1.msra.mxu0 0.0
        %1649 = vmatprep.subr.mxu0 0.0
        %1650 = vmatpush1.msra.mxu0 0.0
        %1651 = vmatprep.subr.mxu0 0.0
        %1652 = vmatpush1.msra.mxu0 0.0
        %1653 = vmatprep.subr.mxu0 0.0
        %1654 = vmatpush1.msra.mxu0 0.0
        %1655 = vmatprep.subr.mxu0 0.0
        %1656 = vmatpush1.msra.mxu0 0.0
        %1657 = vmatprep.subr.mxu0 0.0
        %1658 = vmatpush1.msra.mxu0 0.0
        %1659 = vmatprep.subr.mxu0 0.0
        %1660 = vmatpush1.msra.mxu0 0.0
        %1661 = vmatprep.mubr.f32.mxu0 0.0
        %v1662 = vand.u32 %v1003, 4294901760
        %1663 = vmatmul.mubr.f32.gmra.mrb[0].mxu0 %v1662
        %v1664 = vpop.f32.mrb[0].mxu0
        %v1665 = vadd.f32 %v1578, %v1664
        %v1666 = vpop.f32.mrb[0].mxu0
        %1667 = vdwg.mxu0
        %v1668 = vmax.f32 %v1665, 0.0
        %v1669 = vld [vmem:[#allocation8] sm:$0xff]
        %v1670 = vld [vmem:[#allocation8 + $0x8] sm:$0xff]
        %v1671 = vld [vmem:[#allocation8 + $0x10] sm:$0xff]
        %v1672 = vld [vmem:[#allocation8 + $0x18] sm:$0xff]
        %v1673 = vld [vmem:[#allocation8 + $0x20] sm:$0xff]
        %v1674 = vld [vmem:[#allocation8 + $0x28] sm:$0xff]
        %v1675 = vld [vmem:[#allocation8 + $0x30] sm:$0xff]
        %v1676 = vld [vmem:[#allocation8 + $0x38] sm:$0xff]
        %v1677 = vld [vmem:[#allocation8 + $0x40] sm:$0xff]
        %v1678 = vld [vmem:[#allocation8 + $0x48] sm:$0xff]
        %v1679 = vld [vmem:[#allocation8 + $0x50] sm:$0xff]
        %v1680 = vld [vmem:[#allocation8 + $0x58] sm:$0xff]
        %v1681 = vld [vmem:[#allocation8 + $0x60] sm:$0xff]
        %v1682 = vld [vmem:[#allocation8 + $0x68] sm:$0xff]
        %v1683 = vld [vmem:[#allocation8 + $0x70] sm:$0xff]
        %v1684 = vld [vmem:[#allocation8 + $0x78] sm:$0xff]
        %v1685 = vld [vmem:[%s6] sm:$0x1]
        %v1687 = vlaneseq
        %v1688 = vshrl.u32 %v1687, 7
        %v1689 = vsub.s32 0, %v1688
        %v1690 = vrot.slane %v1685, %v1689
        %1692 = vmatprep.subr.mxu0 0.0
        %v1693 = vand.u32 %v1669, 4294901760
        %1694 = vmatpush1.msra.mxu0 %v1693
        %1695 = vmatprep.subr.mxu0 0.0
        %v1696 = vand.u32 %v1670, 4294901760
        %1697 = vmatpush1.msra.mxu0 %v1696
        %1698 = vmatprep.subr.mxu0 0.0
        %v1699 = vand.u32 %v1671, 4294901760
        %1700 = vmatpush1.msra.mxu0 %v1699
        %1701 = vmatprep.subr.mxu0 0.0
        %v1702 = vand.u32 %v1672, 4294901760
        %1703 = vmatpush1.msra.mxu0 %v1702
        %1704 = vmatprep.subr.mxu0 0.0
        %v1705 = vand.u32 %v1673, 4294901760
        %1706 = vmatpush1.msra.mxu0 %v1705
        %1707 = vmatprep.subr.mxu0 0.0
        %v1708 = vand.u32 %v1674, 4294901760
        %1709 = vmatpush1.msra.mxu0 %v1708
        %1710 = vmatprep.subr.mxu0 0.0
        %v1711 = vand.u32 %v1675, 4294901760
        %1712 = vmatpush1.msra.mxu0 %v1711
        %1713 = vmatprep.subr.mxu0 0.0
        %v1714 = vand.u32 %v1676, 4294901760
        %1715 = vmatpush1.msra.mxu0 %v1714
        %1716 = vmatprep.subr.mxu0 0.0
        %v1717 = vand.u32 %v1677, 4294901760
        %1718 = vmatpush1.msra.mxu0 %v1717
        %1719 = vmatprep.subr.mxu0 0.0
        %v1720 = vand.u32 %v1678, 4294901760
        %1721 = vmatpush1.msra.mxu0 %v1720
        %1722 = vmatprep.subr.mxu0 0.0
        %v1723 = vand.u32 %v1679, 4294901760
        %1724 = vmatpush1.msra.mxu0 %v1723
        %1725 = vmatprep.subr.mxu0 0.0
        %v1726 = vand.u32 %v1680, 4294901760
        %1727 = vmatpush1.msra.mxu0 %v1726
        %1728 = vmatprep.subr.mxu0 0.0
        %v1729 = vand.u32 %v1681, 4294901760
        %1730 = vmatpush1.msra.mxu0 %v1729
        %1731 = vmatprep.subr.mxu0 0.0
        %v1732 = vand.u32 %v1682, 4294901760
        %1733 = vmatpush1.msra.mxu0 %v1732
        %1734 = vmatprep.subr.mxu0 0.0
        %v1735 = vand.u32 %v1683, 4294901760
        %1736 = vmatpush1.msra.mxu0 %v1735
        %1737 = vmatprep.subr.mxu0 0.0
        %v1738 = vand.u32 %v1684, 4294901760
        %1739 = vmatpush1.msra.mxu0 %v1738
        %1740 = vmatprep.subr.mxu0 0.0
        %1741 = vmatpush1.msra.mxu0 0.0
        %1742 = vmatprep.subr.mxu0 0.0
        %1743 = vmatpush1.msra.mxu0 0.0
        %1744 = vmatprep.subr.mxu0 0.0
        %1745 = vmatpush1.msra.mxu0 0.0
        %1746 = vmatprep.subr.mxu0 0.0
        %1747 = vmatpush1.msra.mxu0 0.0
        %1748 = vmatprep.subr.mxu0 0.0
        %1749 = vmatpush1.msra.mxu0 0.0
        %1750 = vmatprep.subr.mxu0 0.0
        %1751 = vmatpush1.msra.mxu0 0.0
        %1752 = vmatprep.subr.mxu0 0.0
        %1753 = vmatpush1.msra.mxu0 0.0
        %1754 = vmatprep.subr.mxu0 0.0
        %1755 = vmatpush1.msra.mxu0 0.0
        %1756 = vmatprep.subr.mxu0 0.0
        %1757 = vmatpush1.msra.mxu0 0.0
        %1758 = vmatprep.subr.mxu0 0.0
        %1759 = vmatpush1.msra.mxu0 0.0
        %1760 = vmatprep.subr.mxu0 0.0
        %1761 = vmatpush1.msra.mxu0 0.0
        %1762 = vmatprep.subr.mxu0 0.0
        %1763 = vmatpush1.msra.mxu0 0.0
        %1764 = vmatprep.subr.mxu0 0.0
        %1765 = vmatpush1.msra.mxu0 0.0
        %1766 = vmatprep.subr.mxu0 0.0
        %1767 = vmatpush1.msra.mxu0 0.0
        %1768 = vmatprep.subr.mxu0 0.0
        %1769 = vmatpush1.msra.mxu0 0.0
        %1770 = vmatprep.subr.mxu0 0.0
        %1771 = vmatpush1.msra.mxu0 0.0
        %1772 = vmatprep.mubr.f32.mxu0 0.0
        %v1773 = vand.u32 %v1668, 4294901760
        %v1774 = vsub.f32 %v1668, %v1773
        %v1775 = vand.u32 %v1774, 4294901760
        %v1776 = vsub.f32 %v1774, %v1775
        %v1777 = vand.u32 %v1776, 4294901760
        %1778 = vmatmul.mubr.f32.gmra.mrb[0].mxu0 %v1777
        %v1779 = vpop.f32.mrb[0].mxu0
        %v1780 = vadd.f32 %v1690, %v1779
        %v1781 = vpop.f32.mrb[0].mxu0
        %1782 = vdwg.mxu0
        %1783 = vmatprep.subr.mxu0 0.0
        %v1784 = vand.u32 %v1669, 4294901760
        %v1785 = vsub.f32 %v1669, %v1784
        %v1786 = vand.u32 %v1785, 4294901760
        %v1787 = vsub.f32 %v1785, %v1786
        %v1788 = vand.u32 %v1787, 4294901760
        %1789 = vmatpush1.msra.mxu0 %v1788
        %1790 = vmatprep.subr.mxu0 0.0
        %v1791 = vand.u32 %v1670, 4294901760
        %v1792 = vsub.f32 %v1670, %v1791
        %v1793 = vand.u32 %v1792, 4294901760
        %v1794 = vsub.f32 %v1792, %v1793
        %v1795 = vand.u32 %v1794, 4294901760
        %1796 = vmatpush1.msra.mxu0 %v1795
        %1797 = vmatprep.subr.mxu0 0.0
        %v1798 = vand.u32 %v1671, 4294901760
        %v1799 = vsub.f32 %v1671, %v1798
        %v1800 = vand.u32 %v1799, 4294901760
        %v1801 = vsub.f32 %v1799, %v1800
        %v1802 = vand.u32 %v1801, 4294901760
        %1803 = vmatpush1.msra.mxu0 %v1802
        %1804 = vmatprep.subr.mxu0 0.0
        %v1805 = vand.u32 %v1672, 4294901760
        %v1806 = vsub.f32 %v1672, %v1805
        %v1807 = vand.u32 %v1806, 4294901760
        %v1808 = vsub.f32 %v1806, %v1807
        %v1809 = vand.u32 %v1808, 4294901760
        %1810 = vmatpush1.msra.mxu0 %v1809
        %1811 = vmatprep.subr.mxu0 0.0
        %v1812 = vand.u32 %v1673, 4294901760
        %v1813 = vsub.f32 %v1673, %v1812
        %v1814 = vand.u32 %v1813, 4294901760
        %v1815 = vsub.f32 %v1813, %v1814
        %v1816 = vand.u32 %v1815, 4294901760
        %1817 = vmatpush1.msra.mxu0 %v1816
        %1818 = vmatprep.subr.mxu0 0.0
        %v1819 = vand.u32 %v1674, 4294901760
        %v1820 = vsub.f32 %v1674, %v1819
        %v1821 = vand.u32 %v1820, 4294901760
        %v1822 = vsub.f32 %v1820, %v1821
        %v1823 = vand.u32 %v1822, 4294901760
        %1824 = vmatpush1.msra.mxu0 %v1823
        %1825 = vmatprep.subr.mxu0 0.0
        %v1826 = vand.u32 %v1675, 4294901760
        %v1827 = vsub.f32 %v1675, %v1826
        %v1828 = vand.u32 %v1827, 4294901760
        %v1829 = vsub.f32 %v1827, %v1828
        %v1830 = vand.u32 %v1829, 4294901760
        %1831 = vmatpush1.msra.mxu0 %v1830
        %1832 = vmatprep.subr.mxu0 0.0
        %v1833 = vand.u32 %v1676, 4294901760
        %v1834 = vsub.f32 %v1676, %v1833
        %v1835 = vand.u32 %v1834, 4294901760
        %v1836 = vsub.f32 %v1834, %v1835
        %v1837 = vand.u32 %v1836, 4294901760
        %1838 = vmatpush1.msra.mxu0 %v1837
        %1839 = vmatprep.subr.mxu0 0.0
        %v1840 = vand.u32 %v1677, 4294901760
        %v1841 = vsub.f32 %v1677, %v1840
        %v1842 = vand.u32 %v1841, 4294901760
        %v1843 = vsub.f32 %v1841, %v1842
        %v1844 = vand.u32 %v1843, 4294901760
        %1845 = vmatpush1.msra.mxu0 %v1844
        %1846 = vmatprep.subr.mxu0 0.0
        %v1847 = vand.u32 %v1678, 4294901760
        %v1848 = vsub.f32 %v1678, %v1847
        %v1849 = vand.u32 %v1848, 4294901760
        %v1850 = vsub.f32 %v1848, %v1849
        %v1851 = vand.u32 %v1850, 4294901760
        %1852 = vmatpush1.msra.mxu0 %v1851
        %1853 = vmatprep.subr.mxu0 0.0
        %v1854 = vand.u32 %v1679, 4294901760
        %v1855 = vsub.f32 %v1679, %v1854
        %v1856 = vand.u32 %v1855, 4294901760
        %v1857 = vsub.f32 %v1855, %v1856
        %v1858 = vand.u32 %v1857, 4294901760
        %1859 = vmatpush1.msra.mxu0 %v1858
        %1860 = vmatprep.subr.mxu0 0.0
        %v1861 = vand.u32 %v1680, 4294901760
        %v1862 = vsub.f32 %v1680, %v1861
        %v1863 = vand.u32 %v1862, 4294901760
        %v1864 = vsub.f32 %v1862, %v1863
        %v1865 = vand.u32 %v1864, 4294901760
        %1866 = vmatpush1.msra.mxu0 %v1865
        %1867 = vmatprep.subr.mxu0 0.0
        %v1868 = vand.u32 %v1681, 4294901760
        %v1869 = vsub.f32 %v1681, %v1868
        %v1870 = vand.u32 %v1869, 4294901760
        %v1871 = vsub.f32 %v1869, %v1870
        %v1872 = vand.u32 %v1871, 4294901760
        %1873 = vmatpush1.msra.mxu0 %v1872
        %1874 = vmatprep.subr.mxu0 0.0
        %v1875 = vand.u32 %v1682, 4294901760
        %v1876 = vsub.f32 %v1682, %v1875
        %v1877 = vand.u32 %v1876, 4294901760
        %v1878 = vsub.f32 %v1876, %v1877
        %v1879 = vand.u32 %v1878, 4294901760
        %1880 = vmatpush1.msra.mxu0 %v1879
        %1881 = vmatprep.subr.mxu0 0.0
        %v1882 = vand.u32 %v1683, 4294901760
        %v1883 = vsub.f32 %v1683, %v1882
        %v1884 = vand.u32 %v1883, 4294901760
        %v1885 = vsub.f32 %v1883, %v1884
        %v1886 = vand.u32 %v1885, 4294901760
        %1887 = vmatpush1.msra.mxu0 %v1886
        %1888 = vmatprep.subr.mxu0 0.0
        %v1889 = vand.u32 %v1684, 4294901760
        %v1890 = vsub.f32 %v1684, %v1889
        %v1891 = vand.u32 %v1890, 4294901760
        %v1892 = vsub.f32 %v1890, %v1891
        %v1893 = vand.u32 %v1892, 4294901760
        %1894 = vmatpush1.msra.mxu0 %v1893
        %1895 = vmatprep.subr.mxu0 0.0
        %1896 = vmatpush1.msra.mxu0 0.0
        %1897 = vmatprep.subr.mxu0 0.0
        %1898 = vmatpush1.msra.mxu0 0.0
        %1899 = vmatprep.subr.mxu0 0.0
        %1900 = vmatpush1.msra.mxu0 0.0
        %1901 = vmatprep.subr.mxu0 0.0
        %1902 = vmatpush1.msra.mxu0 0.0
        %1903 = vmatprep.subr.mxu0 0.0
        %1904 = vmatpush1.msra.mxu0 0.0
        %1905 = vmatprep.subr.mxu0 0.0
        %1906 = vmatpush1.msra.mxu0 0.0
        %1907 = vmatprep.subr.mxu0 0.0
        %1908 = vmatpush1.msra.mxu0 0.0
        %1909 = vmatprep.subr.mxu0 0.0
        %1910 = vmatpush1.msra.mxu0 0.0
        %1911 = vmatprep.subr.mxu0 0.0
        %1912 = vmatpush1.msra.mxu0 0.0
        %1913 = vmatprep.subr.mxu0 0.0
        %1914 = vmatpush1.msra.mxu0 0.0
        %1915 = vmatprep.subr.mxu0 0.0
        %1916 = vmatpush1.msra.mxu0 0.0
        %1917 = vmatprep.subr.mxu0 0.0
        %1918 = vmatpush1.msra.mxu0 0.0
        %1919 = vmatprep.subr.mxu0 0.0
        %1920 = vmatpush1.msra.mxu0 0.0
        %1921 = vmatprep.subr.mxu0 0.0
        %1922 = vmatpush1.msra.mxu0 0.0
        %1923 = vmatprep.subr.mxu0 0.0
        %1924 = vmatpush1.msra.mxu0 0.0
        %1925 = vmatprep.subr.mxu0 0.0
        %1926 = vmatpush1.msra.mxu0 0.0
        %1927 = vmatprep.mubr.f32.mxu0 0.0
        %v1928 = vand.u32 %v1668, 4294901760
        %1929 = vmatmul.mubr.f32.gmra.mrb[0].mxu0 %v1928
        %v1930 = vpop.f32.mrb[0].mxu0
        %v1931 = vadd.f32 %v1780, %v1930
        %v1932 = vpop.f32.mrb[0].mxu0
        %1933 = vdwg.mxu0
        %1934 = vmatprep.subr.mxu0 0.0
        %v1935 = vand.u32 %v1669, 4294901760
        %v1936 = vsub.f32 %v1669, %v1935
        %1937 = vmatpush1.msra.mxu0 %v1936
        %1938 = vmatprep.subr.mxu0 0.0
        %v1939 = vand.u32 %v1670, 4294901760
        %v1940 = vsub.f32 %v1670, %v1939
        %1941 = vmatpush1.msra.mxu0 %v1940
        %1942 = vmatprep.subr.mxu0 0.0
        %v1943 = vand.u32 %v1671, 4294901760
        %v1944 = vsub.f32 %v1671, %v1943
        %1945 = vmatpush1.msra.mxu0 %v1944
        %1946 = vmatprep.subr.mxu0 0.0
        %v1947 = vand.u32 %v1672, 4294901760
        %v1948 = vsub.f32 %v1672, %v1947
        %1949 = vmatpush1.msra.mxu0 %v1948
        %1950 = vmatprep.subr.mxu0 0.0
        %v1951 = vand.u32 %v1673, 4294901760
        %v1952 = vsub.f32 %v1673, %v1951
        %1953 = vmatpush1.msra.mxu0 %v1952
        %1954 = vmatprep.subr.mxu0 0.0
        %v1955 = vand.u32 %v1674, 4294901760
        %v1956 = vsub.f32 %v1674, %v1955
        %1957 = vmatpush1.msra.mxu0 %v1956
        %1958 = vmatprep.subr.mxu0 0.0
        %v1959 = vand.u32 %v1675, 4294901760
        %v1960 = vsub.f32 %v1675, %v1959
        %1961 = vmatpush1.msra.mxu0 %v1960
        %1962 = vmatprep.subr.mxu0 0.0
        %v1963 = vand.u32 %v1676, 4294901760
        %v1964 = vsub.f32 %v1676, %v1963
        %1965 = vmatpush1.msra.mxu0 %v1964
        %1966 = vmatprep.subr.mxu0 0.0
        %v1967 = vand.u32 %v1677, 4294901760
        %v1968 = vsub.f32 %v1677, %v1967
        %1969 = vmatpush1.msra.mxu0 %v1968
        %1970 = vmatprep.subr.mxu0 0.0
        %v1971 = vand.u32 %v1678, 4294901760
        %v1972 = vsub.f32 %v1678, %v1971
        %1973 = vmatpush1.msra.mxu0 %v1972
        %1974 = vmatprep.subr.mxu0 0.0
        %v1975 = vand.u32 %v1679, 4294901760
        %v1976 = vsub.f32 %v1679, %v1975
        %1977 = vmatpush1.msra.mxu0 %v1976
        %1978 = vmatprep.subr.mxu0 0.0
        %v1979 = vand.u32 %v1680, 4294901760
        %v1980 = vsub.f32 %v1680, %v1979
        %1981 = vmatpush1.msra.mxu0 %v1980
        %1982 = vmatprep.subr.mxu0 0.0
        %v1983 = vand.u32 %v1681, 4294901760
        %v1984 = vsub.f32 %v1681, %v1983
        %1985 = vmatpush1.msra.mxu0 %v1984
        %1986 = vmatprep.subr.mxu0 0.0
        %v1987 = vand.u32 %v1682, 4294901760
        %v1988 = vsub.f32 %v1682, %v1987
        %1989 = vmatpush1.msra.mxu0 %v1988
        %1990 = vmatprep.subr.mxu0 0.0
        %v1991 = vand.u32 %v1683, 4294901760
        %v1992 = vsub.f32 %v1683, %v1991
        %1993 = vmatpush1.msra.mxu0 %v1992
        %1994 = vmatprep.subr.mxu0 0.0
        %v1995 = vand.u32 %v1684, 4294901760
        %v1996 = vsub.f32 %v1684, %v1995
        %1997 = vmatpush1.msra.mxu0 %v1996
        %1998 = vmatprep.subr.mxu0 0.0
        %1999 = vmatpush1.msra.mxu0 0.0
        %2000 = vmatprep.subr.mxu0 0.0
        %2001 = vmatpush1.msra.mxu0 0.0
        %2002 = vmatprep.subr.mxu0 0.0
        %2003 = vmatpush1.msra.mxu0 0.0
        %2004 = vmatprep.subr.mxu0 0.0
        %2005 = vmatpush1.msra.mxu0 0.0
        %2006 = vmatprep.subr.mxu0 0.0
        %2007 = vmatpush1.msra.mxu0 0.0
        %2008 = vmatprep.subr.mxu0 0.0
        %2009 = vmatpush1.msra.mxu0 0.0
        %2010 = vmatprep.subr.mxu0 0.0
        %2011 = vmatpush1.msra.mxu0 0.0
        %2012 = vmatprep.subr.mxu0 0.0
        %2013 = vmatpush1.msra.mxu0 0.0
        %2014 = vmatprep.subr.mxu0 0.0
        %2015 = vmatpush1.msra.mxu0 0.0
        %2016 = vmatprep.subr.mxu0 0.0
        %2017 = vmatpush1.msra.mxu0 0.0
        %2018 = vmatprep.subr.mxu0 0.0
        %2019 = vmatpush1.msra.mxu0 0.0
        %2020 = vmatprep.subr.mxu0 0.0
        %2021 = vmatpush1.msra.mxu0 0.0
        %2022 = vmatprep.subr.mxu0 0.0
        %2023 = vmatpush1.msra.mxu0 0.0
        %2024 = vmatprep.subr.mxu0 0.0
        %2025 = vmatpush1.msra.mxu0 0.0
        %2026 = vmatprep.subr.mxu0 0.0
        %2027 = vmatpush1.msra.mxu0 0.0
        %2028 = vmatprep.subr.mxu0 0.0
        %2029 = vmatpush1.msra.mxu0 0.0
        %2030 = vmatprep.mubr.f32.mxu0 0.0
        %v2031 = vand.u32 %v1668, 4294901760
        %v2032 = vsub.f32 %v1668, %v2031
        %2033 = vmatmul.mubr.f32.gmra.mrb[0].mxu0 %v2032
        %v2034 = vpop.f32.mrb[0].mxu0
        %v2035 = vadd.f32 %v1931, %v2034
        %v2036 = vpop.f32.mrb[0].mxu0
        %2037 = vdwg.mxu0
        %2038 = vmatprep.subr.mxu0 0.0
        %v2039 = vand.u32 %v1669, 4294901760
        %2040 = vmatpush1.msra.mxu0 %v2039
        %2041 = vmatprep.subr.mxu0 0.0
        %v2042 = vand.u32 %v1670, 4294901760
        %2043 = vmatpush1.msra.mxu0 %v2042
        %2044 = vmatprep.subr.mxu0 0.0
        %v2045 = vand.u32 %v1671, 4294901760
        %2046 = vmatpush1.msra.mxu0 %v2045
        %2047 = vmatprep.subr.mxu0 0.0
        %v2048 = vand.u32 %v1672, 4294901760
        %2049 = vmatpush1.msra.mxu0 %v2048
        %2050 = vmatprep.subr.mxu0 0.0
        %v2051 = vand.u32 %v1673, 4294901760
        %2052 = vmatpush1.msra.mxu0 %v2051
        %2053 = vmatprep.subr.mxu0 0.0
        %v2054 = vand.u32 %v1674, 4294901760
        %2055 = vmatpush1.msra.mxu0 %v2054
        %2056 = vmatprep.subr.mxu0 0.0
        %v2057 = vand.u32 %v1675, 4294901760
        %2058 = vmatpush1.msra.mxu0 %v2057
        %2059 = vmatprep.subr.mxu0 0.0
        %v2060 = vand.u32 %v1676, 4294901760
        %2061 = vmatpush1.msra.mxu0 %v2060
        %2062 = vmatprep.subr.mxu0 0.0
        %v2063 = vand.u32 %v1677, 4294901760
        %2064 = vmatpush1.msra.mxu0 %v2063
        %2065 = vmatprep.subr.mxu0 0.0
        %v2066 = vand.u32 %v1678, 4294901760
        %2067 = vmatpush1.msra.mxu0 %v2066
        %2068 = vmatprep.subr.mxu0 0.0
        %v2069 = vand.u32 %v1679, 4294901760
        %2070 = vmatpush1.msra.mxu0 %v2069
        %2071 = vmatprep.subr.mxu0 0.0
        %v2072 = vand.u32 %v1680, 4294901760
        %2073 = vmatpush1.msra.mxu0 %v2072
        %2074 = vmatprep.subr.mxu0 0.0
        %v2075 = vand.u32 %v1681, 4294901760
        %2076 = vmatpush1.msra.mxu0 %v2075
        %2077 = vmatprep.subr.mxu0 0.0
        %v2078 = vand.u32 %v1682, 4294901760
        %2079 = vmatpush1.msra.mxu0 %v2078
        %2080 = vmatprep.subr.mxu0 0.0
        %v2081 = vand.u32 %v1683, 4294901760
        %2082 = vmatpush1.msra.mxu0 %v2081
        %2083 = vmatprep.subr.mxu0 0.0
        %v2084 = vand.u32 %v1684, 4294901760
        %2085 = vmatpush1.msra.mxu0 %v2084
        %2086 = vmatprep.subr.mxu0 0.0
        %2087 = vmatpush1.msra.mxu0 0.0
        %2088 = vmatprep.subr.mxu0 0.0
        %2089 = vmatpush1.msra.mxu0 0.0
        %2090 = vmatprep.subr.mxu0 0.0
        %2091 = vmatpush1.msra.mxu0 0.0
        %2092 = vmatprep.subr.mxu0 0.0
        %2093 = vmatpush1.msra.mxu0 0.0
        %2094 = vmatprep.subr.mxu0 0.0
        %2095 = vmatpush1.msra.mxu0 0.0
        %2096 = vmatprep.subr.mxu0 0.0
        %2097 = vmatpush1.msra.mxu0 0.0
        %2098 = vmatprep.subr.mxu0 0.0
        %2099 = vmatpush1.msra.mxu0 0.0
        %2100 = vmatprep.subr.mxu0 0.0
        %2101 = vmatpush1.msra.mxu0 0.0
        %2102 = vmatprep.subr.mxu0 0.0
        %2103 = vmatpush1.msra.mxu0 0.0
        %2104 = vmatprep.subr.mxu0 0.0
        %2105 = vmatpush1.msra.mxu0 0.0
        %2106 = vmatprep.subr.mxu0 0.0
        %2107 = vmatpush1.msra.mxu0 0.0
        %2108 = vmatprep.subr.mxu0 0.0
        %2109 = vmatpush1.msra.mxu0 0.0
        %2110 = vmatprep.subr.mxu0 0.0
        %2111 = vmatpush1.msra.mxu0 0.0
        %2112 = vmatprep.subr.mxu0 0.0
        %2113 = vmatpush1.msra.mxu0 0.0
        %2114 = vmatprep.subr.mxu0 0.0
        %2115 = vmatpush1.msra.mxu0 0.0
        %2116 = vmatprep.subr.mxu0 0.0
        %2117 = vmatpush1.msra.mxu0 0.0
        %2118 = vmatprep.mubr.f32.mxu0 0.0
        %v2119 = vand.u32 %v1668, 4294901760
        %v2120 = vsub.f32 %v1668, %v2119
        %v2121 = vand.u32 %v2120, 4294901760
        %2122 = vmatmul.mubr.f32.gmra.mrb[0].mxu0 %v2121
        %v2123 = vpop.f32.mrb[0].mxu0
        %v2124 = vadd.f32 %v2035, %v2123
        %v2125 = vpop.f32.mrb[0].mxu0
        %2126 = vdwg.mxu0
        %2127 = vmatprep.subr.mxu0 0.0
        %v2128 = vand.u32 %v1669, 4294901760
        %v2129 = vsub.f32 %v1669, %v2128
        %v2130 = vand.u32 %v2129, 4294901760
        %2131 = vmatpush1.msra.mxu0 %v2130
        %2132 = vmatprep.subr.mxu0 0.0
        %v2133 = vand.u32 %v1670, 4294901760
        %v2134 = vsub.f32 %v1670, %v2133
        %v2135 = vand.u32 %v2134, 4294901760
        %2136 = vmatpush1.msra.mxu0 %v2135
        %2137 = vmatprep.subr.mxu0 0.0
        %v2138 = vand.u32 %v1671, 4294901760
        %v2139 = vsub.f32 %v1671, %v2138
        %v2140 = vand.u32 %v2139, 4294901760
        %2141 = vmatpush1.msra.mxu0 %v2140
        %2142 = vmatprep.subr.mxu0 0.0
        %v2143 = vand.u32 %v1672, 4294901760
        %v2144 = vsub.f32 %v1672, %v2143
        %v2145 = vand.u32 %v2144, 4294901760
        %2146 = vmatpush1.msra.mxu0 %v2145
        %2147 = vmatprep.subr.mxu0 0.0
        %v2148 = vand.u32 %v1673, 4294901760
        %v2149 = vsub.f32 %v1673, %v2148
        %v2150 = vand.u32 %v2149, 4294901760
        %2151 = vmatpush1.msra.mxu0 %v2150
        %2152 = vmatprep.subr.mxu0 0.0
        %v2153 = vand.u32 %v1674, 4294901760
        %v2154 = vsub.f32 %v1674, %v2153
        %v2155 = vand.u32 %v2154, 4294901760
        %2156 = vmatpush1.msra.mxu0 %v2155
        %2157 = vmatprep.subr.mxu0 0.0
        %v2158 = vand.u32 %v1675, 4294901760
        %v2159 = vsub.f32 %v1675, %v2158
        %v2160 = vand.u32 %v2159, 4294901760
        %2161 = vmatpush1.msra.mxu0 %v2160
        %2162 = vmatprep.subr.mxu0 0.0
        %v2163 = vand.u32 %v1676, 4294901760
        %v2164 = vsub.f32 %v1676, %v2163
        %v2165 = vand.u32 %v2164, 4294901760
        %2166 = vmatpush1.msra.mxu0 %v2165
        %2167 = vmatprep.subr.mxu0 0.0
        %v2168 = vand.u32 %v1677, 4294901760
        %v2169 = vsub.f32 %v1677, %v2168
        %v2170 = vand.u32 %v2169, 4294901760
        %2171 = vmatpush1.msra.mxu0 %v2170
        %2172 = vmatprep.subr.mxu0 0.0
        %v2173 = vand.u32 %v1678, 4294901760
        %v2174 = vsub.f32 %v1678, %v2173
        %v2175 = vand.u32 %v2174, 4294901760
        %2176 = vmatpush1.msra.mxu0 %v2175
        %2177 = vmatprep.subr.mxu0 0.0
        %v2178 = vand.u32 %v1679, 4294901760
        %v2179 = vsub.f32 %v1679, %v2178
        %v2180 = vand.u32 %v2179, 4294901760
        %2181 = vmatpush1.msra.mxu0 %v2180
        %2182 = vmatprep.subr.mxu0 0.0
        %v2183 = vand.u32 %v1680, 4294901760
        %v2184 = vsub.f32 %v1680, %v2183
        %v2185 = vand.u32 %v2184, 4294901760
        %2186 = vmatpush1.msra.mxu0 %v2185
        %2187 = vmatprep.subr.mxu0 0.0
        %v2188 = vand.u32 %v1681, 4294901760
        %v2189 = vsub.f32 %v1681, %v2188
        %v2190 = vand.u32 %v2189, 4294901760
        %2191 = vmatpush1.msra.mxu0 %v2190
        %2192 = vmatprep.subr.mxu0 0.0
        %v2193 = vand.u32 %v1682, 4294901760
        %v2194 = vsub.f32 %v1682, %v2193
        %v2195 = vand.u32 %v2194, 4294901760
        %2196 = vmatpush1.msra.mxu0 %v2195
        %2197 = vmatprep.subr.mxu0 0.0
        %v2198 = vand.u32 %v1683, 4294901760
        %v2199 = vsub.f32 %v1683, %v2198
        %v2200 = vand.u32 %v2199, 4294901760
        %2201 = vmatpush1.msra.mxu0 %v2200
        %2202 = vmatprep.subr.mxu0 0.0
        %v2203 = vand.u32 %v1684, 4294901760
        %v2204 = vsub.f32 %v1684, %v2203
        %v2205 = vand.u32 %v2204, 4294901760
        %2206 = vmatpush1.msra.mxu0 %v2205
        %2207 = vmatprep.subr.mxu0 0.0
        %2208 = vmatpush1.msra.mxu0 0.0
        %2209 = vmatprep.subr.mxu0 0.0
        %2210 = vmatpush1.msra.mxu0 0.0
        %2211 = vmatprep.subr.mxu0 0.0
        %2212 = vmatpush1.msra.mxu0 0.0
        %2213 = vmatprep.subr.mxu0 0.0
        %2214 = vmatpush1.msra.mxu0 0.0
        %2215 = vmatprep.subr.mxu0 0.0
        %2216 = vmatpush1.msra.mxu0 0.0
        %2217 = vmatprep.subr.mxu0 0.0
        %2218 = vmatpush1.msra.mxu0 0.0
        %2219 = vmatprep.subr.mxu0 0.0
        %2220 = vmatpush1.msra.mxu0 0.0
        %2221 = vmatprep.subr.mxu0 0.0
        %2222 = vmatpush1.msra.mxu0 0.0
        %2223 = vmatprep.subr.mxu0 0.0
        %2224 = vmatpush1.msra.mxu0 0.0
        %2225 = vmatprep.subr.mxu0 0.0
        %2226 = vmatpush1.msra.mxu0 0.0
        %2227 = vmatprep.subr.mxu0 0.0
        %2228 = vmatpush1.msra.mxu0 0.0
        %2229 = vmatprep.subr.mxu0 0.0
        %2230 = vmatpush1.msra.mxu0 0.0
        %2231 = vmatprep.subr.mxu0 0.0
        %2232 = vmatpush1.msra.mxu0 0.0
        %2233 = vmatprep.subr.mxu0 0.0
        %2234 = vmatpush1.msra.mxu0 0.0
        %2235 = vmatprep.subr.mxu0 0.0
        %2236 = vmatpush1.msra.mxu0 0.0
        %2237 = vmatprep.subr.mxu0 0.0
        %2238 = vmatpush1.msra.mxu0 0.0
        %2239 = vmatprep.mubr.f32.mxu0 0.0
        %v2240 = vand.u32 %v1668, 4294901760
        %2241 = vmatmul.mubr.f32.gmra.mrb[0].mxu0 %v2240
        %v2242 = vpop.f32.mrb[0].mxu0
        %v2243 = vadd.f32 %v2124, %v2242
        %v2244 = vpop.f32.mrb[0].mxu0
        %2245 = vdwg.mxu0
        %2246 = vmatprep.subr.mxu0 0.0
        %v2247 = vand.u32 %v1669, 4294901760
        %2248 = vmatpush1.msra.mxu0 %v2247
        %2249 = vmatprep.subr.mxu0 0.0
        %v2250 = vand.u32 %v1670, 4294901760
        %2251 = vmatpush1.msra.mxu0 %v2250
        %2252 = vmatprep.subr.mxu0 0.0
        %v2253 = vand.u32 %v1671, 4294901760
        %2254 = vmatpush1.msra.mxu0 %v2253
        %2255 = vmatprep.subr.mxu0 0.0
        %v2256 = vand.u32 %v1672, 4294901760
        %2257 = vmatpush1.msra.mxu0 %v2256
        %2258 = vmatprep.subr.mxu0 0.0
        %v2259 = vand.u32 %v1673, 4294901760
        %2260 = vmatpush1.msra.mxu0 %v2259
        %2261 = vmatprep.subr.mxu0 0.0
        %v2262 = vand.u32 %v1674, 4294901760
        %2263 = vmatpush1.msra.mxu0 %v2262
        %2264 = vmatprep.subr.mxu0 0.0
        %v2265 = vand.u32 %v1675, 4294901760
        %2266 = vmatpush1.msra.mxu0 %v2265
        %2267 = vmatprep.subr.mxu0 0.0
        %v2268 = vand.u32 %v1676, 4294901760
        %2269 = vmatpush1.msra.mxu0 %v2268
        %2270 = vmatprep.subr.mxu0 0.0
        %v2271 = vand.u32 %v1677, 4294901760
        %2272 = vmatpush1.msra.mxu0 %v2271
        %2273 = vmatprep.subr.mxu0 0.0
        %v2274 = vand.u32 %v1678, 4294901760
        %2275 = vmatpush1.msra.mxu0 %v2274
        %2276 = vmatprep.subr.mxu0 0.0
        %v2277 = vand.u32 %v1679, 4294901760
        %2278 = vmatpush1.msra.mxu0 %v2277
        %2279 = vmatprep.subr.mxu0 0.0
        %v2280 = vand.u32 %v1680, 4294901760
        %2281 = vmatpush1.msra.mxu0 %v2280
        %2282 = vmatprep.subr.mxu0 0.0
        %v2283 = vand.u32 %v1681, 4294901760
        %2284 = vmatpush1.msra.mxu0 %v2283
        %2285 = vmatprep.subr.mxu0 0.0
        %v2286 = vand.u32 %v1682, 4294901760
        %2287 = vmatpush1.msra.mxu0 %v2286
        %2288 = vmatprep.subr.mxu0 0.0
        %v2289 = vand.u32 %v1683, 4294901760
        %2290 = vmatpush1.msra.mxu0 %v2289
        %2291 = vmatprep.subr.mxu0 0.0
        %v2292 = vand.u32 %v1684, 4294901760
        %2293 = vmatpush1.msra.mxu0 %v2292
        %2294 = vmatprep.subr.mxu0 0.0
        %2295 = vmatpush1.msra.mxu0 0.0
        %2296 = vmatprep.subr.mxu0 0.0
        %2297 = vmatpush1.msra.mxu0 0.0
        %2298 = vmatprep.subr.mxu0 0.0
        %2299 = vmatpush1.msra.mxu0 0.0
        %2300 = vmatprep.subr.mxu0 0.0
        %2301 = vmatpush1.msra.mxu0 0.0
        %2302 = vmatprep.subr.mxu0 0.0
        %2303 = vmatpush1.msra.mxu0 0.0
        %2304 = vmatprep.subr.mxu0 0.0
        %2305 = vmatpush1.msra.mxu0 0.0
        %2306 = vmatprep.subr.mxu0 0.0
        %2307 = vmatpush1.msra.mxu0 0.0
        %2308 = vmatprep.subr.mxu0 0.0
        %2309 = vmatpush1.msra.mxu0 0.0
        %2310 = vmatprep.subr.mxu0 0.0
        %2311 = vmatpush1.msra.mxu0 0.0
        %2312 = vmatprep.subr.mxu0 0.0
        %2313 = vmatpush1.msra.mxu0 0.0
        %2314 = vmatprep.subr.mxu0 0.0
        %2315 = vmatpush1.msra.mxu0 0.0
        %2316 = vmatprep.subr.mxu0 0.0
        %2317 = vmatpush1.msra.mxu0 0.0
        %2318 = vmatprep.subr.mxu0 0.0
        %2319 = vmatpush1.msra.mxu0 0.0
        %2320 = vmatprep.subr.mxu0 0.0
        %2321 = vmatpush1.msra.mxu0 0.0
        %2322 = vmatprep.subr.mxu0 0.0
        %2323 = vmatpush1.msra.mxu0 0.0
        %2324 = vmatprep.subr.mxu0 0.0
        %2325 = vmatpush1.msra.mxu0 0.0
        %2326 = vmatprep.mubr.f32.mxu0 0.0
        %v2327 = vand.u32 %v1668, 4294901760
        %2328 = vmatmul.mubr.f32.gmra.mrb[0].mxu0 %v2327
        %v2329 = vpop.f32.mrb[0].mxu0
        %v2330 = vadd.f32 %v2243, %v2329
        %v2331 = vpop.f32.mrb[0].mxu0
        %2332 = vdwg.mxu0
        %2333 = vst [vmem:[%s337] sm:$0xff] %v2330
        %s2334 = sand.u32 %s186, 1
        %s2335 = scalar_lea.sflag [#allocation4], %s2334
        %s2336 = sand.u32 %s186, 1
        %s2337 = smul.addr %s2336, 8
        %s2338 = scalar_lea.vmem [#allocation10], %s2337
        // Predicated region
        $region65: #{tpu_custom_call.1} parent=47 // pred_check
          %p2339 = pneg %p196
        $region66: #{tpu_custom_call.1} parent=47 // pred_check_branch
          %2341 = sbr.rel (%p2339) target = $region68
        $region67: #{tpu_custom_call.1} parent=47 // pred_region
          %s2343 = ssub.s32 128, 128
          %2344 = vsyncadd %s2335, %s2343
          %s2345 = smul.addr %s26, 128
          %s2346 = scalar_lea.hbm %s7, %s2345
          %s2348 = sshll.u32 %s2338, 4
          %s2349 = int_to_ptr.vmem [resolvable:$true] %s2348
          %2351 = dma.vmem_to_hbm [thread:$0]  %s2349, 128, %s2346, %s2335
        $region68: #{tpu_custom_call.1} parent=47 // pred_fallthru
          _
      $region48: #{tpu_custom_call.1} parent=5 // pred_fallthru
        _
      %p2352 = scmp.le.s32.totalorder 2, %s21
      // Predicated region
      $region69: #{tpu_custom_call.1} parent=5 // pred_check
        %p2353 = pneg %p2352
      $region70: #{tpu_custom_call.1} parent=5 // pred_check_branch
        %2355 = sbr.rel (%p2353) target = $region72
      $region71: #{tpu_custom_call.1} parent=5 // pred_region
        %s2356 = ssub.s32 %s21, 2
        // Predicated region
        $region73: #{tpu_custom_call.1} parent=71 // pred_check
          %p2357 = pneg %p202
        $region74: #{tpu_custom_call.1} parent=71 // pred_check_branch
          %2359 = sbr.rel (%p2357) target = $region76
        $region75: #{tpu_custom_call.1} parent=71 // pred_region
          %s2360 = sand.u32 %s187, 1
          %s2361 = scalar_lea.sflag [#allocation4], %s2360
          %s2362 = sand.u32 %s187, 1
          %s2363 = smul.addr %s2362, 8
          %s2364 = scalar_lea.vmem [#allocation10], %s2363
          %2365 = dma.done %s2361, 128
        $region76: #{tpu_custom_call.1} parent=71 // pred_fallthru
          _
      $region72: #{tpu_custom_call.1} parent=5 // pred_fallthru
        _
    $region6: #{tpu_custom_call.1} parent=1 // loop_footer
      %s25 = sadd.s32 1, %s21
    $region7: #{tpu_custom_call.1} parent=1 // loop_footer_branch
      %20 = sbr.rel target = $region3
    $region8: #{tpu_custom_call.1} parent=1 // loop_exit
      _
    %2366 = vsyncpa [#allocation3], 1
    %s2367 = scalar_lea.sflag [#allocation3], 1
    %2368 = vsyncpa %s2367, 1
    %2369 = vsyncpa [#allocation6], 1
    %2370 = vsyncpa [#allocation9], 1
    %2371 = vsyncpa [#allocation4], 1
    %s2372 = scalar_lea.sflag [#allocation4], 1
    %2373 = vsyncpa %s2372, 1

</llo_original>
